<compile_context>
chip_gen: v7x
topology: tpu7x:2x2x1
jax: 0.10.0
libtpu: 0.0.40
codegen_flags: <defaults>
</compile_context>

<pallas_src>
import functools
import math

import jax
import jax.numpy as jnp
from jax.experimental import pallas as pl
from jax.experimental.pallas import tpu as pltpu

# ---------------- config ----------------
B, SEQ_LEN, ENC_IN, N_MARK = 2, 16, 4, 4
D_MODEL, N_HEADS, D_FF, E_LAYERS, PRED_LEN = 32, 4, 64, 2, 8
HEAD_DIM = D_MODEL // N_HEADS
N_TOKENS = ENC_IN + N_MARK            # variate tokens + time-mark tokens per batch element
BT = B * N_TOKENS
LN_EPS = 1e-5
ATTN_SCALE = 1.0 / math.sqrt(HEAD_DIM)

# ---- packed layout of all small (bias / LayerNorm) vectors: one (N_VEC_ROWS, 96) array ----
VEC_W = 3 * D_MODEL                    # 96: widest vector (fused qkv bias)
ROW_EMB_B, ROW_NORM_G, ROW_NORM_B, ROW_PROJ_B = 0, 1, 2, 3
ROWS_GLOBAL = 4
R_BQKV, R_BO, R_B1, R_B2, R_LN1G, R_LN1B, R_LN2G, R_LN2B = range(8)
ROWS_PER_LAYER = 8
N_VEC_ROWS = ROWS_GLOBAL + E_LAYERS * ROWS_PER_LAYER   # 20


# ---------------- fused Pallas kernel ----------------
def _layer_norm(y, g, b):
    m = jnp.mean(y, axis=-1, keepdims=True)
    v = jnp.mean((y - m) ** 2, axis=-1, keepdims=True)
    return (y - m) * jax.lax.rsqrt(v + LN_EPS) * g + b


def _fused_kernel(tok_ref, vec_ref, emb_w_ref, wqkv_ref, wo_ref, w1_ref, w2_ref,
                  proj_w_ref, out_ref):
    tok = tok_ref[...]                                   # [BT, L], time on the lane axis

    def vrow(r, w):                                      # packed small-vector read -> (1, w)
        return vec_ref[r:r + 1, 0:w]

    # ---- non-stationary normalization (lane reduction over time) ----
    # Mask is applied only to the narrow [BT,1] statistics columns (no full-slab select).
    mean_all = jnp.mean(tok, axis=-1, keepdims=True)     # [BT, 1]
    cen = tok - mean_all
    var_all = jnp.mean(cen * cen, axis=-1, keepdims=True)  # biased var (torch unbiased=False)
    row = jax.lax.broadcasted_iota(jnp.int32, (BT, 1), 0)
    is_var = (row % N_TOKENS) < ENC_IN                   # time-mark rows are NOT normalized
    mean = jnp.where(is_var, mean_all, 0.0)
    inv_std = jnp.where(is_var, jax.lax.rsqrt(var_all + 1e-5), 1.0)
    std = jnp.where(is_var, jnp.sqrt(var_all + 1e-5), 1.0)
    tok_n = (tok - mean) * inv_std                       # mark rows pass through unchanged

    # ---- DataEmbedding_inverted: Linear(seq_len -> d_model) over the time axis ----
    x = jnp.dot(tok_n, emb_w_ref[...],
                preferred_element_type=jnp.float32) + vrow(ROW_EMB_B, D_MODEL)   # [BT, D]

    # ---- encoder layers (statically unrolled, E_LAYERS=2) ----
    for l in range(E_LAYERS):
        base = ROWS_GLOBAL + l * ROWS_PER_LAYER

        # fused QKV projection: one [BT,D] x [D,3D] matmul
        qkv = jnp.dot(x, wqkv_ref[l],
                      preferred_element_type=jnp.float32) + vrow(base + R_BQKV, 3 * D_MODEL)
        qkv3 = qkv.reshape(B, N_TOKENS, 3 * D_MODEL)     # free sublane split

        def heads(off):
            # All heads of one tensor stacked on a leading group axis g = h*B + b.
            return jnp.concatenate(
                [qkv3[:, :, off + h * HEAD_DIM: off + (h + 1) * HEAD_DIM]
                 for h in range(N_HEADS)], axis=0)       # [H*B, T, E]

        qh = heads(0)
        kh = heads(D_MODEL)
        vh = heads(2 * D_MODEL)

        # batched MHA: ONE score einsum, ONE softmax, ONE value einsum for all heads/batches
        s = jnp.einsum("gte,gse->gts", qh, kh,
                       preferred_element_type=jnp.float32) * ATTN_SCALE
        s = s - jnp.max(s, axis=-1, keepdims=True)
        p = jnp.exp(s)
        p = p * pl.reciprocal(jnp.sum(p, axis=-1, keepdims=True), approx=True)
        o = jnp.einsum("gts,gse->gte", p, vh,
                       preferred_element_type=jnp.float32)               # [H*B, T, E]

        # regroup heads back onto the lane axis: attn[b,t,h*E+e] = o[h*B+b,t,e]
        attn = jnp.concatenate([o[h * B:(h + 1) * B] for h in range(N_HEADS)],
                               axis=-1).reshape(BT, D_MODEL)
        attn = jnp.dot(attn, wo_ref[l],
                       preferred_element_type=jnp.float32) + vrow(base + R_BO, D_MODEL)

        x = _layer_norm(x + attn, vrow(base + R_LN1G, D_MODEL), vrow(base + R_LN1B, D_MODEL))
        hid = jnp.dot(x, w1_ref[l], preferred_element_type=jnp.float32) + vrow(base + R_B1, D_FF)
        hid = jnp.maximum(hid, 0.0)                                      # activation='relu'
        y = jnp.dot(hid, w2_ref[l], preferred_element_type=jnp.float32) + vrow(base + R_B2, D_MODEL)
        x = _layer_norm(x + y, vrow(base + R_LN2G, D_MODEL), vrow(base + R_LN2B, D_MODEL))

    # ---- final encoder LayerNorm + projection d_model -> pred_len + de-norm ----
    x = _layer_norm(x, vrow(ROW_NORM_G, D_MODEL), vrow(ROW_NORM_B, D_MODEL))
    dec = jnp.dot(x, proj_w_ref[...],
                  preferred_element_type=jnp.float32) + vrow(ROW_PROJ_B, PRED_LEN)   # [BT, P]
    # Contiguous flat store; variate-row selection / transpose happen in the wrapper.
    out_ref[...] = dec * std + mean


# ---------------- wrapper ----------------
def itransformer_forward(kparams, x_enc, x_mark_enc, x_dec=None, x_mark_dec=None):
    """Equivalent of Model.forward for task_name='long_term_forecast'.
    x_dec / x_mark_dec are unused by the forecast branch."""
    Bt, L, N = x_enc.shape
    T = N + x_mark_enc.shape[2]

    # tokens-as-rows layout [B*T, L]: batch-major rows (variates then marks inside each
    # batch) so the per-batch attention reshape inside the kernel is a free sublane split.
    tok = jnp.transpose(jnp.concatenate([x_enc, x_mark_enc], axis=2), (0, 2, 1))
    tok = tok.reshape(Bt * T, L)

    # TODO(synk): for large-batch / repeated invocation, add a leading grid over batch
    # chunks with dimension_semantics=('parallel',) to shard across v7x's two TensorCores
    # and amortize launch overhead; at B=2 a grid would only add per-step overhead.
    out_flat = pl.pallas_call(
        _fused_kernel,
        out_shape=jax.ShapeDtypeStruct((Bt * T, PRED_LEN), jnp.float32),
        in_specs=[pl.BlockSpec(memory_space=pltpu.MemorySpace.VMEM)] * 8,
        out_specs=pl.BlockSpec(memory_space=pltpu.MemorySpace.VMEM),
    )(tok, kparams["vec"], kparams["emb_w"], kparams["wqkv"], kparams["wo"],
      kparams["w1"], kparams["w2"], kparams["proj_w"])

    # variate-row selection + layout plumbing stay in XLA (fuses with the final transpose).
    dec = jnp.transpose(out_flat.reshape(Bt, T, PRED_LEN)[:, :N, :], (0, 2, 1))  # [B, P, N]
    return dec, 0


# ---------------- parameters ----------------
def init_params(key):
    keys = iter(jax.random.split(key, 8 + 16 * E_LAYERS))
    nrm = lambda shape: jax.random.normal(next(keys), shape, jnp.float32) * 0.1
    p = {
        "emb_w": nrm((SEQ_LEN, D_MODEL)), "emb_b": nrm((1, D_MODEL)),
        "proj_w": nrm((D_MODEL, PRED_LEN)), "proj_b": nrm((1, PRED_LEN)),
        "norm_g": jnp.ones((1, D_MODEL), jnp.float32),
        "norm_b": jnp.zeros((1, D_MODEL), jnp.float32),
    }
    stacks = {k: [] for k in ("wqkv", "bqkv", "wo", "bo", "w1", "b1", "w2", "b2",
                              "ln1_g", "ln1_b", "ln2_g", "ln2_b")}
    for _ in range(E_LAYERS):
        stacks["wqkv"].append(nrm((D_MODEL, 3 * D_MODEL)))   # columns: [Wq | Wk | Wv], head-major
        stacks["bqkv"].append(nrm((1, 3 * D_MODEL)))
        stacks["wo"].append(nrm((D_MODEL, D_MODEL)))
        stacks["bo"].append(nrm((1, D_MODEL)))
        stacks["w1"].append(nrm((D_MODEL, D_FF)))
        stacks["b1"].append(nrm((1, D_FF)))
        stacks["w2"].append(nrm((D_FF, D_MODEL)))
        stacks["b2"].append(nrm((1, D_MODEL)))
        stacks["ln1_g"].append(jnp.ones((1, D_MODEL), jnp.float32))
        stacks["ln1_b"].append(jnp.zeros((1, D_MODEL), jnp.float32))
        stacks["ln2_g"].append(jnp.ones((1, D_MODEL), jnp.float32))
        stacks["ln2_b"].append(jnp.zeros((1, D_MODEL), jnp.float32))
    p.update({k: jnp.stack(v) for k, v in stacks.items()})
    return p


def pack_params(p):
    """Pack all tiny bias / LayerNorm vectors into one (N_VEC_ROWS, VEC_W) operand."""
    def pad(v):
        v = jnp.asarray(v, jnp.float32).reshape(-1)
        return jnp.pad(v, (0, VEC_W - v.shape[0]))
    rows = [pad(p["emb_b"]), pad(p["norm_g"]), pad(p["norm_b"]), pad(p["proj_b"])]
    for l in range(E_LAYERS):
        rows += [pad(p["bqkv"][l]), pad(p["bo"][l]), pad(p["b1"][l]), pad(p["b2"][l]),
                 pad(p["ln1_g"][l]), pad(p["ln1_b"][l]),
                 pad(p["ln2_g"][l]), pad(p["ln2_b"][l])]
    vec = jnp.stack(rows, axis=0)                      # (20, 96)
    assert vec.shape == (N_VEC_ROWS, VEC_W)
    return {"vec": vec, "emb_w": p["emb_w"], "wqkv": p["wqkv"], "wo": p["wo"],
            "w1": p["w1"], "w2": p["w2"], "proj_w": p["proj_w"]}


# ---------------- pure-JAX reference (for correctness check) ----------------
def reference_forward(params, x_enc, x_mark_enc):
    ein = functools.partial(jnp.einsum, precision=jax.lax.Precision.HIGHEST)
    means = jnp.mean(x_enc, axis=1, keepdims=True)
    xc = x_enc - means
    stdev = jnp.sqrt(jnp.mean(xc * xc, axis=1, keepdims=True) + 1e-5)
    xn = xc / stdev
    tok = jnp.concatenate(
        [jnp.transpose(xn, (0, 2, 1)), jnp.transpose(x_mark_enc, (0, 2, 1))], axis=1)
    enc = ein("btl,ld->btd", tok, params["emb_w"]) + params["emb_b"]

    def ln(x, g, b):
        m = jnp.mean(x, axis=-1, keepdims=True)
        v = jnp.mean((x - m) ** 2, axis=-1, keepdims=True)
        return (x - m) / jnp.sqrt(v + LN_EPS) * g + b

    def split_heads(z):  # [B,T,D] -> [B,H,T,E]
        Bq, Tq, _ = z.shape
        return jnp.transpose(z.reshape(Bq, Tq, N_HEADS, HEAD_DIM), (0, 2, 1, 3))

    for l in range(E_LAYERS):
        qkv = ein("btd,dk->btk", enc, params["wqkv"][l]) + params["bqkv"][l]
        q, k, v = (qkv[..., :D_MODEL], qkv[..., D_MODEL:2 * D_MODEL], qkv[..., 2 * D_MODEL:])
        qh, kh, vh = split_heads(q), split_heads(k), split_heads(v)
        s = ein("bhte,bhse->bhts", qh, kh) * ATTN_SCALE
        p = jax.nn.softmax(s, axis=-1)
        o = ein("bhts,bhse->bhte", p, vh)
        o = jnp.transpose(o, (0, 2, 1, 3)).reshape(enc.shape)
        attn = ein("btd,de->bte", o, params["wo"][l]) + params["bo"][l]
        x1 = ln(enc + attn, params["ln1_g"][l], params["ln1_b"][l])
        y = jnp.maximum(ein("btd,df->btf", x1, params["w1"][l]) + params["b1"][l], 0.0)
        y = ein("btf,fd->btd", y, params["w2"][l]) + params["b2"][l]
        enc = ln(x1 + y, params["ln2_g"][l], params["ln2_b"][l])
    enc = ln(enc, params["norm_g"], params["norm_b"])
    dec = ein("btd,dp->btp", enc, params["proj_w"]) + params["proj_b"]
    N = x_enc.shape[2]
    dec = jnp.transpose(dec, (0, 2, 1))[:, :, :N]
    dec = dec * stdev[:, 0, :][:, None, :] + means[:, 0, :][:, None, :]
    return dec


# TODO(synk): dropout layers are identity in eval mode and are intentionally omitted.

if __name__ == "__main__":
    key = jax.random.PRNGKey(0)
    kp, kx, km = jax.random.split(key, 3)
    params = init_params(kp)
    kparams = pack_params(params)
    x_enc = jax.random.normal(kx, (B, SEQ_LEN, ENC_IN), jnp.float32)
    x_mark_enc = jax.random.normal(km, (B, SEQ_LEN, N_MARK), jnp.float32)

    fwd = jax.jit(itransformer_forward)
    out, _ = fwd(kparams, x_enc, x_mark_enc)
    out = jax.block_until_ready(out)
    assert out.shape == (B, PRED_LEN, ENC_IN), out.shape

    ref = reference_forward(params, x_enc, x_mark_enc)
    err = float(jnp.max(jnp.abs(out - ref)))
    assert err < 1e-2, f"mismatch vs reference: {err}"
    print("KERNEL_OK")
</pallas_src>

<mosaic_0001>
module attributes {stable_mosaic.version = 11 : i64} {
  func.func @_fused_kernel(%arg0: memref<16x16xf32, #tpu.memory_space<vmem>>, %arg1: memref<20x96xf32, #tpu.memory_space<vmem>>, %arg2: memref<16x32xf32, #tpu.memory_space<vmem>>, %arg3: memref<2x32x96xf32, #tpu.memory_space<vmem>>, %arg4: memref<2x32x32xf32, #tpu.memory_space<vmem>>, %arg5: memref<2x32x64xf32, #tpu.memory_space<vmem>>, %arg6: memref<2x64x32xf32, #tpu.memory_space<vmem>>, %arg7: memref<32x8xf32, #tpu.memory_space<vmem>>, %arg8: memref<16x8xf32, #tpu.memory_space<vmem>>) attributes {dimension_semantics = [], scalar_prefetch = 0 : i64, scratch_operands = 0 : i64, tpu.core_type = #tpu.core_type<tc>} {
    %c0 = arith.constant 0 : index
    %c0_0 = arith.constant 0 : index
    %0 = vector.load %arg0[%c0, %c0_0] : memref<16x16xf32, #tpu.memory_space<vmem>>, vector<16x16xf32>
    %cst = arith.constant dense<0.000000e+00> : vector<16xf32>
    %1 = vector.multi_reduction <add>, %0, %cst [1] : vector<16x16xf32> to vector<16xf32>
    %2 = vector.shape_cast %1 : vector<16xf32> to vector<16x1xf32>
    %cst_1 = arith.constant 1.600000e+01 : f32
    %3 = vector.broadcast %cst_1 : f32 to vector<16x1xf32>
    %4 = arith.divf %2, %3 : vector<16x1xf32>
    %5 = vector.broadcast %4 : vector<16x1xf32> to vector<16x16xf32>
    %6 = arith.subf %0, %5 : vector<16x16xf32>
    %7 = arith.mulf %6, %6 : vector<16x16xf32>
    %cst_2 = arith.constant dense<0.000000e+00> : vector<16xf32>
    %8 = vector.multi_reduction <add>, %7, %cst_2 [1] : vector<16x16xf32> to vector<16xf32>
    %9 = vector.shape_cast %8 : vector<16xf32> to vector<16x1xf32>
    %cst_3 = arith.constant 1.600000e+01 : f32
    %10 = vector.broadcast %cst_3 : f32 to vector<16x1xf32>
    %11 = arith.divf %9, %10 : vector<16x1xf32>
    %12 = tpu.iota {dimensions = array<i32: 0>} : vector<16x1xi32>
    %c8_i32 = arith.constant 8 : i32
    %c0_i32 = arith.constant 0 : i32
    %13 = arith.cmpi eq, %c8_i32, %c0_i32 : i32
    %c1_i32 = arith.constant 1 : i32
    %14 = arith.select %13, %c1_i32, %c8_i32 : i32
    %15 = vector.broadcast %14 : i32 to vector<16x1xi32>
    %16 = arith.remsi %12, %15 : vector<16x1xi32>
    %c0_i32_4 = arith.constant 0 : i32
    %17 = vector.broadcast %c0_i32_4 : i32 to vector<16x1xi32>
    %18 = arith.cmpi ne, %16, %17 : vector<16x1xi32>
    %c0_i32_5 = arith.constant 0 : i32
    %19 = vector.broadcast %c0_i32_5 : i32 to vector<16x1xi32>
    %20 = arith.cmpi slt, %16, %19 : vector<16x1xi32>
    %c0_i32_6 = arith.constant 0 : i32
    %21 = arith.cmpi slt, %14, %c0_i32_6 : i32
    %22 = vector.broadcast %21 : i1 to vector<16x1xi1>
    %23 = vector.broadcast %22 : vector<16x1xi1> to vector<16x1xi1>
    %24 = arith.xori %20, %23 : vector<16x1xi1>
    %25 = arith.andi %24, %18 : vector<16x1xi1>
    %26 = vector.broadcast %14 : i32 to vector<16x1xi32>
    %27 = arith.addi %16, %26 : vector<16x1xi32>
    %28 = arith.select %25, %27, %16 : vector<16x1xi1>, vector<16x1xi32>
    %c4_i32 = arith.constant 4 : i32
    %29 = vector.broadcast %c4_i32 : i32 to vector<16x1xi32>
    %30 = arith.cmpi slt, %28, %29 : vector<16x1xi32>
    %cst_7 = arith.constant 0.000000e+00 : f32
    %31 = vector.broadcast %cst_7 : f32 to vector<16x1xf32>
    %32 = arith.select %30, %4, %31 : vector<16x1xi1>, vector<16x1xf32>
    %cst_8 = arith.constant 9.99999974E-6 : f32
    %33 = vector.broadcast %cst_8 : f32 to vector<16x1xf32>
    %34 = arith.addf %11, %33 : vector<16x1xf32>
    %35 = math.rsqrt %34 : vector<16x1xf32>
    %cst_9 = arith.constant 1.000000e+00 : f32
    %36 = vector.broadcast %cst_9 : f32 to vector<16x1xf32>
    %37 = arith.select %30, %35, %36 : vector<16x1xi1>, vector<16x1xf32>
    %cst_10 = arith.constant 9.99999974E-6 : f32
    %38 = vector.broadcast %cst_10 : f32 to vector<16x1xf32>
    %39 = arith.addf %11, %38 : vector<16x1xf32>
    %40 = math.sqrt %39 : vector<16x1xf32>
    %cst_11 = arith.constant 1.000000e+00 : f32
    %41 = vector.broadcast %cst_11 : f32 to vector<16x1xf32>
    %42 = arith.select %30, %40, %41 : vector<16x1xi1>, vector<16x1xf32>
    %43 = vector.broadcast %32 : vector<16x1xf32> to vector<16x16xf32>
    %44 = arith.subf %0, %43 : vector<16x16xf32>
    %45 = vector.broadcast %37 : vector<16x1xf32> to vector<16x16xf32>
    %46 = arith.mulf %44, %45 : vector<16x16xf32>
    %c0_12 = arith.constant 0 : index
    %c0_13 = arith.constant 0 : index
    %47 = vector.load %arg2[%c0_12, %c0_13] : memref<16x32xf32, #tpu.memory_space<vmem>>, vector<16x32xf32>
    %cst_14 = arith.constant dense<0.000000e+00> : vector<16x32xf32>
    %48 = tpu.matmul %46, %47, %cst_14 {dimension_numbers = #tpu.dot_dimension_numbers<[1], [0], [0], [1], [0, 0, 1, 1], [], []>} : vector<16x16xf32>, vector<16x32xf32>, vector<16x32xf32> -> vector<16x32xf32>
    %c0_15 = arith.constant 0 : index
    %c0_16 = arith.constant 0 : index
    %49 = vector.load %arg1[%c0_15, %c0_16] : memref<20x96xf32, #tpu.memory_space<vmem>>, vector<1x32xf32>
    %50 = vector.broadcast %49 : vector<1x32xf32> to vector<16x32xf32>
    %51 = arith.addf %48, %50 : vector<16x32xf32>
    %c0_17 = arith.constant 0 : index
    %c0_18 = arith.constant 0 : index
    %c0_19 = arith.constant 0 : index
    %52 = vector.load %arg3[%c0_17, %c0_18, %c0_19] : memref<2x32x96xf32, #tpu.memory_space<vmem>>, vector<1x32x96xf32>
    %53 = vector.shape_cast %52 : vector<1x32x96xf32> to vector<32x96xf32>
    %cst_20 = arith.constant dense<0.000000e+00> : vector<16x96xf32>
    %54 = tpu.matmul %51, %53, %cst_20 {dimension_numbers = #tpu.dot_dimension_numbers<[1], [0], [0], [1], [0, 0, 1, 1], [], []>} : vector<16x32xf32>, vector<32x96xf32>, vector<16x96xf32> -> vector<16x96xf32>
    %c4 = arith.constant 4 : index
    %c0_21 = arith.constant 0 : index
    %55 = vector.load %arg1[%c4, %c0_21] : memref<20x96xf32, #tpu.memory_space<vmem>>, vector<1x96xf32>
    %56 = vector.broadcast %55 : vector<1x96xf32> to vector<16x96xf32>
    %57 = arith.addf %54, %56 : vector<16x96xf32>
    %58 = vector.shape_cast %57 : vector<16x96xf32> to vector<2x8x96xf32>
    %59 = vector.extract_strided_slice %58 {offsets = [0, 0, 0], sizes = [2, 8, 8], strides = [1, 1, 1]} : vector<2x8x96xf32> to vector<2x8x8xf32>
    %60 = vector.extract_strided_slice %58 {offsets = [0, 0, 8], sizes = [2, 8, 8], strides = [1, 1, 1]} : vector<2x8x96xf32> to vector<2x8x8xf32>
    %61 = vector.extract_strided_slice %58 {offsets = [0, 0, 16], sizes = [2, 8, 8], strides = [1, 1, 1]} : vector<2x8x96xf32> to vector<2x8x8xf32>
    %62 = vector.extract_strided_slice %58 {offsets = [0, 0, 24], sizes = [2, 8, 8], strides = [1, 1, 1]} : vector<2x8x96xf32> to vector<2x8x8xf32>
    %63 = tpu.concatenate %59, %60, %61, %62 in 0 : vector<2x8x8xf32>, vector<2x8x8xf32>, vector<2x8x8xf32>, vector<2x8x8xf32> -> vector<8x8x8xf32>
    %64 = vector.extract_strided_slice %58 {offsets = [0, 0, 32], sizes = [2, 8, 8], strides = [1, 1, 1]} : vector<2x8x96xf32> to vector<2x8x8xf32>
    %65 = vector.extract_strided_slice %58 {offsets = [0, 0, 40], sizes = [2, 8, 8], strides = [1, 1, 1]} : vector<2x8x96xf32> to vector<2x8x8xf32>
    %66 = vector.extract_strided_slice %58 {offsets = [0, 0, 48], sizes = [2, 8, 8], strides = [1, 1, 1]} : vector<2x8x96xf32> to vector<2x8x8xf32>
    %67 = vector.extract_strided_slice %58 {offsets = [0, 0, 56], sizes = [2, 8, 8], strides = [1, 1, 1]} : vector<2x8x96xf32> to vector<2x8x8xf32>
    %68 = tpu.concatenate %64, %65, %66, %67 in 0 : vector<2x8x8xf32>, vector<2x8x8xf32>, vector<2x8x8xf32>, vector<2x8x8xf32> -> vector<8x8x8xf32>
    %69 = vector.extract_strided_slice %58 {offsets = [0, 0, 64], sizes = [2, 8, 8], strides = [1, 1, 1]} : vector<2x8x96xf32> to vector<2x8x8xf32>
    %70 = vector.extract_strided_slice %58 {offsets = [0, 0, 72], sizes = [2, 8, 8], strides = [1, 1, 1]} : vector<2x8x96xf32> to vector<2x8x8xf32>
    %71 = vector.extract_strided_slice %58 {offsets = [0, 0, 80], sizes = [2, 8, 8], strides = [1, 1, 1]} : vector<2x8x96xf32> to vector<2x8x8xf32>
    %72 = vector.extract_strided_slice %58 {offsets = [0, 0, 88], sizes = [2, 8, 8], strides = [1, 1, 1]} : vector<2x8x96xf32> to vector<2x8x8xf32>
    %73 = tpu.concatenate %69, %70, %71, %72 in 0 : vector<2x8x8xf32>, vector<2x8x8xf32>, vector<2x8x8xf32>, vector<2x8x8xf32> -> vector<8x8x8xf32>
    "tpu.trace_start"() <{level = 10 : i32, message = "gte,gse->gts"}> : () -> ()
    %cst_22 = arith.constant dense<0.000000e+00> : vector<8x8x8xf32>
    %74 = tpu.matmul %63, %68, %cst_22 {dimension_numbers = #tpu.dot_dimension_numbers<[2], [2], [1], [1], [0, 0, 0, 1, 1, 1], [0], [0]>} : vector<8x8x8xf32>, vector<8x8x8xf32>, vector<8x8x8xf32> -> vector<8x8x8xf32>
    "tpu.trace_stop"() : () -> ()
    %cst_23 = arith.constant 0.353553385 : f32
    %75 = vector.broadcast %cst_23 : f32 to vector<8x8x8xf32>
    %76 = arith.mulf %74, %75 : vector<8x8x8xf32>
    %cst_24 = arith.constant dense<0xFF800000> : vector<8x8xf32>
    %77 = vector.multi_reduction <maximumf>, %76, %cst_24 [2] : vector<8x8x8xf32> to vector<8x8xf32>
    %78 = vector.shape_cast %77 : vector<8x8xf32> to vector<8x8x1xf32>
    %79 = vector.broadcast %78 : vector<8x8x1xf32> to vector<8x8x8xf32>
    %80 = arith.subf %76, %79 : vector<8x8x8xf32>
    %81 = math.exp %80 : vector<8x8x8xf32>
    %cst_25 = arith.constant dense<0.000000e+00> : vector<8x8xf32>
    %82 = vector.multi_reduction <add>, %81, %cst_25 [2] : vector<8x8x8xf32> to vector<8x8xf32>
    %83 = vector.shape_cast %82 : vector<8x8xf32> to vector<8x8x1xf32>
    %84 = tpu.reciprocal %83 {approx = true} : vector<8x8x1xf32> -> vector<8x8x1xf32>
    %85 = vector.broadcast %84 : vector<8x8x1xf32> to vector<8x8x8xf32>
    %86 = arith.mulf %81, %85 : vector<8x8x8xf32>
    "tpu.trace_start"() <{level = 10 : i32, message = "gts,gse->gte"}> : () -> ()
    %cst_26 = arith.constant dense<0.000000e+00> : vector<8x8x8xf32>
    %87 = tpu.matmul %86, %73, %cst_26 {dimension_numbers = #tpu.dot_dimension_numbers<[2], [1], [1], [2], [0, 0, 0, 1, 1, 2], [0], [0]>} : vector<8x8x8xf32>, vector<8x8x8xf32>, vector<8x8x8xf32> -> vector<8x8x8xf32>
    "tpu.trace_stop"() : () -> ()
    %88 = vector.extract_strided_slice %87 {offsets = [0, 0, 0], sizes = [2, 8, 8], strides = [1, 1, 1]} : vector<8x8x8xf32> to vector<2x8x8xf32>
    %89 = vector.extract_strided_slice %87 {offsets = [2, 0, 0], sizes = [2, 8, 8], strides = [1, 1, 1]} : vector<8x8x8xf32> to vector<2x8x8xf32>
    %90 = vector.extract_strided_slice %87 {offsets = [4, 0, 0], sizes = [2, 8, 8], strides = [1, 1, 1]} : vector<8x8x8xf32> to vector<2x8x8xf32>
    %91 = vector.extract_strided_slice %87 {offsets = [6, 0, 0], sizes = [2, 8, 8], strides = [1, 1, 1]} : vector<8x8x8xf32> to vector<2x8x8xf32>
    %92 = tpu.concatenate %88, %89, %90, %91 in 2 : vector<2x8x8xf32>, vector<2x8x8xf32>, vector<2x8x8xf32>, vector<2x8x8xf32> -> vector<2x8x32xf32>
    %93 = vector.shape_cast %92 : vector<2x8x32xf32> to vector<16x32xf32>
    %c0_27 = arith.constant 0 : index
    %c0_28 = arith.constant 0 : index
    %c0_29 = arith.constant 0 : index
    %94 = vector.load %arg4[%c0_27, %c0_28, %c0_29] : memref<2x32x32xf32, #tpu.memory_space<vmem>>, vector<1x32x32xf32>
    %95 = vector.shape_cast %94 : vector<1x32x32xf32> to vector<32x32xf32>
    %cst_30 = arith.constant dense<0.000000e+00> : vector<16x32xf32>
    %96 = tpu.matmul %93, %95, %cst_30 {dimension_numbers = #tpu.dot_dimension_numbers<[1], [0], [0], [1], [0, 0, 1, 1], [], []>} : vector<16x32xf32>, vector<32x32xf32>, vector<16x32xf32> -> vector<16x32xf32>
    %c5 = arith.constant 5 : index
    %c0_31 = arith.constant 0 : index
    %97 = vector.load %arg1[%c5, %c0_31] : memref<20x96xf32, #tpu.memory_space<vmem>>, vector<1x32xf32>
    %98 = vector.broadcast %97 : vector<1x32xf32> to vector<16x32xf32>
    %99 = arith.addf %96, %98 : vector<16x32xf32>
    %100 = arith.addf %51, %99 : vector<16x32xf32>
    %c8 = arith.constant 8 : index
    %c0_32 = arith.constant 0 : index
    %101 = vector.load %arg1[%c8, %c0_32] : memref<20x96xf32, #tpu.memory_space<vmem>>, vector<1x32xf32>
    %c9 = arith.constant 9 : index
    %c0_33 = arith.constant 0 : index
    %102 = vector.load %arg1[%c9, %c0_33] : memref<20x96xf32, #tpu.memory_space<vmem>>, vector<1x32xf32>
    %cst_34 = arith.constant dense<0.000000e+00> : vector<16xf32>
    %103 = vector.multi_reduction <add>, %100, %cst_34 [1] : vector<16x32xf32> to vector<16xf32>
    %104 = vector.shape_cast %103 : vector<16xf32> to vector<16x1xf32>
    %cst_35 = arith.constant 3.200000e+01 : f32
    %105 = vector.broadcast %cst_35 : f32 to vector<16x1xf32>
    %106 = arith.divf %104, %105 : vector<16x1xf32>
    %107 = vector.broadcast %106 : vector<16x1xf32> to vector<16x32xf32>
    %108 = arith.subf %100, %107 : vector<16x32xf32>
    %109 = arith.mulf %108, %108 : vector<16x32xf32>
    %cst_36 = arith.constant dense<0.000000e+00> : vector<16xf32>
    %110 = vector.multi_reduction <add>, %109, %cst_36 [1] : vector<16x32xf32> to vector<16xf32>
    %111 = vector.shape_cast %110 : vector<16xf32> to vector<16x1xf32>
    %cst_37 = arith.constant 3.200000e+01 : f32
    %112 = vector.broadcast %cst_37 : f32 to vector<16x1xf32>
    %113 = arith.divf %111, %112 : vector<16x1xf32>
    %114 = vector.broadcast %106 : vector<16x1xf32> to vector<16x32xf32>
    %115 = arith.subf %100, %114 : vector<16x32xf32>
    %cst_38 = arith.constant 9.99999974E-6 : f32
    %116 = vector.broadcast %cst_38 : f32 to vector<16x1xf32>
    %117 = arith.addf %113, %116 : vector<16x1xf32>
    %118 = math.rsqrt %117 : vector<16x1xf32>
    %119 = vector.broadcast %118 : vector<16x1xf32> to vector<16x32xf32>
    %120 = arith.mulf %115, %119 : vector<16x32xf32>
    %121 = vector.broadcast %101 : vector<1x32xf32> to vector<16x32xf32>
    %122 = arith.mulf %120, %121 : vector<16x32xf32>
    %123 = vector.broadcast %102 : vector<1x32xf32> to vector<16x32xf32>
    %124 = arith.addf %122, %123 : vector<16x32xf32>
    %c0_39 = arith.constant 0 : index
    %c0_40 = arith.constant 0 : index
    %c0_41 = arith.constant 0 : index
    %125 = vector.load %arg5[%c0_39, %c0_40, %c0_41] : memref<2x32x64xf32, #tpu.memory_space<vmem>>, vector<1x32x64xf32>
    %126 = vector.shape_cast %125 : vector<1x32x64xf32> to vector<32x64xf32>
    %cst_42 = arith.constant dense<0.000000e+00> : vector<16x64xf32>
    %127 = tpu.matmul %124, %126, %cst_42 {dimension_numbers = #tpu.dot_dimension_numbers<[1], [0], [0], [1], [0, 0, 1, 1], [], []>} : vector<16x32xf32>, vector<32x64xf32>, vector<16x64xf32> -> vector<16x64xf32>
    %c6 = arith.constant 6 : index
    %c0_43 = arith.constant 0 : index
    %128 = vector.load %arg1[%c6, %c0_43] : memref<20x96xf32, #tpu.memory_space<vmem>>, vector<1x64xf32>
    %129 = vector.broadcast %128 : vector<1x64xf32> to vector<16x64xf32>
    %130 = arith.addf %127, %129 : vector<16x64xf32>
    %cst_44 = arith.constant 0.000000e+00 : f32
    %131 = vector.broadcast %cst_44 : f32 to vector<16x64xf32>
    %132 = arith.maximumf %130, %131 : vector<16x64xf32>
    %c0_45 = arith.constant 0 : index
    %c0_46 = arith.constant 0 : index
    %c0_47 = arith.constant 0 : index
    %133 = vector.load %arg6[%c0_45, %c0_46, %c0_47] : memref<2x64x32xf32, #tpu.memory_space<vmem>>, vector<1x64x32xf32>
    %134 = vector.shape_cast %133 : vector<1x64x32xf32> to vector<64x32xf32>
    %cst_48 = arith.constant dense<0.000000e+00> : vector<16x32xf32>
    %135 = tpu.matmul %132, %134, %cst_48 {dimension_numbers = #tpu.dot_dimension_numbers<[1], [0], [0], [1], [0, 0, 1, 1], [], []>} : vector<16x64xf32>, vector<64x32xf32>, vector<16x32xf32> -> vector<16x32xf32>
    %c7 = arith.constant 7 : index
    %c0_49 = arith.constant 0 : index
    %136 = vector.load %arg1[%c7, %c0_49] : memref<20x96xf32, #tpu.memory_space<vmem>>, vector<1x32xf32>
    %137 = vector.broadcast %136 : vector<1x32xf32> to vector<16x32xf32>
    %138 = arith.addf %135, %137 : vector<16x32xf32>
    %139 = arith.addf %124, %138 : vector<16x32xf32>
    %c10 = arith.constant 10 : index
    %c0_50 = arith.constant 0 : index
    %140 = vector.load %arg1[%c10, %c0_50] : memref<20x96xf32, #tpu.memory_space<vmem>>, vector<1x32xf32>
    %c11 = arith.constant 11 : index
    %c0_51 = arith.constant 0 : index
    %141 = vector.load %arg1[%c11, %c0_51] : memref<20x96xf32, #tpu.memory_space<vmem>>, vector<1x32xf32>
    %cst_52 = arith.constant dense<0.000000e+00> : vector<16xf32>
    %142 = vector.multi_reduction <add>, %139, %cst_52 [1] : vector<16x32xf32> to vector<16xf32>
    %143 = vector.shape_cast %142 : vector<16xf32> to vector<16x1xf32>
    %cst_53 = arith.constant 3.200000e+01 : f32
    %144 = vector.broadcast %cst_53 : f32 to vector<16x1xf32>
    %145 = arith.divf %143, %144 : vector<16x1xf32>
    %146 = vector.broadcast %145 : vector<16x1xf32> to vector<16x32xf32>
    %147 = arith.subf %139, %146 : vector<16x32xf32>
    %148 = arith.mulf %147, %147 : vector<16x32xf32>
    %cst_54 = arith.constant dense<0.000000e+00> : vector<16xf32>
    %149 = vector.multi_reduction <add>, %148, %cst_54 [1] : vector<16x32xf32> to vector<16xf32>
    %150 = vector.shape_cast %149 : vector<16xf32> to vector<16x1xf32>
    %cst_55 = arith.constant 3.200000e+01 : f32
    %151 = vector.broadcast %cst_55 : f32 to vector<16x1xf32>
    %152 = arith.divf %150, %151 : vector<16x1xf32>
    %153 = vector.broadcast %145 : vector<16x1xf32> to vector<16x32xf32>
    %154 = arith.subf %139, %153 : vector<16x32xf32>
    %cst_56 = arith.constant 9.99999974E-6 : f32
    %155 = vector.broadcast %cst_56 : f32 to vector<16x1xf32>
    %156 = arith.addf %152, %155 : vector<16x1xf32>
    %157 = math.rsqrt %156 : vector<16x1xf32>
    %158 = vector.broadcast %157 : vector<16x1xf32> to vector<16x32xf32>
    %159 = arith.mulf %154, %158 : vector<16x32xf32>
    %160 = vector.broadcast %140 : vector<1x32xf32> to vector<16x32xf32>
    %161 = arith.mulf %159, %160 : vector<16x32xf32>
    %162 = vector.broadcast %141 : vector<1x32xf32> to vector<16x32xf32>
    %163 = arith.addf %161, %162 : vector<16x32xf32>
    %c1 = arith.constant 1 : index
    %c0_57 = arith.constant 0 : index
    %c0_58 = arith.constant 0 : index
    %164 = vector.load %arg3[%c1, %c0_57, %c0_58] : memref<2x32x96xf32, #tpu.memory_space<vmem>>, vector<1x32x96xf32>
    %165 = vector.shape_cast %164 : vector<1x32x96xf32> to vector<32x96xf32>
    %cst_59 = arith.constant dense<0.000000e+00> : vector<16x96xf32>
    %166 = tpu.matmul %163, %165, %cst_59 {dimension_numbers = #tpu.dot_dimension_numbers<[1], [0], [0], [1], [0, 0, 1, 1], [], []>} : vector<16x32xf32>, vector<32x96xf32>, vector<16x96xf32> -> vector<16x96xf32>
    %c12 = arith.constant 12 : index
    %c0_60 = arith.constant 0 : index
    %167 = vector.load %arg1[%c12, %c0_60] : memref<20x96xf32, #tpu.memory_space<vmem>>, vector<1x96xf32>
    %168 = vector.broadcast %167 : vector<1x96xf32> to vector<16x96xf32>
    %169 = arith.addf %166, %168 : vector<16x96xf32>
    %170 = vector.shape_cast %169 : vector<16x96xf32> to vector<2x8x96xf32>
    %171 = vector.extract_strided_slice %170 {offsets = [0, 0, 0], sizes = [2, 8, 8], strides = [1, 1, 1]} : vector<2x8x96xf32> to vector<2x8x8xf32>
    %172 = vector.extract_strided_slice %170 {offsets = [0, 0, 8], sizes = [2, 8, 8], strides = [1, 1, 1]} : vector<2x8x96xf32> to vector<2x8x8xf32>
    %173 = vector.extract_strided_slice %170 {offsets = [0, 0, 16], sizes = [2, 8, 8], strides = [1, 1, 1]} : vector<2x8x96xf32> to vector<2x8x8xf32>
    %174 = vector.extract_strided_slice %170 {offsets = [0, 0, 24], sizes = [2, 8, 8], strides = [1, 1, 1]} : vector<2x8x96xf32> to vector<2x8x8xf32>
    %175 = tpu.concatenate %171, %172, %173, %174 in 0 : vector<2x8x8xf32>, vector<2x8x8xf32>, vector<2x8x8xf32>, vector<2x8x8xf32> -> vector<8x8x8xf32>
    %176 = vector.extract_strided_slice %170 {offsets = [0, 0, 32], sizes = [2, 8, 8], strides = [1, 1, 1]} : vector<2x8x96xf32> to vector<2x8x8xf32>
    %177 = vector.extract_strided_slice %170 {offsets = [0, 0, 40], sizes = [2, 8, 8], strides = [1, 1, 1]} : vector<2x8x96xf32> to vector<2x8x8xf32>
    %178 = vector.extract_strided_slice %170 {offsets = [0, 0, 48], sizes = [2, 8, 8], strides = [1, 1, 1]} : vector<2x8x96xf32> to vector<2x8x8xf32>
    %179 = vector.extract_strided_slice %170 {offsets = [0, 0, 56], sizes = [2, 8, 8], strides = [1, 1, 1]} : vector<2x8x96xf32> to vector<2x8x8xf32>
    %180 = tpu.concatenate %176, %177, %178, %179 in 0 : vector<2x8x8xf32>, vector<2x8x8xf32>, vector<2x8x8xf32>, vector<2x8x8xf32> -> vector<8x8x8xf32>
    %181 = vector.extract_strided_slice %170 {offsets = [0, 0, 64], sizes = [2, 8, 8], strides = [1, 1, 1]} : vector<2x8x96xf32> to vector<2x8x8xf32>
    %182 = vector.extract_strided_slice %170 {offsets = [0, 0, 72], sizes = [2, 8, 8], strides = [1, 1, 1]} : vector<2x8x96xf32> to vector<2x8x8xf32>
    %183 = vector.extract_strided_slice %170 {offsets = [0, 0, 80], sizes = [2, 8, 8], strides = [1, 1, 1]} : vector<2x8x96xf32> to vector<2x8x8xf32>
    %184 = vector.extract_strided_slice %170 {offsets = [0, 0, 88], sizes = [2, 8, 8], strides = [1, 1, 1]} : vector<2x8x96xf32> to vector<2x8x8xf32>
    %185 = tpu.concatenate %181, %182, %183, %184 in 0 : vector<2x8x8xf32>, vector<2x8x8xf32>, vector<2x8x8xf32>, vector<2x8x8xf32> -> vector<8x8x8xf32>
    "tpu.trace_start"() <{level = 10 : i32, message = "gte,gse->gts"}> : () -> ()
    %cst_61 = arith.constant dense<0.000000e+00> : vector<8x8x8xf32>
    %186 = tpu.matmul %175, %180, %cst_61 {dimension_numbers = #tpu.dot_dimension_numbers<[2], [2], [1], [1], [0, 0, 0, 1, 1, 1], [0], [0]>} : vector<8x8x8xf32>, vector<8x8x8xf32>, vector<8x8x8xf32> -> vector<8x8x8xf32>
    "tpu.trace_stop"() : () -> ()
    %cst_62 = arith.constant 0.353553385 : f32
    %187 = vector.broadcast %cst_62 : f32 to vector<8x8x8xf32>
    %188 = arith.mulf %186, %187 : vector<8x8x8xf32>
    %cst_63 = arith.constant dense<0xFF800000> : vector<8x8xf32>
    %189 = vector.multi_reduction <maximumf>, %188, %cst_63 [2] : vector<8x8x8xf32> to vector<8x8xf32>
    %190 = vector.shape_cast %189 : vector<8x8xf32> to vector<8x8x1xf32>
    %191 = vector.broadcast %190 : vector<8x8x1xf32> to vector<8x8x8xf32>
    %192 = arith.subf %188, %191 : vector<8x8x8xf32>
    %193 = math.exp %192 : vector<8x8x8xf32>
    %cst_64 = arith.constant dense<0.000000e+00> : vector<8x8xf32>
    %194 = vector.multi_reduction <add>, %193, %cst_64 [2] : vector<8x8x8xf32> to vector<8x8xf32>
    %195 = vector.shape_cast %194 : vector<8x8xf32> to vector<8x8x1xf32>
    %196 = tpu.reciprocal %195 {approx = true} : vector<8x8x1xf32> -> vector<8x8x1xf32>
    %197 = vector.broadcast %196 : vector<8x8x1xf32> to vector<8x8x8xf32>
    %198 = arith.mulf %193, %197 : vector<8x8x8xf32>
    "tpu.trace_start"() <{level = 10 : i32, message = "gts,gse->gte"}> : () -> ()
    %cst_65 = arith.constant dense<0.000000e+00> : vector<8x8x8xf32>
    %199 = tpu.matmul %198, %185, %cst_65 {dimension_numbers = #tpu.dot_dimension_numbers<[2], [1], [1], [2], [0, 0, 0, 1, 1, 2], [0], [0]>} : vector<8x8x8xf32>, vector<8x8x8xf32>, vector<8x8x8xf32> -> vector<8x8x8xf32>
    "tpu.trace_stop"() : () -> ()
    %200 = vector.extract_strided_slice %199 {offsets = [0, 0, 0], sizes = [2, 8, 8], strides = [1, 1, 1]} : vector<8x8x8xf32> to vector<2x8x8xf32>
    %201 = vector.extract_strided_slice %199 {offsets = [2, 0, 0], sizes = [2, 8, 8], strides = [1, 1, 1]} : vector<8x8x8xf32> to vector<2x8x8xf32>
    %202 = vector.extract_strided_slice %199 {offsets = [4, 0, 0], sizes = [2, 8, 8], strides = [1, 1, 1]} : vector<8x8x8xf32> to vector<2x8x8xf32>
    %203 = vector.extract_strided_slice %199 {offsets = [6, 0, 0], sizes = [2, 8, 8], strides = [1, 1, 1]} : vector<8x8x8xf32> to vector<2x8x8xf32>
    %204 = tpu.concatenate %200, %201, %202, %203 in 2 : vector<2x8x8xf32>, vector<2x8x8xf32>, vector<2x8x8xf32>, vector<2x8x8xf32> -> vector<2x8x32xf32>
    %205 = vector.shape_cast %204 : vector<2x8x32xf32> to vector<16x32xf32>
    %c1_66 = arith.constant 1 : index
    %c0_67 = arith.constant 0 : index
    %c0_68 = arith.constant 0 : index
    %206 = vector.load %arg4[%c1_66, %c0_67, %c0_68] : memref<2x32x32xf32, #tpu.memory_space<vmem>>, vector<1x32x32xf32>
    %207 = vector.shape_cast %206 : vector<1x32x32xf32> to vector<32x32xf32>
    %cst_69 = arith.constant dense<0.000000e+00> : vector<16x32xf32>
    %208 = tpu.matmul %205, %207, %cst_69 {dimension_numbers = #tpu.dot_dimension_numbers<[1], [0], [0], [1], [0, 0, 1, 1], [], []>} : vector<16x32xf32>, vector<32x32xf32>, vector<16x32xf32> -> vector<16x32xf32>
    %c13 = arith.constant 13 : index
    %c0_70 = arith.constant 0 : index
    %209 = vector.load %arg1[%c13, %c0_70] : memref<20x96xf32, #tpu.memory_space<vmem>>, vector<1x32xf32>
    %210 = vector.broadcast %209 : vector<1x32xf32> to vector<16x32xf32>
    %211 = arith.addf %208, %210 : vector<16x32xf32>
    %212 = arith.addf %163, %211 : vector<16x32xf32>
    %c16 = arith.constant 16 : index
    %c0_71 = arith.constant 0 : index
    %213 = vector.load %arg1[%c16, %c0_71] : memref<20x96xf32, #tpu.memory_space<vmem>>, vector<1x32xf32>
    %c17 = arith.constant 17 : index
    %c0_72 = arith.constant 0 : index
    %214 = vector.load %arg1[%c17, %c0_72] : memref<20x96xf32, #tpu.memory_space<vmem>>, vector<1x32xf32>
    %cst_73 = arith.constant dense<0.000000e+00> : vector<16xf32>
    %215 = vector.multi_reduction <add>, %212, %cst_73 [1] : vector<16x32xf32> to vector<16xf32>
    %216 = vector.shape_cast %215 : vector<16xf32> to vector<16x1xf32>
    %cst_74 = arith.constant 3.200000e+01 : f32
    %217 = vector.broadcast %cst_74 : f32 to vector<16x1xf32>
    %218 = arith.divf %216, %217 : vector<16x1xf32>
    %219 = vector.broadcast %218 : vector<16x1xf32> to vector<16x32xf32>
    %220 = arith.subf %212, %219 : vector<16x32xf32>
    %221 = arith.mulf %220, %220 : vector<16x32xf32>
    %cst_75 = arith.constant dense<0.000000e+00> : vector<16xf32>
    %222 = vector.multi_reduction <add>, %221, %cst_75 [1] : vector<16x32xf32> to vector<16xf32>
    %223 = vector.shape_cast %222 : vector<16xf32> to vector<16x1xf32>
    %cst_76 = arith.constant 3.200000e+01 : f32
    %224 = vector.broadcast %cst_76 : f32 to vector<16x1xf32>
    %225 = arith.divf %223, %224 : vector<16x1xf32>
    %226 = vector.broadcast %218 : vector<16x1xf32> to vector<16x32xf32>
    %227 = arith.subf %212, %226 : vector<16x32xf32>
    %cst_77 = arith.constant 9.99999974E-6 : f32
    %228 = vector.broadcast %cst_77 : f32 to vector<16x1xf32>
    %229 = arith.addf %225, %228 : vector<16x1xf32>
    %230 = math.rsqrt %229 : vector<16x1xf32>
    %231 = vector.broadcast %230 : vector<16x1xf32> to vector<16x32xf32>
    %232 = arith.mulf %227, %231 : vector<16x32xf32>
    %233 = vector.broadcast %213 : vector<1x32xf32> to vector<16x32xf32>
    %234 = arith.mulf %232, %233 : vector<16x32xf32>
    %235 = vector.broadcast %214 : vector<1x32xf32> to vector<16x32xf32>
    %236 = arith.addf %234, %235 : vector<16x32xf32>
    %c1_78 = arith.constant 1 : index
    %c0_79 = arith.constant 0 : index
    %c0_80 = arith.constant 0 : index
    %237 = vector.load %arg5[%c1_78, %c0_79, %c0_80] : memref<2x32x64xf32, #tpu.memory_space<vmem>>, vector<1x32x64xf32>
    %238 = vector.shape_cast %237 : vector<1x32x64xf32> to vector<32x64xf32>
    %cst_81 = arith.constant dense<0.000000e+00> : vector<16x64xf32>
    %239 = tpu.matmul %236, %238, %cst_81 {dimension_numbers = #tpu.dot_dimension_numbers<[1], [0], [0], [1], [0, 0, 1, 1], [], []>} : vector<16x32xf32>, vector<32x64xf32>, vector<16x64xf32> -> vector<16x64xf32>
    %c14 = arith.constant 14 : index
    %c0_82 = arith.constant 0 : index
    %240 = vector.load %arg1[%c14, %c0_82] : memref<20x96xf32, #tpu.memory_space<vmem>>, vector<1x64xf32>
    %241 = vector.broadcast %240 : vector<1x64xf32> to vector<16x64xf32>
    %242 = arith.addf %239, %241 : vector<16x64xf32>
    %cst_83 = arith.constant 0.000000e+00 : f32
    %243 = vector.broadcast %cst_83 : f32 to vector<16x64xf32>
    %244 = arith.maximumf %242, %243 : vector<16x64xf32>
    %c1_84 = arith.constant 1 : index
    %c0_85 = arith.constant 0 : index
    %c0_86 = arith.constant 0 : index
    %245 = vector.load %arg6[%c1_84, %c0_85, %c0_86] : memref<2x64x32xf32, #tpu.memory_space<vmem>>, vector<1x64x32xf32>
    %246 = vector.shape_cast %245 : vector<1x64x32xf32> to vector<64x32xf32>
    %cst_87 = arith.constant dense<0.000000e+00> : vector<16x32xf32>
    %247 = tpu.matmul %244, %246, %cst_87 {dimension_numbers = #tpu.dot_dimension_numbers<[1], [0], [0], [1], [0, 0, 1, 1], [], []>} : vector<16x64xf32>, vector<64x32xf32>, vector<16x32xf32> -> vector<16x32xf32>
    %c15 = arith.constant 15 : index
    %c0_88 = arith.constant 0 : index
    %248 = vector.load %arg1[%c15, %c0_88] : memref<20x96xf32, #tpu.memory_space<vmem>>, vector<1x32xf32>
    %249 = vector.broadcast %248 : vector<1x32xf32> to vector<16x32xf32>
    %250 = arith.addf %247, %249 : vector<16x32xf32>
    %251 = arith.addf %236, %250 : vector<16x32xf32>
    %c18 = arith.constant 18 : index
    %c0_89 = arith.constant 0 : index
    %252 = vector.load %arg1[%c18, %c0_89] : memref<20x96xf32, #tpu.memory_space<vmem>>, vector<1x32xf32>
    %c19 = arith.constant 19 : index
    %c0_90 = arith.constant 0 : index
    %253 = vector.load %arg1[%c19, %c0_90] : memref<20x96xf32, #tpu.memory_space<vmem>>, vector<1x32xf32>
    %cst_91 = arith.constant dense<0.000000e+00> : vector<16xf32>
    %254 = vector.multi_reduction <add>, %251, %cst_91 [1] : vector<16x32xf32> to vector<16xf32>
    %255 = vector.shape_cast %254 : vector<16xf32> to vector<16x1xf32>
    %cst_92 = arith.constant 3.200000e+01 : f32
    %256 = vector.broadcast %cst_92 : f32 to vector<16x1xf32>
    %257 = arith.divf %255, %256 : vector<16x1xf32>
    %258 = vector.broadcast %257 : vector<16x1xf32> to vector<16x32xf32>
    %259 = arith.subf %251, %258 : vector<16x32xf32>
    %260 = arith.mulf %259, %259 : vector<16x32xf32>
    %cst_93 = arith.constant dense<0.000000e+00> : vector<16xf32>
    %261 = vector.multi_reduction <add>, %260, %cst_93 [1] : vector<16x32xf32> to vector<16xf32>
    %262 = vector.shape_cast %261 : vector<16xf32> to vector<16x1xf32>
    %cst_94 = arith.constant 3.200000e+01 : f32
    %263 = vector.broadcast %cst_94 : f32 to vector<16x1xf32>
    %264 = arith.divf %262, %263 : vector<16x1xf32>
    %265 = vector.broadcast %257 : vector<16x1xf32> to vector<16x32xf32>
    %266 = arith.subf %251, %265 : vector<16x32xf32>
    %cst_95 = arith.constant 9.99999974E-6 : f32
    %267 = vector.broadcast %cst_95 : f32 to vector<16x1xf32>
    %268 = arith.addf %264, %267 : vector<16x1xf32>
    %269 = math.rsqrt %268 : vector<16x1xf32>
    %270 = vector.broadcast %269 : vector<16x1xf32> to vector<16x32xf32>
    %271 = arith.mulf %266, %270 : vector<16x32xf32>
    %272 = vector.broadcast %252 : vector<1x32xf32> to vector<16x32xf32>
    %273 = arith.mulf %271, %272 : vector<16x32xf32>
    %274 = vector.broadcast %253 : vector<1x32xf32> to vector<16x32xf32>
    %275 = arith.addf %273, %274 : vector<16x32xf32>
    %c1_96 = arith.constant 1 : index
    %c0_97 = arith.constant 0 : index
    %276 = vector.load %arg1[%c1_96, %c0_97] : memref<20x96xf32, #tpu.memory_space<vmem>>, vector<1x32xf32>
    %c2 = arith.constant 2 : index
    %c0_98 = arith.constant 0 : index
    %277 = vector.load %arg1[%c2, %c0_98] : memref<20x96xf32, #tpu.memory_space<vmem>>, vector<1x32xf32>
    %cst_99 = arith.constant dense<0.000000e+00> : vector<16xf32>
    %278 = vector.multi_reduction <add>, %275, %cst_99 [1] : vector<16x32xf32> to vector<16xf32>
    %279 = vector.shape_cast %278 : vector<16xf32> to vector<16x1xf32>
    %cst_100 = arith.constant 3.200000e+01 : f32
    %280 = vector.broadcast %cst_100 : f32 to vector<16x1xf32>
    %281 = arith.divf %279, %280 : vector<16x1xf32>
    %282 = vector.broadcast %281 : vector<16x1xf32> to vector<16x32xf32>
    %283 = arith.subf %275, %282 : vector<16x32xf32>
    %284 = arith.mulf %283, %283 : vector<16x32xf32>
    %cst_101 = arith.constant dense<0.000000e+00> : vector<16xf32>
    %285 = vector.multi_reduction <add>, %284, %cst_101 [1] : vector<16x32xf32> to vector<16xf32>
    %286 = vector.shape_cast %285 : vector<16xf32> to vector<16x1xf32>
    %cst_102 = arith.constant 3.200000e+01 : f32
    %287 = vector.broadcast %cst_102 : f32 to vector<16x1xf32>
    %288 = arith.divf %286, %287 : vector<16x1xf32>
    %289 = vector.broadcast %281 : vector<16x1xf32> to vector<16x32xf32>
    %290 = arith.subf %275, %289 : vector<16x32xf32>
    %cst_103 = arith.constant 9.99999974E-6 : f32
    %291 = vector.broadcast %cst_103 : f32 to vector<16x1xf32>
    %292 = arith.addf %288, %291 : vector<16x1xf32>
    %293 = math.rsqrt %292 : vector<16x1xf32>
    %294 = vector.broadcast %293 : vector<16x1xf32> to vector<16x32xf32>
    %295 = arith.mulf %290, %294 : vector<16x32xf32>
    %296 = vector.broadcast %276 : vector<1x32xf32> to vector<16x32xf32>
    %297 = arith.mulf %295, %296 : vector<16x32xf32>
    %298 = vector.broadcast %277 : vector<1x32xf32> to vector<16x32xf32>
    %299 = arith.addf %297, %298 : vector<16x32xf32>
    %c0_104 = arith.constant 0 : index
    %c0_105 = arith.constant 0 : index
    %300 = vector.load %arg7[%c0_104, %c0_105] : memref<32x8xf32, #tpu.memory_space<vmem>>, vector<32x8xf32>
    %cst_106 = arith.constant dense<0.000000e+00> : vector<16x8xf32>
    %301 = tpu.matmul %299, %300, %cst_106 {dimension_numbers = #tpu.dot_dimension_numbers<[1], [0], [0], [1], [0, 0, 1, 1], [], []>} : vector<16x32xf32>, vector<32x8xf32>, vector<16x8xf32> -> vector<16x8xf32>
    %c3 = arith.constant 3 : index
    %c0_107 = arith.constant 0 : index
    %302 = vector.load %arg1[%c3, %c0_107] : memref<20x96xf32, #tpu.memory_space<vmem>>, vector<1x8xf32>
    %303 = vector.broadcast %302 : vector<1x8xf32> to vector<16x8xf32>
    %304 = arith.addf %301, %303 : vector<16x8xf32>
    %305 = vector.broadcast %42 : vector<16x1xf32> to vector<16x8xf32>
    %306 = arith.mulf %304, %305 : vector<16x8xf32>
    %307 = vector.broadcast %32 : vector<16x1xf32> to vector<16x8xf32>
    %308 = arith.addf %306, %307 : vector<16x8xf32>
    %c0_108 = arith.constant 0 : index
    %c0_109 = arith.constant 0 : index
    %309 = vector.load %arg8[%c0_108, %c0_109] : memref<16x8xf32, #tpu.memory_space<vmem>>, vector<16x8xf32>
    tpu.vector_store %arg8[%c0_108, %c0_109], %308 {strides = array<i32>} : memref<16x8xf32, #tpu.memory_space<vmem>>, vector<16x8xf32>,
    return
  }
}

</mosaic_0001>

<llo_original>
// kernel: itransformer_forward.1
$region0: #{itransformer_forward.1}
  #allocation0 [shape = 'u32[]', space=smem, size = 0x4, offset = 0x4, fixed_abs, tag = 'smem constant byte address 0x4 - core index']
  #allocation1 [shape = 'u32[144,128]{1,0:T(1,128)}', space=vmem, size = 0x12000, scoped, tag = 'internal scratch']
  %s0 = inlined_call_operand.vmem [shape: f32[16,16], index: 0, kind: input, shape index: {}]
  %s1 = inlined_call_operand.vmem [shape: f32[20,96], index: 1, kind: input, shape index: {}]
  %s2 = inlined_call_operand.vmem [shape: f32[16,32], index: 2, kind: input, shape index: {}]
  %s3 = inlined_call_operand.vmem [shape: f32[2,32,96], index: 3, kind: input, shape index: {}]
  %s4 = inlined_call_operand.vmem [shape: f32[2,32,32], index: 4, kind: input, shape index: {}]
  %s5 = inlined_call_operand.vmem [shape: f32[2,32,64], index: 5, kind: input, shape index: {}]
  %s6 = inlined_call_operand.vmem [shape: f32[2,64,32], index: 6, kind: input, shape index: {}]
  %s7 = inlined_call_operand.vmem [shape: f32[32,8], index: 7, kind: input, shape index: {}]
  %s8 = inlined_call_operand.vmem [shape: f32[16,8], index: 8, kind: output, shape index: {}]
  %s9 = sld [smem:[#allocation0]]
  $region42: #{itransformer_forward.1} parent=0
    _
  %s11 = ssub.s32 1, %s9
  %s12 = scalar_select 0, %s11, %s9
  // Predicated region
  $region2: #{itransformer_forward.1} parent=0 // pred_check
    _
  $region3: #{itransformer_forward.1} parent=0 // pred_check_branch
    %14 = sbr.rel (0) target = $region5
  $region4: #{itransformer_forward.1} parent=0 // pred_region
    _
  $region5: #{itransformer_forward.1} parent=0 // pred_fallthru
    _
  // Predicated region
  $region6: #{itransformer_forward.1} parent=0 // pred_check
    _
  $region7: #{itransformer_forward.1} parent=0 // pred_check_branch
    %16 = sbr.rel (0) target = $region9
  $region8: #{itransformer_forward.1} parent=0 // pred_region
    _
  $region9: #{itransformer_forward.1} parent=0 // pred_fallthru
    _
  // Predicated region
  $region10: #{itransformer_forward.1} parent=0 // pred_check
    _
  $region11: #{itransformer_forward.1} parent=0 // pred_check_branch
    %18 = sbr.rel (0) target = $region13
  $region12: #{itransformer_forward.1} parent=0 // pred_region
    _
  $region13: #{itransformer_forward.1} parent=0 // pred_fallthru
    _
  // Predicated region
  $region14: #{itransformer_forward.1} parent=0 // pred_check
    _
  $region15: #{itransformer_forward.1} parent=0 // pred_check_branch
    %20 = sbr.rel (0) target = $region17
  $region16: #{itransformer_forward.1} parent=0 // pred_region
    _
  $region17: #{itransformer_forward.1} parent=0 // pred_fallthru
    _
  // Predicated region
  $region18: #{itransformer_forward.1} parent=0 // pred_check
    _
  $region19: #{itransformer_forward.1} parent=0 // pred_check_branch
    %22 = sbr.rel (0) target = $region21
  $region20: #{itransformer_forward.1} parent=0 // pred_region
    _
  $region21: #{itransformer_forward.1} parent=0 // pred_fallthru
    _
  // Predicated region
  $region22: #{itransformer_forward.1} parent=0 // pred_check
    _
  $region23: #{itransformer_forward.1} parent=0 // pred_check_branch
    %24 = sbr.rel (0) target = $region25
  $region24: #{itransformer_forward.1} parent=0 // pred_region
    _
  $region25: #{itransformer_forward.1} parent=0 // pred_fallthru
    _
  // Predicated region
  $region26: #{itransformer_forward.1} parent=0 // pred_check
    _
  $region27: #{itransformer_forward.1} parent=0 // pred_check_branch
    %26 = sbr.rel (0) target = $region29
  $region28: #{itransformer_forward.1} parent=0 // pred_region
    _
  $region29: #{itransformer_forward.1} parent=0 // pred_fallthru
    _
  // Predicated region
  $region30: #{itransformer_forward.1} parent=0 // pred_check
    _
  $region31: #{itransformer_forward.1} parent=0 // pred_check_branch
    %28 = sbr.rel (0) target = $region33
  $region32: #{itransformer_forward.1} parent=0 // pred_region
    _
  $region33: #{itransformer_forward.1} parent=0 // pred_fallthru
    _
  %v29 = vld [vmem:[%s0] sm:$0xff]
  %v30 = vld [vmem:[%s0 + $0x8] sm:$0xff]
  %vm31 = vcmask 130048
  %v32 = vsel %vm31, %v29, 0.0
  %33 = vadd.xlane.f32.xlu0 %v32
  %v34 = vpop.xlane.xlu0 %33
  %v35 = vsel %vm31, %v30, 0.0
  %36 = vadd.xlane.f32.xlu0 %v35
  %v37 = vpop.xlane.xlu0 %36
  %v38 = vrcp.pop 16.0
  %v39 = vmul.f32 %v34, %v38
  %v40 = vmul.f32 %v37, %v38
  %v41 = vsub.f32 %v29, %v39
  %v42 = vsub.f32 %v30, %v40
  %v43 = vmul.f32 %v41, %v41
  %v44 = vmul.f32 %v42, %v42
  %v45 = vsel %vm31, %v43, 0.0
  %46 = vadd.xlane.f32.xlu0 %v45
  %v47 = vpop.xlane.xlu0 %46
  %v48 = vsel %vm31, %v44, 0.0
  %49 = vadd.xlane.f32.xlu0 %v48
  %v50 = vpop.xlane.xlu0 %49
  %v51 = vmul.f32 %v47, %v38
  %v52 = vmul.f32 %v50, %v38
  %v53 = vlaneseq
  %v54 = vshrl.u32 %v53, 7
  %v55 = vadd.s32 %v54, 8
  %vm56 = vcmp.lt.s32.totalorder %v54, 0
  %v57 = vsub.s32 0, %v54
  %v58 = vsel %vm56, %v57, %v54
  %v59 = vshrl.u32 %v58, 3
  %v60 = vand.u32 %v58, 7
  %v61 = vsub.s32 0, %v60
  %v62 = vsel %vm56, %v61, %v60
  %vm63 = vcmp.lt.s32.totalorder %v55, 0
  %v64 = vsub.s32 0, %v55
  %v65 = vsel %vm63, %v64, %v55
  %v66 = vshrl.u32 %v65, 3
  %v67 = vand.u32 %v65, 7
  %v68 = vsub.s32 0, %v67
  %v69 = vsel %vm63, %v68, %v67
  %vm70 = vcmp.ne.s32.totalorder %v62, 0
  %vm71 = vcmp.ne.s32.totalorder %v69, 0
  %vm72 = vcmp.lt.s32.totalorder %v62, 0
  %vm73 = vcmp.lt.s32.totalorder %v69, 0
  %vm74 = vmand %vm72, %vm70
  %vm75 = vmand %vm73, %vm71
  %v76 = vadd.s32 %v62, 8
  %v77 = vadd.s32 %v69, 8
  %v78 = vsel %vm74, %v76, %v62
  %v79 = vsel %vm75, %v77, %v69
  %vm80 = vcmp.lt.s32.totalorder %v78, 4
  %vm81 = vcmp.lt.s32.totalorder %v79, 4
  %v82 = vsel %vm80, %v39, 0.0
  %v83 = vsel %vm81, %v40, 0.0
  %v84 = vadd.f32 %v51, 1e-05
  %v85 = vadd.f32 %v52, 1e-05
  %v86 = vrsqrt.pop %v84
  %v87 = vrsqrt.pop %v85
  %v88 = vsel %vm80, %v86, 1.0
  %v89 = vsel %vm81, %v87, 1.0
  %v90 = vrsqrt.pop %v84
  %v91 = vmul.f32 %v84, %v90
  %vm92 = vcmp.eq.f32.partialorder %v84, inf
  %v93 = vsel %vm92, %v84, %v91
  %vm94 = vcmp.eq.f32.partialorder %v84, 0.0
  %v95 = vand.u32 %v84, 2147483648
  %v96 = vsel %vm94, %v95, %v93
  %v97 = vrsqrt.pop %v85
  %v98 = vmul.f32 %v85, %v97
  %vm99 = vcmp.eq.f32.partialorder %v85, inf
  %v100 = vsel %vm99, %v85, %v98
  %vm101 = vcmp.eq.f32.partialorder %v85, 0.0
  %v102 = vand.u32 %v85, 2147483648
  %v103 = vsel %vm101, %v102, %v100
  %v104 = vsel %vm80, %v96, 1.0
  %v105 = vsel %vm81, %v103, 1.0
  %v106 = vsub.f32 %v29, %v82
  %v107 = vsub.f32 %v30, %v83
  %v108 = vmul.f32 %v106, %v88
  %v109 = vmul.f32 %v107, %v89
  %v110 = vld [vmem:[%s2] sm:$0xff]
  %v111 = vld [vmem:[%s2 + $0x8] sm:$0xff]
  %v112 = vld [vmem:[%s1] sm:$0x1]
  %v113 = vlaneseq
  %v114 = vshrl.u32 %v113, 7
  %v115 = vsub.s32 0, %v114
  %v116 = vrot.slane %v112, %v115
  %v118 = vsel %vm31, %v108, 0
  %v121 = vsel %vm31, %v109, 0
  %123 = vmatprep.subr.mxu0 0.0
  %124 = vmatpush1.msra.mxu0 %v110
  %125 = vmatprep.subr.mxu0 0.0
  %126 = vmatpush1.msra.mxu0 %v111
  %127 = vmatprep.subr.mxu0 0.0
  %128 = vmatpush1.msra.mxu0 0.0
  %129 = vmatprep.subr.mxu0 0.0
  %130 = vmatpush1.msra.mxu0 0.0
  %131 = vmatprep.subr.mxu0 0.0
  %132 = vmatpush1.msra.mxu0 0.0
  %133 = vmatprep.subr.mxu0 0.0
  %134 = vmatpush1.msra.mxu0 0.0
  %135 = vmatprep.subr.mxu0 0.0
  %136 = vmatpush1.msra.mxu0 0.0
  %137 = vmatprep.subr.mxu0 0.0
  %138 = vmatpush1.msra.mxu0 0.0
  %139 = vmatprep.subr.mxu0 0.0
  %140 = vmatpush1.msra.mxu0 0.0
  %141 = vmatprep.subr.mxu0 0.0
  %142 = vmatpush1.msra.mxu0 0.0
  %143 = vmatprep.subr.mxu0 0.0
  %144 = vmatpush1.msra.mxu0 0.0
  %145 = vmatprep.subr.mxu0 0.0
  %146 = vmatpush1.msra.mxu0 0.0
  %147 = vmatprep.subr.mxu0 0.0
  %148 = vmatpush1.msra.mxu0 0.0
  %149 = vmatprep.subr.mxu0 0.0
  %150 = vmatpush1.msra.mxu0 0.0
  %151 = vmatprep.subr.mxu0 0.0
  %152 = vmatpush1.msra.mxu0 0.0
  %153 = vmatprep.subr.mxu0 0.0
  %154 = vmatpush1.msra.mxu0 0.0
  %155 = vmatprep.subr.mxu0 0.0
  %156 = vmatpush1.msra.mxu0 0.0
  %157 = vmatprep.subr.mxu0 0.0
  %158 = vmatpush1.msra.mxu0 0.0
  %159 = vmatprep.subr.mxu0 0.0
  %160 = vmatpush1.msra.mxu0 0.0
  %161 = vmatprep.subr.mxu0 0.0
  %162 = vmatpush1.msra.mxu0 0.0
  %163 = vmatprep.subr.mxu0 0.0
  %164 = vmatpush1.msra.mxu0 0.0
  %165 = vmatprep.subr.mxu0 0.0
  %166 = vmatpush1.msra.mxu0 0.0
  %167 = vmatprep.subr.mxu0 0.0
  %168 = vmatpush1.msra.mxu0 0.0
  %169 = vmatprep.subr.mxu0 0.0
  %170 = vmatpush1.msra.mxu0 0.0
  %171 = vmatprep.subr.mxu0 0.0
  %172 = vmatpush1.msra.mxu0 0.0
  %173 = vmatprep.subr.mxu0 0.0
  %174 = vmatpush1.msra.mxu0 0.0
  %175 = vmatprep.subr.mxu0 0.0
  %176 = vmatpush1.msra.mxu0 0.0
  %177 = vmatprep.subr.mxu0 0.0
  %178 = vmatpush1.msra.mxu0 0.0
  %179 = vmatprep.subr.mxu0 0.0
  %180 = vmatpush1.msra.mxu0 0.0
  %181 = vmatprep.subr.mxu0 0.0
  %182 = vmatpush1.msra.mxu0 0.0
  %183 = vmatprep.subr.mxu0 0.0
  %184 = vmatpush1.msra.mxu0 0.0
  %185 = vmatprep.subr.mxu0 0.0
  %186 = vmatpush1.msra.mxu0 0.0
  %187 = vmatprep.mubr.f32.mxu0 0.0
  %188 = vmatmul.mubr.f32.gmra.mrb[0].mxu0 %v118
  %v189 = vpop.f32.mrb[0].mxu0
  %v190 = vadd.f32 %v116, %v189
  %v191 = vpop.f32.mrb[0].mxu0
  %192 = vmatprep.mubr.f32.mxu0 0.0
  %193 = vmatmul.mubr.f32.gmra.mrb[0].mxu0 %v121
  %v194 = vpop.f32.mrb[0].mxu0
  %v195 = vadd.f32 %v116, %v194
  %v196 = vpop.f32.mrb[0].mxu0
  %197 = vdwg.mxu0
  %v198 = vld [vmem:[%s3] sm:$0xff]
  %v199 = vld [vmem:[%s3 + $0x8] sm:$0xff]
  %v200 = vld [vmem:[%s3 + $0x10] sm:$0xff]
  %v201 = vld [vmem:[%s3 + $0x18] sm:$0xff]
  %v202 = vld [vmem:[%s1 + $0x4] sm:$0x1]
  %v203 = vlaneseq
  %v204 = vshrl.u32 %v203, 7
  %v205 = vsub.s32 0, %v204
  %v206 = vrot.slane %v202, %v205
  %vm207 = vcmask 261120
  %v209 = vsel %vm207, %v190, 0
  %v212 = vsel %vm207, %v195, 0
  %214 = vmatprep.subr.mxu0 0.0
  %215 = vmatpush1.msra.mxu0 %v198
  %216 = vmatprep.subr.mxu0 0.0
  %217 = vmatpush1.msra.mxu0 %v199
  %218 = vmatprep.subr.mxu0 0.0
  %219 = vmatpush1.msra.mxu0 %v200
  %220 = vmatprep.subr.mxu0 0.0
  %221 = vmatpush1.msra.mxu0 %v201
  %222 = vmatprep.subr.mxu0 0.0
  %223 = vmatpush1.msra.mxu0 0.0
  %224 = vmatprep.subr.mxu0 0.0
  %225 = vmatpush1.msra.mxu0 0.0
  %226 = vmatprep.subr.mxu0 0.0
  %227 = vmatpush1.msra.mxu0 0.0
  %228 = vmatprep.subr.mxu0 0.0
  %229 = vmatpush1.msra.mxu0 0.0
  %230 = vmatprep.subr.mxu0 0.0
  %231 = vmatpush1.msra.mxu0 0.0
  %232 = vmatprep.subr.mxu0 0.0
  %233 = vmatpush1.msra.mxu0 0.0
  %234 = vmatprep.subr.mxu0 0.0
  %235 = vmatpush1.msra.mxu0 0.0
  %236 = vmatprep.subr.mxu0 0.0
  %237 = vmatpush1.msra.mxu0 0.0
  %238 = vmatprep.subr.mxu0 0.0
  %239 = vmatpush1.msra.mxu0 0.0
  %240 = vmatprep.subr.mxu0 0.0
  %241 = vmatpush1.msra.mxu0 0.0
  %242 = vmatprep.subr.mxu0 0.0
  %243 = vmatpush1.msra.mxu0 0.0
  %244 = vmatprep.subr.mxu0 0.0
  %245 = vmatpush1.msra.mxu0 0.0
  %246 = vmatprep.subr.mxu0 0.0
  %247 = vmatpush1.msra.mxu0 0.0
  %248 = vmatprep.subr.mxu0 0.0
  %249 = vmatpush1.msra.mxu0 0.0
  %250 = vmatprep.subr.mxu0 0.0
  %251 = vmatpush1.msra.mxu0 0.0
  %252 = vmatprep.subr.mxu0 0.0
  %253 = vmatpush1.msra.mxu0 0.0
  %254 = vmatprep.subr.mxu0 0.0
  %255 = vmatpush1.msra.mxu0 0.0
  %256 = vmatprep.subr.mxu0 0.0
  %257 = vmatpush1.msra.mxu0 0.0
  %258 = vmatprep.subr.mxu0 0.0
  %259 = vmatpush1.msra.mxu0 0.0
  %260 = vmatprep.subr.mxu0 0.0
  %261 = vmatpush1.msra.mxu0 0.0
  %262 = vmatprep.subr.mxu0 0.0
  %263 = vmatpush1.msra.mxu0 0.0
  %264 = vmatprep.subr.mxu0 0.0
  %265 = vmatpush1.msra.mxu0 0.0
  %266 = vmatprep.subr.mxu0 0.0
  %267 = vmatpush1.msra.mxu0 0.0
  %268 = vmatprep.subr.mxu0 0.0
  %269 = vmatpush1.msra.mxu0 0.0
  %270 = vmatprep.subr.mxu0 0.0
  %271 = vmatpush1.msra.mxu0 0.0
  %272 = vmatprep.subr.mxu0 0.0
  %273 = vmatpush1.msra.mxu0 0.0
  %274 = vmatprep.subr.mxu0 0.0
  %275 = vmatpush1.msra.mxu0 0.0
  %276 = vmatprep.subr.mxu0 0.0
  %277 = vmatpush1.msra.mxu0 0.0
  %278 = vmatprep.mubr.f32.mxu0 0.0
  %279 = vmatmul.mubr.f32.gmra.mrb[0].mxu0 %v209
  %v280 = vpop.f32.mrb[0].mxu0
  %v281 = vadd.f32 %v206, %v280
  %v282 = vpop.f32.mrb[0].mxu0
  %283 = vmatprep.mubr.f32.mxu0 0.0
  %284 = vmatmul.mubr.f32.gmra.mrb[0].mxu0 %v212
  %v285 = vpop.f32.mrb[0].mxu0
  %v286 = vadd.f32 %v206, %v285
  %v287 = vpop.f32.mrb[0].mxu0
  %288 = vdwg.mxu0
  %291 = vrot.lane.b32.xlu0 %v281, 120
  %v292 = vpop.permute.xlu0 %291
  %293 = vrot.lane.b32.xlu0 %v286, 120
  %v294 = vpop.permute.xlu0 %293
  %295 = vrot.lane.b32.xlu0 %v281, 112
  %v296 = vpop.permute.xlu0 %295
  %297 = vrot.lane.b32.xlu0 %v286, 112
  %v298 = vpop.permute.xlu0 %297
  %299 = vrot.lane.b32.xlu0 %v281, 104
  %v300 = vpop.permute.xlu0 %299
  %301 = vrot.lane.b32.xlu0 %v286, 104
  %v302 = vpop.permute.xlu0 %301
  %303 = vrot.lane.b32.xlu0 %v281, 96
  %v304 = vpop.permute.xlu0 %303
  %vm305 = vcmask 64512
  %v306 = vsel %vm305, %v281, 0
  %v308 = vsel %vm305, %v304, 0
  %310 = vmatprep.subr.mxu0 0.0
  %311 = vmatpush1.xpose.msra.mxu0 %v308
  %312 = vmatprep.subr.mxu0 0.0
  %313 = vmatpush1.xpose.msra.mxu0 0.0
  %314 = vmatprep.subr.mxu0 0.0
  %315 = vmatpush1.xpose.msra.mxu0 0.0
  %316 = vmatprep.subr.mxu0 0.0
  %317 = vmatpush1.xpose.msra.mxu0 0.0
  %318 = vmatprep.subr.mxu0 0.0
  %319 = vmatpush1.xpose.msra.mxu0 0.0
  %320 = vmatprep.subr.mxu0 0.0
  %321 = vmatpush1.xpose.msra.mxu0 0.0
  %322 = vmatprep.subr.mxu0 0.0
  %323 = vmatpush1.xpose.msra.mxu0 0.0
  %324 = vmatprep.subr.mxu0 0.0
  %325 = vmatpush1.xpose.msra.mxu0 0.0
  %326 = vmatprep.subr.mxu0 0.0
  %327 = vmatpush1.xpose.msra.mxu0 0.0
  %328 = vmatprep.subr.mxu0 0.0
  %329 = vmatpush1.xpose.msra.mxu0 0.0
  %330 = vmatprep.subr.mxu0 0.0
  %331 = vmatpush1.xpose.msra.mxu0 0.0
  %332 = vmatprep.subr.mxu0 0.0
  %333 = vmatpush1.xpose.msra.mxu0 0.0
  %334 = vmatprep.subr.mxu0 0.0
  %335 = vmatpush1.xpose.msra.mxu0 0.0
  %336 = vmatprep.subr.mxu0 0.0
  %337 = vmatpush1.xpose.msra.mxu0 0.0
  %338 = vmatprep.subr.mxu0 0.0
  %339 = vmatpush1.xpose.msra.mxu0 0.0
  %340 = vmatprep.subr.mxu0 0.0
  %341 = vmatpush1.xpose.msra.mxu0 0.0
  %342 = vmatprep.subr.mxu0 0.0
  %343 = vmatpush1.xpose.msra.mxu0 0.0
  %344 = vmatprep.subr.mxu0 0.0
  %345 = vmatpush1.xpose.msra.mxu0 0.0
  %346 = vmatprep.subr.mxu0 0.0
  %347 = vmatpush1.xpose.msra.mxu0 0.0
  %348 = vmatprep.subr.mxu0 0.0
  %349 = vmatpush1.xpose.msra.mxu0 0.0
  %350 = vmatprep.subr.mxu0 0.0
  %351 = vmatpush1.xpose.msra.mxu0 0.0
  %352 = vmatprep.subr.mxu0 0.0
  %353 = vmatpush1.xpose.msra.mxu0 0.0
  %354 = vmatprep.subr.mxu0 0.0
  %355 = vmatpush1.xpose.msra.mxu0 0.0
  %356 = vmatprep.subr.mxu0 0.0
  %357 = vmatpush1.xpose.msra.mxu0 0.0
  %358 = vmatprep.subr.mxu0 0.0
  %359 = vmatpush1.xpose.msra.mxu0 0.0
  %360 = vmatprep.subr.mxu0 0.0
  %361 = vmatpush1.xpose.msra.mxu0 0.0
  %362 = vmatprep.subr.mxu0 0.0
  %363 = vmatpush1.xpose.msra.mxu0 0.0
  %364 = vmatprep.subr.mxu0 0.0
  %365 = vmatpush1.xpose.msra.mxu0 0.0
  %366 = vmatprep.subr.mxu0 0.0
  %367 = vmatpush1.xpose.msra.mxu0 0.0
  %368 = vmatprep.subr.mxu0 0.0
  %369 = vmatpush1.xpose.msra.mxu0 0.0
  %370 = vmatprep.subr.mxu0 0.0
  %371 = vmatpush1.xpose.msra.mxu0 0.0
  %372 = vmatprep.subr.mxu0 0.0
  %373 = vmatpush1.xpose.msra.mxu0 0.0
  %374 = vmatprep.mubr.f32.mxu0 0.0
  %375 = vmatmul.mubr.f32.gmra.mrb[0].mxu0 %v306
  %v376 = vpop.f32.mrb[0].mxu0
  %v377 = vadd.f32 0.0, %v376
  %v378 = vpop.f32.mrb[0].mxu0
  %379 = vdwg.mxu0
  %380 = vrot.lane.b32.xlu0 %v286, 96
  %v381 = vpop.permute.xlu0 %380
  %v382 = vsel %vm305, %v286, 0
  %v384 = vsel %vm305, %v381, 0
  %386 = vmatprep.subr.mxu0 0.0
  %387 = vmatpush1.xpose.msra.mxu0 %v384
  %388 = vmatprep.subr.mxu0 0.0
  %389 = vmatpush1.xpose.msra.mxu0 0.0
  %390 = vmatprep.subr.mxu0 0.0
  %391 = vmatpush1.xpose.msra.mxu0 0.0
  %392 = vmatprep.subr.mxu0 0.0
  %393 = vmatpush1.xpose.msra.mxu0 0.0
  %394 = vmatprep.subr.mxu0 0.0
  %395 = vmatpush1.xpose.msra.mxu0 0.0
  %396 = vmatprep.subr.mxu0 0.0
  %397 = vmatpush1.xpose.msra.mxu0 0.0
  %398 = vmatprep.subr.mxu0 0.0
  %399 = vmatpush1.xpose.msra.mxu0 0.0
  %400 = vmatprep.subr.mxu0 0.0
  %401 = vmatpush1.xpose.msra.mxu0 0.0
  %402 = vmatprep.subr.mxu0 0.0
  %403 = vmatpush1.xpose.msra.mxu0 0.0
  %404 = vmatprep.subr.mxu0 0.0
  %405 = vmatpush1.xpose.msra.mxu0 0.0
  %406 = vmatprep.subr.mxu0 0.0
  %407 = vmatpush1.xpose.msra.mxu0 0.0
  %408 = vmatprep.subr.mxu0 0.0
  %409 = vmatpush1.xpose.msra.mxu0 0.0
  %410 = vmatprep.subr.mxu0 0.0
  %411 = vmatpush1.xpose.msra.mxu0 0.0
  %412 = vmatprep.subr.mxu0 0.0
  %413 = vmatpush1.xpose.msra.mxu0 0.0
  %414 = vmatprep.subr.mxu0 0.0
  %415 = vmatpush1.xpose.msra.mxu0 0.0
  %416 = vmatprep.subr.mxu0 0.0
  %417 = vmatpush1.xpose.msra.mxu0 0.0
  %418 = vmatprep.subr.mxu0 0.0
  %419 = vmatpush1.xpose.msra.mxu0 0.0
  %420 = vmatprep.subr.mxu0 0.0
  %421 = vmatpush1.xpose.msra.mxu0 0.0
  %422 = vmatprep.subr.mxu0 0.0
  %423 = vmatpush1.xpose.msra.mxu0 0.0
  %424 = vmatprep.subr.mxu0 0.0
  %425 = vmatpush1.xpose.msra.mxu0 0.0
  %426 = vmatprep.subr.mxu0 0.0
  %427 = vmatpush1.xpose.msra.mxu0 0.0
  %428 = vmatprep.subr.mxu0 0.0
  %429 = vmatpush1.xpose.msra.mxu0 0.0
  %430 = vmatprep.subr.mxu0 0.0
  %431 = vmatpush1.xpose.msra.mxu0 0.0
  %432 = vmatprep.subr.mxu0 0.0
  %433 = vmatpush1.xpose.msra.mxu0 0.0
  %434 = vmatprep.subr.mxu0 0.0
  %435 = vmatpush1.xpose.msra.mxu0 0.0
  %436 = vmatprep.subr.mxu0 0.0
  %437 = vmatpush1.xpose.msra.mxu0 0.0
  %438 = vmatprep.subr.mxu0 0.0
  %439 = vmatpush1.xpose.msra.mxu0 0.0
  %440 = vmatprep.subr.mxu0 0.0
  %441 = vmatpush1.xpose.msra.mxu0 0.0
  %442 = vmatprep.subr.mxu0 0.0
  %443 = vmatpush1.xpose.msra.mxu0 0.0
  %444 = vmatprep.subr.mxu0 0.0
  %445 = vmatpush1.xpose.msra.mxu0 0.0
  %446 = vmatprep.subr.mxu0 0.0
  %447 = vmatpush1.xpose.msra.mxu0 0.0
  %448 = vmatprep.subr.mxu0 0.0
  %449 = vmatpush1.xpose.msra.mxu0 0.0
  %450 = vmatprep.mubr.f32.mxu0 0.0
  %451 = vmatmul.mubr.f32.gmra.mrb[0].mxu0 %v382
  %v452 = vpop.f32.mrb[0].mxu0
  %v453 = vadd.f32 0.0, %v452
  %v454 = vpop.f32.mrb[0].mxu0
  %455 = vdwg.mxu0
  %456 = vrot.lane.b32.xlu0 %v292, 96
  %v457 = vpop.permute.xlu0 %456
  %v458 = vsel %vm305, %v292, 0
  %v460 = vsel %vm305, %v457, 0
  %462 = vmatprep.subr.mxu0 0.0
  %463 = vmatpush1.xpose.msra.mxu0 %v460
  %464 = vmatprep.subr.mxu0 0.0
  %465 = vmatpush1.xpose.msra.mxu0 0.0
  %466 = vmatprep.subr.mxu0 0.0
  %467 = vmatpush1.xpose.msra.mxu0 0.0
  %468 = vmatprep.subr.mxu0 0.0
  %469 = vmatpush1.xpose.msra.mxu0 0.0
  %470 = vmatprep.subr.mxu0 0.0
  %471 = vmatpush1.xpose.msra.mxu0 0.0
  %472 = vmatprep.subr.mxu0 0.0
  %473 = vmatpush1.xpose.msra.mxu0 0.0
  %474 = vmatprep.subr.mxu0 0.0
  %475 = vmatpush1.xpose.msra.mxu0 0.0
  %476 = vmatprep.subr.mxu0 0.0
  %477 = vmatpush1.xpose.msra.mxu0 0.0
  %478 = vmatprep.subr.mxu0 0.0
  %479 = vmatpush1.xpose.msra.mxu0 0.0
  %480 = vmatprep.subr.mxu0 0.0
  %481 = vmatpush1.xpose.msra.mxu0 0.0
  %482 = vmatprep.subr.mxu0 0.0
  %483 = vmatpush1.xpose.msra.mxu0 0.0
  %484 = vmatprep.subr.mxu0 0.0
  %485 = vmatpush1.xpose.msra.mxu0 0.0
  %486 = vmatprep.subr.mxu0 0.0
  %487 = vmatpush1.xpose.msra.mxu0 0.0
  %488 = vmatprep.subr.mxu0 0.0
  %489 = vmatpush1.xpose.msra.mxu0 0.0
  %490 = vmatprep.subr.mxu0 0.0
  %491 = vmatpush1.xpose.msra.mxu0 0.0
  %492 = vmatprep.subr.mxu0 0.0
  %493 = vmatpush1.xpose.msra.mxu0 0.0
  %494 = vmatprep.subr.mxu0 0.0
  %495 = vmatpush1.xpose.msra.mxu0 0.0
  %496 = vmatprep.subr.mxu0 0.0
  %497 = vmatpush1.xpose.msra.mxu0 0.0
  %498 = vmatprep.subr.mxu0 0.0
  %499 = vmatpush1.xpose.msra.mxu0 0.0
  %500 = vmatprep.subr.mxu0 0.0
  %501 = vmatpush1.xpose.msra.mxu0 0.0
  %502 = vmatprep.subr.mxu0 0.0
  %503 = vmatpush1.xpose.msra.mxu0 0.0
  %504 = vmatprep.subr.mxu0 0.0
  %505 = vmatpush1.xpose.msra.mxu0 0.0
  %506 = vmatprep.subr.mxu0 0.0
  %507 = vmatpush1.xpose.msra.mxu0 0.0
  %508 = vmatprep.subr.mxu0 0.0
  %509 = vmatpush1.xpose.msra.mxu0 0.0
  %510 = vmatprep.subr.mxu0 0.0
  %511 = vmatpush1.xpose.msra.mxu0 0.0
  %512 = vmatprep.subr.mxu0 0.0
  %513 = vmatpush1.xpose.msra.mxu0 0.0
  %514 = vmatprep.subr.mxu0 0.0
  %515 = vmatpush1.xpose.msra.mxu0 0.0
  %516 = vmatprep.subr.mxu0 0.0
  %517 = vmatpush1.xpose.msra.mxu0 0.0
  %518 = vmatprep.subr.mxu0 0.0
  %519 = vmatpush1.xpose.msra.mxu0 0.0
  %520 = vmatprep.subr.mxu0 0.0
  %521 = vmatpush1.xpose.msra.mxu0 0.0
  %522 = vmatprep.subr.mxu0 0.0
  %523 = vmatpush1.xpose.msra.mxu0 0.0
  %524 = vmatprep.subr.mxu0 0.0
  %525 = vmatpush1.xpose.msra.mxu0 0.0
  %526 = vmatprep.mubr.f32.mxu0 0.0
  %527 = vmatmul.mubr.f32.gmra.mrb[0].mxu0 %v458
  %v528 = vpop.f32.mrb[0].mxu0
  %v529 = vadd.f32 0.0, %v528
  %v530 = vpop.f32.mrb[0].mxu0
  %531 = vdwg.mxu0
  %532 = vrot.lane.b32.xlu0 %v294, 96
  %v533 = vpop.permute.xlu0 %532
  %v534 = vsel %vm305, %v294, 0
  %v536 = vsel %vm305, %v533, 0
  %538 = vmatprep.subr.mxu0 0.0
  %539 = vmatpush1.xpose.msra.mxu0 %v536
  %540 = vmatprep.subr.mxu0 0.0
  %541 = vmatpush1.xpose.msra.mxu0 0.0
  %542 = vmatprep.subr.mxu0 0.0
  %543 = vmatpush1.xpose.msra.mxu0 0.0
  %544 = vmatprep.subr.mxu0 0.0
  %545 = vmatpush1.xpose.msra.mxu0 0.0
  %546 = vmatprep.subr.mxu0 0.0
  %547 = vmatpush1.xpose.msra.mxu0 0.0
  %548 = vmatprep.subr.mxu0 0.0
  %549 = vmatpush1.xpose.msra.mxu0 0.0
  %550 = vmatprep.subr.mxu0 0.0
  %551 = vmatpush1.xpose.msra.mxu0 0.0
  %552 = vmatprep.subr.mxu0 0.0
  %553 = vmatpush1.xpose.msra.mxu0 0.0
  %554 = vmatprep.subr.mxu0 0.0
  %555 = vmatpush1.xpose.msra.mxu0 0.0
  %556 = vmatprep.subr.mxu0 0.0
  %557 = vmatpush1.xpose.msra.mxu0 0.0
  %558 = vmatprep.subr.mxu0 0.0
  %559 = vmatpush1.xpose.msra.mxu0 0.0
  %560 = vmatprep.subr.mxu0 0.0
  %561 = vmatpush1.xpose.msra.mxu0 0.0
  %562 = vmatprep.subr.mxu0 0.0
  %563 = vmatpush1.xpose.msra.mxu0 0.0
  %564 = vmatprep.subr.mxu0 0.0
  %565 = vmatpush1.xpose.msra.mxu0 0.0
  %566 = vmatprep.subr.mxu0 0.0
  %567 = vmatpush1.xpose.msra.mxu0 0.0
  %568 = vmatprep.subr.mxu0 0.0
  %569 = vmatpush1.xpose.msra.mxu0 0.0
  %570 = vmatprep.subr.mxu0 0.0
  %571 = vmatpush1.xpose.msra.mxu0 0.0
  %572 = vmatprep.subr.mxu0 0.0
  %573 = vmatpush1.xpose.msra.mxu0 0.0
  %574 = vmatprep.subr.mxu0 0.0
  %575 = vmatpush1.xpose.msra.mxu0 0.0
  %576 = vmatprep.subr.mxu0 0.0
  %577 = vmatpush1.xpose.msra.mxu0 0.0
  %578 = vmatprep.subr.mxu0 0.0
  %579 = vmatpush1.xpose.msra.mxu0 0.0
  %580 = vmatprep.subr.mxu0 0.0
  %581 = vmatpush1.xpose.msra.mxu0 0.0
  %582 = vmatprep.subr.mxu0 0.0
  %583 = vmatpush1.xpose.msra.mxu0 0.0
  %584 = vmatprep.subr.mxu0 0.0
  %585 = vmatpush1.xpose.msra.mxu0 0.0
  %586 = vmatprep.subr.mxu0 0.0
  %587 = vmatpush1.xpose.msra.mxu0 0.0
  %588 = vmatprep.subr.mxu0 0.0
  %589 = vmatpush1.xpose.msra.mxu0 0.0
  %590 = vmatprep.subr.mxu0 0.0
  %591 = vmatpush1.xpose.msra.mxu0 0.0
  %592 = vmatprep.subr.mxu0 0.0
  %593 = vmatpush1.xpose.msra.mxu0 0.0
  %594 = vmatprep.subr.mxu0 0.0
  %595 = vmatpush1.xpose.msra.mxu0 0.0
  %596 = vmatprep.subr.mxu0 0.0
  %597 = vmatpush1.xpose.msra.mxu0 0.0
  %598 = vmatprep.subr.mxu0 0.0
  %599 = vmatpush1.xpose.msra.mxu0 0.0
  %600 = vmatprep.subr.mxu0 0.0
  %601 = vmatpush1.xpose.msra.mxu0 0.0
  %602 = vmatprep.mubr.f32.mxu0 0.0
  %603 = vmatmul.mubr.f32.gmra.mrb[0].mxu0 %v534
  %v604 = vpop.f32.mrb[0].mxu0
  %v605 = vadd.f32 0.0, %v604
  %v606 = vpop.f32.mrb[0].mxu0
  %607 = vdwg.mxu0
  %608 = vrot.lane.b32.xlu0 %v296, 96
  %v609 = vpop.permute.xlu0 %608
  %v610 = vsel %vm305, %v296, 0
  %v612 = vsel %vm305, %v609, 0
  %614 = vmatprep.subr.mxu0 0.0
  %615 = vmatpush1.xpose.msra.mxu0 %v612
  %616 = vmatprep.subr.mxu0 0.0
  %617 = vmatpush1.xpose.msra.mxu0 0.0
  %618 = vmatprep.subr.mxu0 0.0
  %619 = vmatpush1.xpose.msra.mxu0 0.0
  %620 = vmatprep.subr.mxu0 0.0
  %621 = vmatpush1.xpose.msra.mxu0 0.0
  %622 = vmatprep.subr.mxu0 0.0
  %623 = vmatpush1.xpose.msra.mxu0 0.0
  %624 = vmatprep.subr.mxu0 0.0
  %625 = vmatpush1.xpose.msra.mxu0 0.0
  %626 = vmatprep.subr.mxu0 0.0
  %627 = vmatpush1.xpose.msra.mxu0 0.0
  %628 = vmatprep.subr.mxu0 0.0
  %629 = vmatpush1.xpose.msra.mxu0 0.0
  %630 = vmatprep.subr.mxu0 0.0
  %631 = vmatpush1.xpose.msra.mxu0 0.0
  %632 = vmatprep.subr.mxu0 0.0
  %633 = vmatpush1.xpose.msra.mxu0 0.0
  %634 = vmatprep.subr.mxu0 0.0
  %635 = vmatpush1.xpose.msra.mxu0 0.0
  %636 = vmatprep.subr.mxu0 0.0
  %637 = vmatpush1.xpose.msra.mxu0 0.0
  %638 = vmatprep.subr.mxu0 0.0
  %639 = vmatpush1.xpose.msra.mxu0 0.0
  %640 = vmatprep.subr.mxu0 0.0
  %641 = vmatpush1.xpose.msra.mxu0 0.0
  %642 = vmatprep.subr.mxu0 0.0
  %643 = vmatpush1.xpose.msra.mxu0 0.0
  %644 = vmatprep.subr.mxu0 0.0
  %645 = vmatpush1.xpose.msra.mxu0 0.0
  %646 = vmatprep.subr.mxu0 0.0
  %647 = vmatpush1.xpose.msra.mxu0 0.0
  %648 = vmatprep.subr.mxu0 0.0
  %649 = vmatpush1.xpose.msra.mxu0 0.0
  %650 = vmatprep.subr.mxu0 0.0
  %651 = vmatpush1.xpose.msra.mxu0 0.0
  %652 = vmatprep.subr.mxu0 0.0
  %653 = vmatpush1.xpose.msra.mxu0 0.0
  %654 = vmatprep.subr.mxu0 0.0
  %655 = vmatpush1.xpose.msra.mxu0 0.0
  %656 = vmatprep.subr.mxu0 0.0
  %657 = vmatpush1.xpose.msra.mxu0 0.0
  %658 = vmatprep.subr.mxu0 0.0
  %659 = vmatpush1.xpose.msra.mxu0 0.0
  %660 = vmatprep.subr.mxu0 0.0
  %661 = vmatpush1.xpose.msra.mxu0 0.0
  %662 = vmatprep.subr.mxu0 0.0
  %663 = vmatpush1.xpose.msra.mxu0 0.0
  %664 = vmatprep.subr.mxu0 0.0
  %665 = vmatpush1.xpose.msra.mxu0 0.0
  %666 = vmatprep.subr.mxu0 0.0
  %667 = vmatpush1.xpose.msra.mxu0 0.0
  %668 = vmatprep.subr.mxu0 0.0
  %669 = vmatpush1.xpose.msra.mxu0 0.0
  %670 = vmatprep.subr.mxu0 0.0
  %671 = vmatpush1.xpose.msra.mxu0 0.0
  %672 = vmatprep.subr.mxu0 0.0
  %673 = vmatpush1.xpose.msra.mxu0 0.0
  %674 = vmatprep.subr.mxu0 0.0
  %675 = vmatpush1.xpose.msra.mxu0 0.0
  %676 = vmatprep.subr.mxu0 0.0
  %677 = vmatpush1.xpose.msra.mxu0 0.0
  %678 = vmatprep.mubr.f32.mxu0 0.0
  %679 = vmatmul.mubr.f32.gmra.mrb[0].mxu0 %v610
  %v680 = vpop.f32.mrb[0].mxu0
  %v681 = vadd.f32 0.0, %v680
  %v682 = vpop.f32.mrb[0].mxu0
  %683 = vdwg.mxu0
  %684 = vrot.lane.b32.xlu0 %v298, 96
  %v685 = vpop.permute.xlu0 %684
  %v686 = vsel %vm305, %v298, 0
  %v688 = vsel %vm305, %v685, 0
  %690 = vmatprep.subr.mxu0 0.0
  %691 = vmatpush1.xpose.msra.mxu0 %v688
  %692 = vmatprep.subr.mxu0 0.0
  %693 = vmatpush1.xpose.msra.mxu0 0.0
  %694 = vmatprep.subr.mxu0 0.0
  %695 = vmatpush1.xpose.msra.mxu0 0.0
  %696 = vmatprep.subr.mxu0 0.0
  %697 = vmatpush1.xpose.msra.mxu0 0.0
  %698 = vmatprep.subr.mxu0 0.0
  %699 = vmatpush1.xpose.msra.mxu0 0.0
  %700 = vmatprep.subr.mxu0 0.0
  %701 = vmatpush1.xpose.msra.mxu0 0.0
  %702 = vmatprep.subr.mxu0 0.0
  %703 = vmatpush1.xpose.msra.mxu0 0.0
  %704 = vmatprep.subr.mxu0 0.0
  %705 = vmatpush1.xpose.msra.mxu0 0.0
  %706 = vmatprep.subr.mxu0 0.0
  %707 = vmatpush1.xpose.msra.mxu0 0.0
  %708 = vmatprep.subr.mxu0 0.0
  %709 = vmatpush1.xpose.msra.mxu0 0.0
  %710 = vmatprep.subr.mxu0 0.0
  %711 = vmatpush1.xpose.msra.mxu0 0.0
  %712 = vmatprep.subr.mxu0 0.0
  %713 = vmatpush1.xpose.msra.mxu0 0.0
  %714 = vmatprep.subr.mxu0 0.0
  %715 = vmatpush1.xpose.msra.mxu0 0.0
  %716 = vmatprep.subr.mxu0 0.0
  %717 = vmatpush1.xpose.msra.mxu0 0.0
  %718 = vmatprep.subr.mxu0 0.0
  %719 = vmatpush1.xpose.msra.mxu0 0.0
  %720 = vmatprep.subr.mxu0 0.0
  %721 = vmatpush1.xpose.msra.mxu0 0.0
  %722 = vmatprep.subr.mxu0 0.0
  %723 = vmatpush1.xpose.msra.mxu0 0.0
  %724 = vmatprep.subr.mxu0 0.0
  %725 = vmatpush1.xpose.msra.mxu0 0.0
  %726 = vmatprep.subr.mxu0 0.0
  %727 = vmatpush1.xpose.msra.mxu0 0.0
  %728 = vmatprep.subr.mxu0 0.0
  %729 = vmatpush1.xpose.msra.mxu0 0.0
  %730 = vmatprep.subr.mxu0 0.0
  %731 = vmatpush1.xpose.msra.mxu0 0.0
  %732 = vmatprep.subr.mxu0 0.0
  %733 = vmatpush1.xpose.msra.mxu0 0.0
  %734 = vmatprep.subr.mxu0 0.0
  %735 = vmatpush1.xpose.msra.mxu0 0.0
  %736 = vmatprep.subr.mxu0 0.0
  %737 = vmatpush1.xpose.msra.mxu0 0.0
  %738 = vmatprep.subr.mxu0 0.0
  %739 = vmatpush1.xpose.msra.mxu0 0.0
  %740 = vmatprep.subr.mxu0 0.0
  %741 = vmatpush1.xpose.msra.mxu0 0.0
  %742 = vmatprep.subr.mxu0 0.0
  %743 = vmatpush1.xpose.msra.mxu0 0.0
  %744 = vmatprep.subr.mxu0 0.0
  %745 = vmatpush1.xpose.msra.mxu0 0.0
  %746 = vmatprep.subr.mxu0 0.0
  %747 = vmatpush1.xpose.msra.mxu0 0.0
  %748 = vmatprep.subr.mxu0 0.0
  %749 = vmatpush1.xpose.msra.mxu0 0.0
  %750 = vmatprep.subr.mxu0 0.0
  %751 = vmatpush1.xpose.msra.mxu0 0.0
  %752 = vmatprep.subr.mxu0 0.0
  %753 = vmatpush1.xpose.msra.mxu0 0.0
  %754 = vmatprep.mubr.f32.mxu0 0.0
  %755 = vmatmul.mubr.f32.gmra.mrb[0].mxu0 %v686
  %v756 = vpop.f32.mrb[0].mxu0
  %v757 = vadd.f32 0.0, %v756
  %v758 = vpop.f32.mrb[0].mxu0
  %759 = vdwg.mxu0
  %760 = vrot.lane.b32.xlu0 %v300, 96
  %v761 = vpop.permute.xlu0 %760
  %v762 = vsel %vm305, %v300, 0
  %v764 = vsel %vm305, %v761, 0
  %766 = vmatprep.subr.mxu0 0.0
  %767 = vmatpush1.xpose.msra.mxu0 %v764
  %768 = vmatprep.subr.mxu0 0.0
  %769 = vmatpush1.xpose.msra.mxu0 0.0
  %770 = vmatprep.subr.mxu0 0.0
  %771 = vmatpush1.xpose.msra.mxu0 0.0
  %772 = vmatprep.subr.mxu0 0.0
  %773 = vmatpush1.xpose.msra.mxu0 0.0
  %774 = vmatprep.subr.mxu0 0.0
  %775 = vmatpush1.xpose.msra.mxu0 0.0
  %776 = vmatprep.subr.mxu0 0.0
  %777 = vmatpush1.xpose.msra.mxu0 0.0
  %778 = vmatprep.subr.mxu0 0.0
  %779 = vmatpush1.xpose.msra.mxu0 0.0
  %780 = vmatprep.subr.mxu0 0.0
  %781 = vmatpush1.xpose.msra.mxu0 0.0
  %782 = vmatprep.subr.mxu0 0.0
  %783 = vmatpush1.xpose.msra.mxu0 0.0
  %784 = vmatprep.subr.mxu0 0.0
  %785 = vmatpush1.xpose.msra.mxu0 0.0
  %786 = vmatprep.subr.mxu0 0.0
  %787 = vmatpush1.xpose.msra.mxu0 0.0
  %788 = vmatprep.subr.mxu0 0.0
  %789 = vmatpush1.xpose.msra.mxu0 0.0
  %790 = vmatprep.subr.mxu0 0.0
  %791 = vmatpush1.xpose.msra.mxu0 0.0
  %792 = vmatprep.subr.mxu0 0.0
  %793 = vmatpush1.xpose.msra.mxu0 0.0
  %794 = vmatprep.subr.mxu0 0.0
  %795 = vmatpush1.xpose.msra.mxu0 0.0
  %796 = vmatprep.subr.mxu0 0.0
  %797 = vmatpush1.xpose.msra.mxu0 0.0
  %798 = vmatprep.subr.mxu0 0.0
  %799 = vmatpush1.xpose.msra.mxu0 0.0
  %800 = vmatprep.subr.mxu0 0.0
  %801 = vmatpush1.xpose.msra.mxu0 0.0
  %802 = vmatprep.subr.mxu0 0.0
  %803 = vmatpush1.xpose.msra.mxu0 0.0
  %804 = vmatprep.subr.mxu0 0.0
  %805 = vmatpush1.xpose.msra.mxu0 0.0
  %806 = vmatprep.subr.mxu0 0.0
  %807 = vmatpush1.xpose.msra.mxu0 0.0
  %808 = vmatprep.subr.mxu0 0.0
  %809 = vmatpush1.xpose.msra.mxu0 0.0
  %810 = vmatprep.subr.mxu0 0.0
  %811 = vmatpush1.xpose.msra.mxu0 0.0
  %812 = vmatprep.subr.mxu0 0.0
  %813 = vmatpush1.xpose.msra.mxu0 0.0
  %814 = vmatprep.subr.mxu0 0.0
  %815 = vmatpush1.xpose.msra.mxu0 0.0
  %816 = vmatprep.subr.mxu0 0.0
  %817 = vmatpush1.xpose.msra.mxu0 0.0
  %818 = vmatprep.subr.mxu0 0.0
  %819 = vmatpush1.xpose.msra.mxu0 0.0
  %820 = vmatprep.subr.mxu0 0.0
  %821 = vmatpush1.xpose.msra.mxu0 0.0
  %822 = vmatprep.subr.mxu0 0.0
  %823 = vmatpush1.xpose.msra.mxu0 0.0
  %824 = vmatprep.subr.mxu0 0.0
  %825 = vmatpush1.xpose.msra.mxu0 0.0
  %826 = vmatprep.subr.mxu0 0.0
  %827 = vmatpush1.xpose.msra.mxu0 0.0
  %828 = vmatprep.subr.mxu0 0.0
  %829 = vmatpush1.xpose.msra.mxu0 0.0
  %830 = vmatprep.mubr.f32.mxu0 0.0
  %831 = vmatmul.mubr.f32.gmra.mrb[0].mxu0 %v762
  %v832 = vpop.f32.mrb[0].mxu0
  %v833 = vadd.f32 0.0, %v832
  %v834 = vpop.f32.mrb[0].mxu0
  %835 = vdwg.mxu0
  %836 = vrot.lane.b32.xlu0 %v302, 96
  %v837 = vpop.permute.xlu0 %836
  %v838 = vsel %vm305, %v302, 0
  %v840 = vsel %vm305, %v837, 0
  %842 = vmatprep.subr.mxu0 0.0
  %843 = vmatpush1.xpose.msra.mxu0 %v840
  %844 = vmatprep.subr.mxu0 0.0
  %845 = vmatpush1.xpose.msra.mxu0 0.0
  %846 = vmatprep.subr.mxu0 0.0
  %847 = vmatpush1.xpose.msra.mxu0 0.0
  %848 = vmatprep.subr.mxu0 0.0
  %849 = vmatpush1.xpose.msra.mxu0 0.0
  %850 = vmatprep.subr.mxu0 0.0
  %851 = vmatpush1.xpose.msra.mxu0 0.0
  %852 = vmatprep.subr.mxu0 0.0
  %853 = vmatpush1.xpose.msra.mxu0 0.0
  %854 = vmatprep.subr.mxu0 0.0
  %855 = vmatpush1.xpose.msra.mxu0 0.0
  %856 = vmatprep.subr.mxu0 0.0
  %857 = vmatpush1.xpose.msra.mxu0 0.0
  %858 = vmatprep.subr.mxu0 0.0
  %859 = vmatpush1.xpose.msra.mxu0 0.0
  %860 = vmatprep.subr.mxu0 0.0
  %861 = vmatpush1.xpose.msra.mxu0 0.0
  %862 = vmatprep.subr.mxu0 0.0
  %863 = vmatpush1.xpose.msra.mxu0 0.0
  %864 = vmatprep.subr.mxu0 0.0
  %865 = vmatpush1.xpose.msra.mxu0 0.0
  %866 = vmatprep.subr.mxu0 0.0
  %867 = vmatpush1.xpose.msra.mxu0 0.0
  %868 = vmatprep.subr.mxu0 0.0
  %869 = vmatpush1.xpose.msra.mxu0 0.0
  %870 = vmatprep.subr.mxu0 0.0
  %871 = vmatpush1.xpose.msra.mxu0 0.0
  %872 = vmatprep.subr.mxu0 0.0
  %873 = vmatpush1.xpose.msra.mxu0 0.0
  %874 = vmatprep.subr.mxu0 0.0
  %875 = vmatpush1.xpose.msra.mxu0 0.0
  %876 = vmatprep.subr.mxu0 0.0
  %877 = vmatpush1.xpose.msra.mxu0 0.0
  %878 = vmatprep.subr.mxu0 0.0
  %879 = vmatpush1.xpose.msra.mxu0 0.0
  %880 = vmatprep.subr.mxu0 0.0
  %881 = vmatpush1.xpose.msra.mxu0 0.0
  %882 = vmatprep.subr.mxu0 0.0
  %883 = vmatpush1.xpose.msra.mxu0 0.0
  %884 = vmatprep.subr.mxu0 0.0
  %885 = vmatpush1.xpose.msra.mxu0 0.0
  %886 = vmatprep.subr.mxu0 0.0
  %887 = vmatpush1.xpose.msra.mxu0 0.0
  %888 = vmatprep.subr.mxu0 0.0
  %889 = vmatpush1.xpose.msra.mxu0 0.0
  %890 = vmatprep.subr.mxu0 0.0
  %891 = vmatpush1.xpose.msra.mxu0 0.0
  %892 = vmatprep.subr.mxu0 0.0
  %893 = vmatpush1.xpose.msra.mxu0 0.0
  %894 = vmatprep.subr.mxu0 0.0
  %895 = vmatpush1.xpose.msra.mxu0 0.0
  %896 = vmatprep.subr.mxu0 0.0
  %897 = vmatpush1.xpose.msra.mxu0 0.0
  %898 = vmatprep.subr.mxu0 0.0
  %899 = vmatpush1.xpose.msra.mxu0 0.0
  %900 = vmatprep.subr.mxu0 0.0
  %901 = vmatpush1.xpose.msra.mxu0 0.0
  %902 = vmatprep.subr.mxu0 0.0
  %903 = vmatpush1.xpose.msra.mxu0 0.0
  %904 = vmatprep.subr.mxu0 0.0
  %905 = vmatpush1.xpose.msra.mxu0 0.0
  %906 = vmatprep.mubr.f32.mxu0 0.0
  %907 = vmatmul.mubr.f32.gmra.mrb[0].mxu0 %v838
  %v908 = vpop.f32.mrb[0].mxu0
  %v909 = vadd.f32 0.0, %v908
  %v910 = vpop.f32.mrb[0].mxu0
  %911 = vdwg.mxu0
  %v912 = vmul.f32 %v377, 0.35355338
  %v913 = vmul.f32 %v453, 0.35355338
  %v914 = vmul.f32 %v529, 0.35355338
  %v915 = vmul.f32 %v605, 0.35355338
  %v916 = vmul.f32 %v681, 0.35355338
  %v917 = vmul.f32 %v757, 0.35355338
  %v918 = vmul.f32 %v833, 0.35355338
  %v919 = vmul.f32 %v909, 0.35355338
  %v920 = vsel %vm305, %v912, -inf
  %921 = vmax.xlane.f32.xlu0 %v920
  %v922 = vpop.xlane.xlu0 %921
  %v923 = vsel %vm305, %v913, -inf
  %924 = vmax.xlane.f32.xlu0 %v923
  %v925 = vpop.xlane.xlu0 %924
  %v926 = vsel %vm305, %v914, -inf
  %927 = vmax.xlane.f32.xlu0 %v926
  %v928 = vpop.xlane.xlu0 %927
  %v929 = vsel %vm305, %v915, -inf
  %930 = vmax.xlane.f32.xlu0 %v929
  %v931 = vpop.xlane.xlu0 %930
  %v932 = vsel %vm305, %v916, -inf
  %933 = vmax.xlane.f32.xlu0 %v932
  %v934 = vpop.xlane.xlu0 %933
  %v935 = vsel %vm305, %v917, -inf
  %936 = vmax.xlane.f32.xlu0 %v935
  %v937 = vpop.xlane.xlu0 %936
  %v938 = vsel %vm305, %v918, -inf
  %939 = vmax.xlane.f32.xlu0 %v938
  %v940 = vpop.xlane.xlu0 %939
  %v941 = vsel %vm305, %v919, -inf
  %942 = vmax.xlane.f32.xlu0 %v941
  %v943 = vpop.xlane.xlu0 %942
  %v944 = vsub.f32 %v912, %v922
  %v945 = vsub.f32 %v913, %v925
  %v946 = vsub.f32 %v914, %v928
  %v947 = vsub.f32 %v915, %v931
  %v948 = vsub.f32 %v916, %v934
  %v949 = vsub.f32 %v917, %v937
  %v950 = vsub.f32 %v918, %v940
  %v951 = vsub.f32 %v919, %v943
  %v952 = vmul.f32 %v944, 1.442695
  %v953 = vpow.pop %v952
  %v954 = vmul.f32 %v945, 1.442695
  %v955 = vpow.pop %v954
  %v956 = vmul.f32 %v946, 1.442695
  %v957 = vpow.pop %v956
  %v958 = vmul.f32 %v947, 1.442695
  %v959 = vpow.pop %v958
  %v960 = vmul.f32 %v948, 1.442695
  %v961 = vpow.pop %v960
  %v962 = vmul.f32 %v949, 1.442695
  %v963 = vpow.pop %v962
  %v964 = vmul.f32 %v950, 1.442695
  %v965 = vpow.pop %v964
  %v966 = vmul.f32 %v951, 1.442695
  %v967 = vpow.pop %v966
  %v968 = vsel %vm305, %v953, 0.0
  %969 = vadd.xlane.f32.xlu0 %v968
  %v970 = vpop.xlane.xlu0 %969
  %v971 = vsel %vm305, %v955, 0.0
  %972 = vadd.xlane.f32.xlu0 %v971
  %v973 = vpop.xlane.xlu0 %972
  %v974 = vsel %vm305, %v957, 0.0
  %975 = vadd.xlane.f32.xlu0 %v974
  %v976 = vpop.xlane.xlu0 %975
  %v977 = vsel %vm305, %v959, 0.0
  %978 = vadd.xlane.f32.xlu0 %v977
  %v979 = vpop.xlane.xlu0 %978
  %v980 = vsel %vm305, %v961, 0.0
  %981 = vadd.xlane.f32.xlu0 %v980
  %v982 = vpop.xlane.xlu0 %981
  %v983 = vsel %vm305, %v963, 0.0
  %984 = vadd.xlane.f32.xlu0 %v983
  %v985 = vpop.xlane.xlu0 %984
  %v986 = vsel %vm305, %v965, 0.0
  %987 = vadd.xlane.f32.xlu0 %v986
  %v988 = vpop.xlane.xlu0 %987
  %v989 = vsel %vm305, %v967, 0.0
  %990 = vadd.xlane.f32.xlu0 %v989
  %v991 = vpop.xlane.xlu0 %990
  %v992 = vrcp.pop %v970
  %v993 = vrcp.pop %v973
  %v994 = vrcp.pop %v976
  %v995 = vrcp.pop %v979
  %v996 = vrcp.pop %v982
  %v997 = vrcp.pop %v985
  %v998 = vrcp.pop %v988
  %v999 = vrcp.pop %v991
  %v1000 = vmul.f32 %v953, %v992
  %v1001 = vmul.f32 %v955, %v993
  %v1002 = vmul.f32 %v957, %v994
  %v1003 = vmul.f32 %v959, %v995
  %v1004 = vmul.f32 %v961, %v996
  %v1005 = vmul.f32 %v963, %v997
  %v1006 = vmul.f32 %v965, %v998
  %v1007 = vmul.f32 %v967, %v999
  %1008 = vrot.lane.b32.xlu0 %v281, 64
  %v1009 = vpop.permute.xlu0 %1008
  %v1012 = vsel %vm305, %v1000, 0
  %1014 = vmatprep.subr.mxu0 0.0
  %1015 = vmatpush1.msra.mxu0 %v1009
  %1016 = vmatprep.subr.mxu0 0.0
  %1017 = vmatpush1.msra.mxu0 0.0
  %1018 = vmatprep.subr.mxu0 0.0
  %1019 = vmatpush1.msra.mxu0 0.0
  %1020 = vmatprep.subr.mxu0 0.0
  %1021 = vmatpush1.msra.mxu0 0.0
  %1022 = vmatprep.subr.mxu0 0.0
  %1023 = vmatpush1.msra.mxu0 0.0
  %1024 = vmatprep.subr.mxu0 0.0
  %1025 = vmatpush1.msra.mxu0 0.0
  %1026 = vmatprep.subr.mxu0 0.0
  %1027 = vmatpush1.msra.mxu0 0.0
  %1028 = vmatprep.subr.mxu0 0.0
  %1029 = vmatpush1.msra.mxu0 0.0
  %1030 = vmatprep.subr.mxu0 0.0
  %1031 = vmatpush1.msra.mxu0 0.0
  %1032 = vmatprep.subr.mxu0 0.0
  %1033 = vmatpush1.msra.mxu0 0.0
  %1034 = vmatprep.subr.mxu0 0.0
  %1035 = vmatpush1.msra.mxu0 0.0
  %1036 = vmatprep.subr.mxu0 0.0
  %1037 = vmatpush1.msra.mxu0 0.0
  %1038 = vmatprep.subr.mxu0 0.0
  %1039 = vmatpush1.msra.mxu0 0.0
  %1040 = vmatprep.subr.mxu0 0.0
  %1041 = vmatpush1.msra.mxu0 0.0
  %1042 = vmatprep.subr.mxu0 0.0
  %1043 = vmatpush1.msra.mxu0 0.0
  %1044 = vmatprep.subr.mxu0 0.0
  %1045 = vmatpush1.msra.mxu0 0.0
  %1046 = vmatprep.subr.mxu0 0.0
  %1047 = vmatpush1.msra.mxu0 0.0
  %1048 = vmatprep.subr.mxu0 0.0
  %1049 = vmatpush1.msra.mxu0 0.0
  %1050 = vmatprep.subr.mxu0 0.0
  %1051 = vmatpush1.msra.mxu0 0.0
  %1052 = vmatprep.subr.mxu0 0.0
  %1053 = vmatpush1.msra.mxu0 0.0
  %1054 = vmatprep.subr.mxu0 0.0
  %1055 = vmatpush1.msra.mxu0 0.0
  %1056 = vmatprep.subr.mxu0 0.0
  %1057 = vmatpush1.msra.mxu0 0.0
  %1058 = vmatprep.subr.mxu0 0.0
  %1059 = vmatpush1.msra.mxu0 0.0
  %1060 = vmatprep.subr.mxu0 0.0
  %1061 = vmatpush1.msra.mxu0 0.0
  %1062 = vmatprep.subr.mxu0 0.0
  %1063 = vmatpush1.msra.mxu0 0.0
  %1064 = vmatprep.subr.mxu0 0.0
  %1065 = vmatpush1.msra.mxu0 0.0
  %1066 = vmatprep.subr.mxu0 0.0
  %1067 = vmatpush1.msra.mxu0 0.0
  %1068 = vmatprep.subr.mxu0 0.0
  %1069 = vmatpush1.msra.mxu0 0.0
  %1070 = vmatprep.subr.mxu0 0.0
  %1071 = vmatpush1.msra.mxu0 0.0
  %1072 = vmatprep.subr.mxu0 0.0
  %1073 = vmatpush1.msra.mxu0 0.0
  %1074 = vmatprep.subr.mxu0 0.0
  %1075 = vmatpush1.msra.mxu0 0.0
  %1076 = vmatprep.subr.mxu0 0.0
  %1077 = vmatpush1.msra.mxu0 0.0
  %1078 = vmatprep.mubr.f32.mxu0 0.0
  %1079 = vmatmul.mubr.f32.gmra.mrb[0].mxu0 %v1012
  %v1080 = vpop.f32.mrb[0].mxu0
  %v1081 = vadd.f32 0.0, %v1080
  %v1082 = vpop.f32.mrb[0].mxu0
  %1083 = vdwg.mxu0
  %1084 = vrot.lane.b32.xlu0 %v286, 64
  %v1085 = vpop.permute.xlu0 %1084
  %v1088 = vsel %vm305, %v1001, 0
  %1090 = vmatprep.subr.mxu0 0.0
  %1091 = vmatpush1.msra.mxu0 %v1085
  %1092 = vmatprep.subr.mxu0 0.0
  %1093 = vmatpush1.msra.mxu0 0.0
  %1094 = vmatprep.subr.mxu0 0.0
  %1095 = vmatpush1.msra.mxu0 0.0
  %1096 = vmatprep.subr.mxu0 0.0
  %1097 = vmatpush1.msra.mxu0 0.0
  %1098 = vmatprep.subr.mxu0 0.0
  %1099 = vmatpush1.msra.mxu0 0.0
  %1100 = vmatprep.subr.mxu0 0.0
  %1101 = vmatpush1.msra.mxu0 0.0
  %1102 = vmatprep.subr.mxu0 0.0
  %1103 = vmatpush1.msra.mxu0 0.0
  %1104 = vmatprep.subr.mxu0 0.0
  %1105 = vmatpush1.msra.mxu0 0.0
  %1106 = vmatprep.subr.mxu0 0.0
  %1107 = vmatpush1.msra.mxu0 0.0
  %1108 = vmatprep.subr.mxu0 0.0
  %1109 = vmatpush1.msra.mxu0 0.0
  %1110 = vmatprep.subr.mxu0 0.0
  %1111 = vmatpush1.msra.mxu0 0.0
  %1112 = vmatprep.subr.mxu0 0.0
  %1113 = vmatpush1.msra.mxu0 0.0
  %1114 = vmatprep.subr.mxu0 0.0
  %1115 = vmatpush1.msra.mxu0 0.0
  %1116 = vmatprep.subr.mxu0 0.0
  %1117 = vmatpush1.msra.mxu0 0.0
  %1118 = vmatprep.subr.mxu0 0.0
  %1119 = vmatpush1.msra.mxu0 0.0
  %1120 = vmatprep.subr.mxu0 0.0
  %1121 = vmatpush1.msra.mxu0 0.0
  %1122 = vmatprep.subr.mxu0 0.0
  %1123 = vmatpush1.msra.mxu0 0.0
  %1124 = vmatprep.subr.mxu0 0.0
  %1125 = vmatpush1.msra.mxu0 0.0
  %1126 = vmatprep.subr.mxu0 0.0
  %1127 = vmatpush1.msra.mxu0 0.0
  %1128 = vmatprep.subr.mxu0 0.0
  %1129 = vmatpush1.msra.mxu0 0.0
  %1130 = vmatprep.subr.mxu0 0.0
  %1131 = vmatpush1.msra.mxu0 0.0
  %1132 = vmatprep.subr.mxu0 0.0
  %1133 = vmatpush1.msra.mxu0 0.0
  %1134 = vmatprep.subr.mxu0 0.0
  %1135 = vmatpush1.msra.mxu0 0.0
  %1136 = vmatprep.subr.mxu0 0.0
  %1137 = vmatpush1.msra.mxu0 0.0
  %1138 = vmatprep.subr.mxu0 0.0
  %1139 = vmatpush1.msra.mxu0 0.0
  %1140 = vmatprep.subr.mxu0 0.0
  %1141 = vmatpush1.msra.mxu0 0.0
  %1142 = vmatprep.subr.mxu0 0.0
  %1143 = vmatpush1.msra.mxu0 0.0
  %1144 = vmatprep.subr.mxu0 0.0
  %1145 = vmatpush1.msra.mxu0 0.0
  %1146 = vmatprep.subr.mxu0 0.0
  %1147 = vmatpush1.msra.mxu0 0.0
  %1148 = vmatprep.subr.mxu0 0.0
  %1149 = vmatpush1.msra.mxu0 0.0
  %1150 = vmatprep.subr.mxu0 0.0
  %1151 = vmatpush1.msra.mxu0 0.0
  %1152 = vmatprep.subr.mxu0 0.0
  %1153 = vmatpush1.msra.mxu0 0.0
  %1154 = vmatprep.mubr.f32.mxu0 0.0
  %1155 = vmatmul.mubr.f32.gmra.mrb[0].mxu0 %v1088
  %v1156 = vpop.f32.mrb[0].mxu0
  %v1157 = vadd.f32 0.0, %v1156
  %v1158 = vpop.f32.mrb[0].mxu0
  %1159 = vdwg.mxu0
  %1160 = vrot.lane.b32.xlu0 %v292, 64
  %v1161 = vpop.permute.xlu0 %1160
  %v1164 = vsel %vm305, %v1002, 0
  %1166 = vmatprep.subr.mxu0 0.0
  %1167 = vmatpush1.msra.mxu0 %v1161
  %1168 = vmatprep.subr.mxu0 0.0
  %1169 = vmatpush1.msra.mxu0 0.0
  %1170 = vmatprep.subr.mxu0 0.0
  %1171 = vmatpush1.msra.mxu0 0.0
  %1172 = vmatprep.subr.mxu0 0.0
  %1173 = vmatpush1.msra.mxu0 0.0
  %1174 = vmatprep.subr.mxu0 0.0
  %1175 = vmatpush1.msra.mxu0 0.0
  %1176 = vmatprep.subr.mxu0 0.0
  %1177 = vmatpush1.msra.mxu0 0.0
  %1178 = vmatprep.subr.mxu0 0.0
  %1179 = vmatpush1.msra.mxu0 0.0
  %1180 = vmatprep.subr.mxu0 0.0
  %1181 = vmatpush1.msra.mxu0 0.0
  %1182 = vmatprep.subr.mxu0 0.0
  %1183 = vmatpush1.msra.mxu0 0.0
  %1184 = vmatprep.subr.mxu0 0.0
  %1185 = vmatpush1.msra.mxu0 0.0
  %1186 = vmatprep.subr.mxu0 0.0
  %1187 = vmatpush1.msra.mxu0 0.0
  %1188 = vmatprep.subr.mxu0 0.0
  %1189 = vmatpush1.msra.mxu0 0.0
  %1190 = vmatprep.subr.mxu0 0.0
  %1191 = vmatpush1.msra.mxu0 0.0
  %1192 = vmatprep.subr.mxu0 0.0
  %1193 = vmatpush1.msra.mxu0 0.0
  %1194 = vmatprep.subr.mxu0 0.0
  %1195 = vmatpush1.msra.mxu0 0.0
  %1196 = vmatprep.subr.mxu0 0.0
  %1197 = vmatpush1.msra.mxu0 0.0
  %1198 = vmatprep.subr.mxu0 0.0
  %1199 = vmatpush1.msra.mxu0 0.0
  %1200 = vmatprep.subr.mxu0 0.0
  %1201 = vmatpush1.msra.mxu0 0.0
  %1202 = vmatprep.subr.mxu0 0.0
  %1203 = vmatpush1.msra.mxu0 0.0
  %1204 = vmatprep.subr.mxu0 0.0
  %1205 = vmatpush1.msra.mxu0 0.0
  %1206 = vmatprep.subr.mxu0 0.0
  %1207 = vmatpush1.msra.mxu0 0.0
  %1208 = vmatprep.subr.mxu0 0.0
  %1209 = vmatpush1.msra.mxu0 0.0
  %1210 = vmatprep.subr.mxu0 0.0
  %1211 = vmatpush1.msra.mxu0 0.0
  %1212 = vmatprep.subr.mxu0 0.0
  %1213 = vmatpush1.msra.mxu0 0.0
  %1214 = vmatprep.subr.mxu0 0.0
  %1215 = vmatpush1.msra.mxu0 0.0
  %1216 = vmatprep.subr.mxu0 0.0
  %1217 = vmatpush1.msra.mxu0 0.0
  %1218 = vmatprep.subr.mxu0 0.0
  %1219 = vmatpush1.msra.mxu0 0.0
  %1220 = vmatprep.subr.mxu0 0.0
  %1221 = vmatpush1.msra.mxu0 0.0
  %1222 = vmatprep.subr.mxu0 0.0
  %1223 = vmatpush1.msra.mxu0 0.0
  %1224 = vmatprep.subr.mxu0 0.0
  %1225 = vmatpush1.msra.mxu0 0.0
  %1226 = vmatprep.subr.mxu0 0.0
  %1227 = vmatpush1.msra.mxu0 0.0
  %1228 = vmatprep.subr.mxu0 0.0
  %1229 = vmatpush1.msra.mxu0 0.0
  %1230 = vmatprep.mubr.f32.mxu0 0.0
  %1231 = vmatmul.mubr.f32.gmra.mrb[0].mxu0 %v1164
  %v1232 = vpop.f32.mrb[0].mxu0
  %v1233 = vadd.f32 0.0, %v1232
  %v1234 = vpop.f32.mrb[0].mxu0
  %1235 = vdwg.mxu0
  %1236 = vrot.lane.b32.xlu0 %v294, 64
  %v1237 = vpop.permute.xlu0 %1236
  %v1240 = vsel %vm305, %v1003, 0
  %1242 = vmatprep.subr.mxu0 0.0
  %1243 = vmatpush1.msra.mxu0 %v1237
  %1244 = vmatprep.subr.mxu0 0.0
  %1245 = vmatpush1.msra.mxu0 0.0
  %1246 = vmatprep.subr.mxu0 0.0
  %1247 = vmatpush1.msra.mxu0 0.0
  %1248 = vmatprep.subr.mxu0 0.0
  %1249 = vmatpush1.msra.mxu0 0.0
  %1250 = vmatprep.subr.mxu0 0.0
  %1251 = vmatpush1.msra.mxu0 0.0
  %1252 = vmatprep.subr.mxu0 0.0
  %1253 = vmatpush1.msra.mxu0 0.0
  %1254 = vmatprep.subr.mxu0 0.0
  %1255 = vmatpush1.msra.mxu0 0.0
  %1256 = vmatprep.subr.mxu0 0.0
  %1257 = vmatpush1.msra.mxu0 0.0
  %1258 = vmatprep.subr.mxu0 0.0
  %1259 = vmatpush1.msra.mxu0 0.0
  %1260 = vmatprep.subr.mxu0 0.0
  %1261 = vmatpush1.msra.mxu0 0.0
  %1262 = vmatprep.subr.mxu0 0.0
  %1263 = vmatpush1.msra.mxu0 0.0
  %1264 = vmatprep.subr.mxu0 0.0
  %1265 = vmatpush1.msra.mxu0 0.0
  %1266 = vmatprep.subr.mxu0 0.0
  %1267 = vmatpush1.msra.mxu0 0.0
  %1268 = vmatprep.subr.mxu0 0.0
  %1269 = vmatpush1.msra.mxu0 0.0
  %1270 = vmatprep.subr.mxu0 0.0
  %1271 = vmatpush1.msra.mxu0 0.0
  %1272 = vmatprep.subr.mxu0 0.0
  %1273 = vmatpush1.msra.mxu0 0.0
  %1274 = vmatprep.subr.mxu0 0.0
  %1275 = vmatpush1.msra.mxu0 0.0
  %1276 = vmatprep.subr.mxu0 0.0
  %1277 = vmatpush1.msra.mxu0 0.0
  %1278 = vmatprep.subr.mxu0 0.0
  %1279 = vmatpush1.msra.mxu0 0.0
  %1280 = vmatprep.subr.mxu0 0.0
  %1281 = vmatpush1.msra.mxu0 0.0
  %1282 = vmatprep.subr.mxu0 0.0
  %1283 = vmatpush1.msra.mxu0 0.0
  %1284 = vmatprep.subr.mxu0 0.0
  %1285 = vmatpush1.msra.mxu0 0.0
  %1286 = vmatprep.subr.mxu0 0.0
  %1287 = vmatpush1.msra.mxu0 0.0
  %1288 = vmatprep.subr.mxu0 0.0
  %1289 = vmatpush1.msra.mxu0 0.0
  %1290 = vmatprep.subr.mxu0 0.0
  %1291 = vmatpush1.msra.mxu0 0.0
  %1292 = vmatprep.subr.mxu0 0.0
  %1293 = vmatpush1.msra.mxu0 0.0
  %1294 = vmatprep.subr.mxu0 0.0
  %1295 = vmatpush1.msra.mxu0 0.0
  %1296 = vmatprep.subr.mxu0 0.0
  %1297 = vmatpush1.msra.mxu0 0.0
  %1298 = vmatprep.subr.mxu0 0.0
  %1299 = vmatpush1.msra.mxu0 0.0
  %1300 = vmatprep.subr.mxu0 0.0
  %1301 = vmatpush1.msra.mxu0 0.0
  %1302 = vmatprep.subr.mxu0 0.0
  %1303 = vmatpush1.msra.mxu0 0.0
  %1304 = vmatprep.subr.mxu0 0.0
  %1305 = vmatpush1.msra.mxu0 0.0
  %1306 = vmatprep.mubr.f32.mxu0 0.0
  %1307 = vmatmul.mubr.f32.gmra.mrb[0].mxu0 %v1240
  %v1308 = vpop.f32.mrb[0].mxu0
  %v1309 = vadd.f32 0.0, %v1308
  %v1310 = vpop.f32.mrb[0].mxu0
  %1311 = vdwg.mxu0
  %1312 = vrot.lane.b32.xlu0 %v296, 64
  %v1313 = vpop.permute.xlu0 %1312
  %v1316 = vsel %vm305, %v1004, 0
  %1318 = vmatprep.subr.mxu0 0.0
  %1319 = vmatpush1.msra.mxu0 %v1313
  %1320 = vmatprep.subr.mxu0 0.0
  %1321 = vmatpush1.msra.mxu0 0.0
  %1322 = vmatprep.subr.mxu0 0.0
  %1323 = vmatpush1.msra.mxu0 0.0
  %1324 = vmatprep.subr.mxu0 0.0
  %1325 = vmatpush1.msra.mxu0 0.0
  %1326 = vmatprep.subr.mxu0 0.0
  %1327 = vmatpush1.msra.mxu0 0.0
  %1328 = vmatprep.subr.mxu0 0.0
  %1329 = vmatpush1.msra.mxu0 0.0
  %1330 = vmatprep.subr.mxu0 0.0
  %1331 = vmatpush1.msra.mxu0 0.0
  %1332 = vmatprep.subr.mxu0 0.0
  %1333 = vmatpush1.msra.mxu0 0.0
  %1334 = vmatprep.subr.mxu0 0.0
  %1335 = vmatpush1.msra.mxu0 0.0
  %1336 = vmatprep.subr.mxu0 0.0
  %1337 = vmatpush1.msra.mxu0 0.0
  %1338 = vmatprep.subr.mxu0 0.0
  %1339 = vmatpush1.msra.mxu0 0.0
  %1340 = vmatprep.subr.mxu0 0.0
  %1341 = vmatpush1.msra.mxu0 0.0
  %1342 = vmatprep.subr.mxu0 0.0
  %1343 = vmatpush1.msra.mxu0 0.0
  %1344 = vmatprep.subr.mxu0 0.0
  %1345 = vmatpush1.msra.mxu0 0.0
  %1346 = vmatprep.subr.mxu0 0.0
  %1347 = vmatpush1.msra.mxu0 0.0
  %1348 = vmatprep.subr.mxu0 0.0
  %1349 = vmatpush1.msra.mxu0 0.0
  %1350 = vmatprep.subr.mxu0 0.0
  %1351 = vmatpush1.msra.mxu0 0.0
  %1352 = vmatprep.subr.mxu0 0.0
  %1353 = vmatpush1.msra.mxu0 0.0
  %1354 = vmatprep.subr.mxu0 0.0
  %1355 = vmatpush1.msra.mxu0 0.0
  %1356 = vmatprep.subr.mxu0 0.0
  %1357 = vmatpush1.msra.mxu0 0.0
  %1358 = vmatprep.subr.mxu0 0.0
  %1359 = vmatpush1.msra.mxu0 0.0
  %1360 = vmatprep.subr.mxu0 0.0
  %1361 = vmatpush1.msra.mxu0 0.0
  %1362 = vmatprep.subr.mxu0 0.0
  %1363 = vmatpush1.msra.mxu0 0.0
  %1364 = vmatprep.subr.mxu0 0.0
  %1365 = vmatpush1.msra.mxu0 0.0
  %1366 = vmatprep.subr.mxu0 0.0
  %1367 = vmatpush1.msra.mxu0 0.0
  %1368 = vmatprep.subr.mxu0 0.0
  %1369 = vmatpush1.msra.mxu0 0.0
  %1370 = vmatprep.subr.mxu0 0.0
  %1371 = vmatpush1.msra.mxu0 0.0
  %1372 = vmatprep.subr.mxu0 0.0
  %1373 = vmatpush1.msra.mxu0 0.0
  %1374 = vmatprep.subr.mxu0 0.0
  %1375 = vmatpush1.msra.mxu0 0.0
  %1376 = vmatprep.subr.mxu0 0.0
  %1377 = vmatpush1.msra.mxu0 0.0
  %1378 = vmatprep.subr.mxu0 0.0
  %1379 = vmatpush1.msra.mxu0 0.0
  %1380 = vmatprep.subr.mxu0 0.0
  %1381 = vmatpush1.msra.mxu0 0.0
  %1382 = vmatprep.mubr.f32.mxu0 0.0
  %1383 = vmatmul.mubr.f32.gmra.mrb[0].mxu0 %v1316
  %v1384 = vpop.f32.mrb[0].mxu0
  %v1385 = vadd.f32 0.0, %v1384
  %v1386 = vpop.f32.mrb[0].mxu0
  %1387 = vdwg.mxu0
  %1388 = vrot.lane.b32.xlu0 %v298, 64
  %v1389 = vpop.permute.xlu0 %1388
  %v1392 = vsel %vm305, %v1005, 0
  %1394 = vmatprep.subr.mxu0 0.0
  %1395 = vmatpush1.msra.mxu0 %v1389
  %1396 = vmatprep.subr.mxu0 0.0
  %1397 = vmatpush1.msra.mxu0 0.0
  %1398 = vmatprep.subr.mxu0 0.0
  %1399 = vmatpush1.msra.mxu0 0.0
  %1400 = vmatprep.subr.mxu0 0.0
  %1401 = vmatpush1.msra.mxu0 0.0
  %1402 = vmatprep.subr.mxu0 0.0
  %1403 = vmatpush1.msra.mxu0 0.0
  %1404 = vmatprep.subr.mxu0 0.0
  %1405 = vmatpush1.msra.mxu0 0.0
  %1406 = vmatprep.subr.mxu0 0.0
  %1407 = vmatpush1.msra.mxu0 0.0
  %1408 = vmatprep.subr.mxu0 0.0
  %1409 = vmatpush1.msra.mxu0 0.0
  %1410 = vmatprep.subr.mxu0 0.0
  %1411 = vmatpush1.msra.mxu0 0.0
  %1412 = vmatprep.subr.mxu0 0.0
  %1413 = vmatpush1.msra.mxu0 0.0
  %1414 = vmatprep.subr.mxu0 0.0
  %1415 = vmatpush1.msra.mxu0 0.0
  %1416 = vmatprep.subr.mxu0 0.0
  %1417 = vmatpush1.msra.mxu0 0.0
  %1418 = vmatprep.subr.mxu0 0.0
  %1419 = vmatpush1.msra.mxu0 0.0
  %1420 = vmatprep.subr.mxu0 0.0
  %1421 = vmatpush1.msra.mxu0 0.0
  %1422 = vmatprep.subr.mxu0 0.0
  %1423 = vmatpush1.msra.mxu0 0.0
  %1424 = vmatprep.subr.mxu0 0.0
  %1425 = vmatpush1.msra.mxu0 0.0
  %1426 = vmatprep.subr.mxu0 0.0
  %1427 = vmatpush1.msra.mxu0 0.0
  %1428 = vmatprep.subr.mxu0 0.0
  %1429 = vmatpush1.msra.mxu0 0.0
  %1430 = vmatprep.subr.mxu0 0.0
  %1431 = vmatpush1.msra.mxu0 0.0
  %1432 = vmatprep.subr.mxu0 0.0
  %1433 = vmatpush1.msra.mxu0 0.0
  %1434 = vmatprep.subr.mxu0 0.0
  %1435 = vmatpush1.msra.mxu0 0.0
  %1436 = vmatprep.subr.mxu0 0.0
  %1437 = vmatpush1.msra.mxu0 0.0
  %1438 = vmatprep.subr.mxu0 0.0
  %1439 = vmatpush1.msra.mxu0 0.0
  %1440 = vmatprep.subr.mxu0 0.0
  %1441 = vmatpush1.msra.mxu0 0.0
  %1442 = vmatprep.subr.mxu0 0.0
  %1443 = vmatpush1.msra.mxu0 0.0
  %1444 = vmatprep.subr.mxu0 0.0
  %1445 = vmatpush1.msra.mxu0 0.0
  %1446 = vmatprep.subr.mxu0 0.0
  %1447 = vmatpush1.msra.mxu0 0.0
  %1448 = vmatprep.subr.mxu0 0.0
  %1449 = vmatpush1.msra.mxu0 0.0
  %1450 = vmatprep.subr.mxu0 0.0
  %1451 = vmatpush1.msra.mxu0 0.0
  %1452 = vmatprep.subr.mxu0 0.0
  %1453 = vmatpush1.msra.mxu0 0.0
  %1454 = vmatprep.subr.mxu0 0.0
  %1455 = vmatpush1.msra.mxu0 0.0
  %1456 = vmatprep.subr.mxu0 0.0
  %1457 = vmatpush1.msra.mxu0 0.0
  %1458 = vmatprep.mubr.f32.mxu0 0.0
  %1459 = vmatmul.mubr.f32.gmra.mrb[0].mxu0 %v1392
  %v1460 = vpop.f32.mrb[0].mxu0
  %v1461 = vadd.f32 0.0, %v1460
  %v1462 = vpop.f32.mrb[0].mxu0
  %1463 = vdwg.mxu0
  %1464 = vrot.lane.b32.xlu0 %v300, 64
  %v1465 = vpop.permute.xlu0 %1464
  %v1468 = vsel %vm305, %v1006, 0
  %1470 = vmatprep.subr.mxu0 0.0
  %1471 = vmatpush1.msra.mxu0 %v1465
  %1472 = vmatprep.subr.mxu0 0.0
  %1473 = vmatpush1.msra.mxu0 0.0
  %1474 = vmatprep.subr.mxu0 0.0
  %1475 = vmatpush1.msra.mxu0 0.0
  %1476 = vmatprep.subr.mxu0 0.0
  %1477 = vmatpush1.msra.mxu0 0.0
  %1478 = vmatprep.subr.mxu0 0.0
  %1479 = vmatpush1.msra.mxu0 0.0
  %1480 = vmatprep.subr.mxu0 0.0
  %1481 = vmatpush1.msra.mxu0 0.0
  %1482 = vmatprep.subr.mxu0 0.0
  %1483 = vmatpush1.msra.mxu0 0.0
  %1484 = vmatprep.subr.mxu0 0.0
  %1485 = vmatpush1.msra.mxu0 0.0
  %1486 = vmatprep.subr.mxu0 0.0
  %1487 = vmatpush1.msra.mxu0 0.0
  %1488 = vmatprep.subr.mxu0 0.0
  %1489 = vmatpush1.msra.mxu0 0.0
  %1490 = vmatprep.subr.mxu0 0.0
  %1491 = vmatpush1.msra.mxu0 0.0
  %1492 = vmatprep.subr.mxu0 0.0
  %1493 = vmatpush1.msra.mxu0 0.0
  %1494 = vmatprep.subr.mxu0 0.0
  %1495 = vmatpush1.msra.mxu0 0.0
  %1496 = vmatprep.subr.mxu0 0.0
  %1497 = vmatpush1.msra.mxu0 0.0
  %1498 = vmatprep.subr.mxu0 0.0
  %1499 = vmatpush1.msra.mxu0 0.0
  %1500 = vmatprep.subr.mxu0 0.0
  %1501 = vmatpush1.msra.mxu0 0.0
  %1502 = vmatprep.subr.mxu0 0.0
  %1503 = vmatpush1.msra.mxu0 0.0
  %1504 = vmatprep.subr.mxu0 0.0
  %1505 = vmatpush1.msra.mxu0 0.0
  %1506 = vmatprep.subr.mxu0 0.0
  %1507 = vmatpush1.msra.mxu0 0.0
  %1508 = vmatprep.subr.mxu0 0.0
  %1509 = vmatpush1.msra.mxu0 0.0
  %1510 = vmatprep.subr.mxu0 0.0
  %1511 = vmatpush1.msra.mxu0 0.0
  %1512 = vmatprep.subr.mxu0 0.0
  %1513 = vmatpush1.msra.mxu0 0.0
  %1514 = vmatprep.subr.mxu0 0.0
  %1515 = vmatpush1.msra.mxu0 0.0
  %1516 = vmatprep.subr.mxu0 0.0
  %1517 = vmatpush1.msra.mxu0 0.0
  %1518 = vmatprep.subr.mxu0 0.0
  %1519 = vmatpush1.msra.mxu0 0.0
  %1520 = vmatprep.subr.mxu0 0.0
  %1521 = vmatpush1.msra.mxu0 0.0
  %1522 = vmatprep.subr.mxu0 0.0
  %1523 = vmatpush1.msra.mxu0 0.0
  %1524 = vmatprep.subr.mxu0 0.0
  %1525 = vmatpush1.msra.mxu0 0.0
  %1526 = vmatprep.subr.mxu0 0.0
  %1527 = vmatpush1.msra.mxu0 0.0
  %1528 = vmatprep.subr.mxu0 0.0
  %1529 = vmatpush1.msra.mxu0 0.0
  %1530 = vmatprep.subr.mxu0 0.0
  %1531 = vmatpush1.msra.mxu0 0.0
  %1532 = vmatprep.subr.mxu0 0.0
  %1533 = vmatpush1.msra.mxu0 0.0
  %1534 = vmatprep.mubr.f32.mxu0 0.0
  %1535 = vmatmul.mubr.f32.gmra.mrb[0].mxu0 %v1468
  %v1536 = vpop.f32.mrb[0].mxu0
  %v1537 = vadd.f32 0.0, %v1536
  %v1538 = vpop.f32.mrb[0].mxu0
  %1539 = vdwg.mxu0
  %1540 = vrot.lane.b32.xlu0 %v302, 64
  %v1541 = vpop.permute.xlu0 %1540
  %v1544 = vsel %vm305, %v1007, 0
  %1546 = vmatprep.subr.mxu0 0.0
  %1547 = vmatpush1.msra.mxu0 %v1541
  %1548 = vmatprep.subr.mxu0 0.0
  %1549 = vmatpush1.msra.mxu0 0.0
  %1550 = vmatprep.subr.mxu0 0.0
  %1551 = vmatpush1.msra.mxu0 0.0
  %1552 = vmatprep.subr.mxu0 0.0
  %1553 = vmatpush1.msra.mxu0 0.0
  %1554 = vmatprep.subr.mxu0 0.0
  %1555 = vmatpush1.msra.mxu0 0.0
  %1556 = vmatprep.subr.mxu0 0.0
  %1557 = vmatpush1.msra.mxu0 0.0
  %1558 = vmatprep.subr.mxu0 0.0
  %1559 = vmatpush1.msra.mxu0 0.0
  %1560 = vmatprep.subr.mxu0 0.0
  %1561 = vmatpush1.msra.mxu0 0.0
  %1562 = vmatprep.subr.mxu0 0.0
  %1563 = vmatpush1.msra.mxu0 0.0
  %1564 = vmatprep.subr.mxu0 0.0
  %1565 = vmatpush1.msra.mxu0 0.0
  %1566 = vmatprep.subr.mxu0 0.0
  %1567 = vmatpush1.msra.mxu0 0.0
  %1568 = vmatprep.subr.mxu0 0.0
  %1569 = vmatpush1.msra.mxu0 0.0
  %1570 = vmatprep.subr.mxu0 0.0
  %1571 = vmatpush1.msra.mxu0 0.0
  %1572 = vmatprep.subr.mxu0 0.0
  %1573 = vmatpush1.msra.mxu0 0.0
  %1574 = vmatprep.subr.mxu0 0.0
  %1575 = vmatpush1.msra.mxu0 0.0
  %1576 = vmatprep.subr.mxu0 0.0
  %1577 = vmatpush1.msra.mxu0 0.0
  %1578 = vmatprep.subr.mxu0 0.0
  %1579 = vmatpush1.msra.mxu0 0.0
  %1580 = vmatprep.subr.mxu0 0.0
  %1581 = vmatpush1.msra.mxu0 0.0
  %1582 = vmatprep.subr.mxu0 0.0
  %1583 = vmatpush1.msra.mxu0 0.0
  %1584 = vmatprep.subr.mxu0 0.0
  %1585 = vmatpush1.msra.mxu0 0.0
  %1586 = vmatprep.subr.mxu0 0.0
  %1587 = vmatpush1.msra.mxu0 0.0
  %1588 = vmatprep.subr.mxu0 0.0
  %1589 = vmatpush1.msra.mxu0 0.0
  %1590 = vmatprep.subr.mxu0 0.0
  %1591 = vmatpush1.msra.mxu0 0.0
  %1592 = vmatprep.subr.mxu0 0.0
  %1593 = vmatpush1.msra.mxu0 0.0
  %1594 = vmatprep.subr.mxu0 0.0
  %1595 = vmatpush1.msra.mxu0 0.0
  %1596 = vmatprep.subr.mxu0 0.0
  %1597 = vmatpush1.msra.mxu0 0.0
  %1598 = vmatprep.subr.mxu0 0.0
  %1599 = vmatpush1.msra.mxu0 0.0
  %1600 = vmatprep.subr.mxu0 0.0
  %1601 = vmatpush1.msra.mxu0 0.0
  %1602 = vmatprep.subr.mxu0 0.0
  %1603 = vmatpush1.msra.mxu0 0.0
  %1604 = vmatprep.subr.mxu0 0.0
  %1605 = vmatpush1.msra.mxu0 0.0
  %1606 = vmatprep.subr.mxu0 0.0
  %1607 = vmatpush1.msra.mxu0 0.0
  %1608 = vmatprep.subr.mxu0 0.0
  %1609 = vmatpush1.msra.mxu0 0.0
  %1610 = vmatprep.mubr.f32.mxu0 0.0
  %1611 = vmatmul.mubr.f32.gmra.mrb[0].mxu0 %v1544
  %v1612 = vpop.f32.mrb[0].mxu0
  %v1613 = vadd.f32 0.0, %v1612
  %v1614 = vpop.f32.mrb[0].mxu0
  %1615 = vdwg.mxu0
  %1618 = vrot.lane.b32.xlu0 %v1233, 8
  %v1619 = vpop.permute.xlu0 %1618
  %1620 = vrot.lane.b32.xlu0 %v1309, 8
  %v1621 = vpop.permute.xlu0 %1620
  %1626 = vrot.lane.b32.xlu0 %v1385, 16
  %v1627 = vpop.permute.xlu0 %1626
  %1628 = vrot.lane.b32.xlu0 %v1461, 16
  %v1629 = vpop.permute.xlu0 %1628
  %1634 = vrot.lane.b32.xlu0 %v1537, 24
  %v1635 = vpop.permute.xlu0 %1634
  %1636 = vrot.lane.b32.xlu0 %v1613, 24
  %v1637 = vpop.permute.xlu0 %1636
  %v1640 = vsel %vm305, %v1081, %v1619
  %v1641 = vsel %vm305, %v1157, %v1621
  %v1642 = vsel %vm31, %v1640, %v1627
  %v1643 = vsel %vm31, %v1641, %v1629
  %vm1644 = vcmask 195584
  %v1645 = vsel %vm1644, %v1642, %v1635
  %v1646 = vsel %vm1644, %v1643, %v1637
  %v1647 = vld [vmem:[%s4] sm:$0xff]
  %v1648 = vld [vmem:[%s4 + $0x8] sm:$0xff]
  %v1649 = vld [vmem:[%s4 + $0x10] sm:$0xff]
  %v1650 = vld [vmem:[%s4 + $0x18] sm:$0xff]
  %v1651 = vld [vmem:[%s1 + $0x5] sm:$0x1]
  %v1652 = vlaneseq
  %v1653 = vshrl.u32 %v1652, 7
  %v1654 = vsub.s32 0, %v1653
  %v1655 = vrot.slane %v1651, %v1654
  %v1657 = vsel %vm207, %v1645, 0
  %v1660 = vsel %vm207, %v1646, 0
  %1662 = vmatprep.subr.mxu0 0.0
  %1663 = vmatpush1.msra.mxu0 %v1647
  %1664 = vmatprep.subr.mxu0 0.0
  %1665 = vmatpush1.msra.mxu0 %v1648
  %1666 = vmatprep.subr.mxu0 0.0
  %1667 = vmatpush1.msra.mxu0 %v1649
  %1668 = vmatprep.subr.mxu0 0.0
  %1669 = vmatpush1.msra.mxu0 %v1650
  %1670 = vmatprep.subr.mxu0 0.0
  %1671 = vmatpush1.msra.mxu0 0.0
  %1672 = vmatprep.subr.mxu0 0.0
  %1673 = vmatpush1.msra.mxu0 0.0
  %1674 = vmatprep.subr.mxu0 0.0
  %1675 = vmatpush1.msra.mxu0 0.0
  %1676 = vmatprep.subr.mxu0 0.0
  %1677 = vmatpush1.msra.mxu0 0.0
  %1678 = vmatprep.subr.mxu0 0.0
  %1679 = vmatpush1.msra.mxu0 0.0
  %1680 = vmatprep.subr.mxu0 0.0
  %1681 = vmatpush1.msra.mxu0 0.0
  %1682 = vmatprep.subr.mxu0 0.0
  %1683 = vmatpush1.msra.mxu0 0.0
  %1684 = vmatprep.subr.mxu0 0.0
  %1685 = vmatpush1.msra.mxu0 0.0
  %1686 = vmatprep.subr.mxu0 0.0
  %1687 = vmatpush1.msra.mxu0 0.0
  %1688 = vmatprep.subr.mxu0 0.0
  %1689 = vmatpush1.msra.mxu0 0.0
  %1690 = vmatprep.subr.mxu0 0.0
  %1691 = vmatpush1.msra.mxu0 0.0
  %1692 = vmatprep.subr.mxu0 0.0
  %1693 = vmatpush1.msra.mxu0 0.0
  %1694 = vmatprep.subr.mxu0 0.0
  %1695 = vmatpush1.msra.mxu0 0.0
  %1696 = vmatprep.subr.mxu0 0.0
  %1697 = vmatpush1.msra.mxu0 0.0
  %1698 = vmatprep.subr.mxu0 0.0
  %1699 = vmatpush1.msra.mxu0 0.0
  %1700 = vmatprep.subr.mxu0 0.0
  %1701 = vmatpush1.msra.mxu0 0.0
  %1702 = vmatprep.subr.mxu0 0.0
  %1703 = vmatpush1.msra.mxu0 0.0
  %1704 = vmatprep.subr.mxu0 0.0
  %1705 = vmatpush1.msra.mxu0 0.0
  %1706 = vmatprep.subr.mxu0 0.0
  %1707 = vmatpush1.msra.mxu0 0.0
  %1708 = vmatprep.subr.mxu0 0.0
  %1709 = vmatpush1.msra.mxu0 0.0
  %1710 = vmatprep.subr.mxu0 0.0
  %1711 = vmatpush1.msra.mxu0 0.0
  %1712 = vmatprep.subr.mxu0 0.0
  %1713 = vmatpush1.msra.mxu0 0.0
  %1714 = vmatprep.subr.mxu0 0.0
  %1715 = vmatpush1.msra.mxu0 0.0
  %1716 = vmatprep.subr.mxu0 0.0
  %1717 = vmatpush1.msra.mxu0 0.0
  %1718 = vmatprep.subr.mxu0 0.0
  %1719 = vmatpush1.msra.mxu0 0.0
  %1720 = vmatprep.subr.mxu0 0.0
  %1721 = vmatpush1.msra.mxu0 0.0
  %1722 = vmatprep.subr.mxu0 0.0
  %1723 = vmatpush1.msra.mxu0 0.0
  %1724 = vmatprep.subr.mxu0 0.0
  %1725 = vmatpush1.msra.mxu0 0.0
  %1726 = vmatprep.mubr.f32.mxu0 0.0
  %1727 = vmatmul.mubr.f32.gmra.mrb[0].mxu0 %v1657
  %v1728 = vpop.f32.mrb[0].mxu0
  %v1729 = vadd.f32 %v1655, %v1728
  %v1730 = vpop.f32.mrb[0].mxu0
  %1731 = vmatprep.mubr.f32.mxu0 0.0
  %1732 = vmatmul.mubr.f32.gmra.mrb[0].mxu0 %v1660
  %v1733 = vpop.f32.mrb[0].mxu0
  %v1734 = vadd.f32 %v1655, %v1733
  %v1735 = vpop.f32.mrb[0].mxu0
  %1736 = vdwg.mxu0
  %v1737 = vadd.f32 %v190, %v1729
  %v1738 = vadd.f32 %v195, %v1734
  %v1739 = vld [vmem:[%s1 + $0x8] sm:$0x1]
  %v1740 = vld [vmem:[%s1 + $0x9] sm:$0x1]
  %v1741 = vsel %vm207, %v1737, 0.0
  %1742 = vadd.xlane.f32.xlu0 %v1741
  %v1743 = vpop.xlane.xlu0 %1742
  %v1744 = vsel %vm207, %v1738, 0.0
  %1745 = vadd.xlane.f32.xlu0 %v1744
  %v1746 = vpop.xlane.xlu0 %1745
  %v1747 = vrcp.pop 32.0
  %v1748 = vmul.f32 %v1743, %v1747
  %v1749 = vmul.f32 %v1746, %v1747
  %v1750 = vsub.f32 %v1737, %v1748
  %v1751 = vsub.f32 %v1738, %v1749
  %v1752 = vmul.f32 %v1750, %v1750
  %v1753 = vmul.f32 %v1751, %v1751
  %v1754 = vsel %vm207, %v1752, 0.0
  %1755 = vadd.xlane.f32.xlu0 %v1754
  %v1756 = vpop.xlane.xlu0 %1755
  %v1757 = vsel %vm207, %v1753, 0.0
  %1758 = vadd.xlane.f32.xlu0 %v1757
  %v1759 = vpop.xlane.xlu0 %1758
  %v1760 = vmul.f32 %v1756, %v1747
  %v1761 = vmul.f32 %v1759, %v1747
  %v1762 = vadd.f32 %v1760, 1e-05
  %v1763 = vadd.f32 %v1761, 1e-05
  %v1764 = vrsqrt.pop %v1762
  %v1765 = vrsqrt.pop %v1763
  %v1766 = vmul.f32 %v1750, %v1764
  %v1767 = vmul.f32 %v1751, %v1765
  %v1768 = vlaneseq
  %v1769 = vshrl.u32 %v1768, 7
  %v1770 = vsub.s32 0, %v1769
  %v1771 = vrot.slane %v1739, %v1770
  %v1772 = vmul.f32 %v1766, %v1771
  %v1773 = vmul.f32 %v1767, %v1771
  %v1774 = vlaneseq
  %v1775 = vshrl.u32 %v1774, 7
  %v1776 = vsub.s32 0, %v1775
  %v1777 = vrot.slane %v1740, %v1776
  %v1778 = vadd.f32 %v1772, %v1777
  %v1779 = vadd.f32 %v1773, %v1777
  %v1780 = vld [vmem:[%s5] sm:$0xff]
  %v1781 = vld [vmem:[%s5 + $0x8] sm:$0xff]
  %v1782 = vld [vmem:[%s5 + $0x10] sm:$0xff]
  %v1783 = vld [vmem:[%s5 + $0x18] sm:$0xff]
  %v1784 = vld [vmem:[%s1 + $0x6] sm:$0x1]
  %v1785 = vlaneseq
  %v1786 = vshrl.u32 %v1785, 7
  %v1787 = vsub.s32 0, %v1786
  %v1788 = vrot.slane %v1784, %v1787
  %v1790 = vsel %vm207, %v1778, 0
  %v1793 = vsel %vm207, %v1779, 0
  %1795 = vmatprep.subr.mxu0 0.0
  %1796 = vmatpush1.msra.mxu0 %v1780
  %1797 = vmatprep.subr.mxu0 0.0
  %1798 = vmatpush1.msra.mxu0 %v1781
  %1799 = vmatprep.subr.mxu0 0.0
  %1800 = vmatpush1.msra.mxu0 %v1782
  %1801 = vmatprep.subr.mxu0 0.0
  %1802 = vmatpush1.msra.mxu0 %v1783
  %1803 = vmatprep.subr.mxu0 0.0
  %1804 = vmatpush1.msra.mxu0 0.0
  %1805 = vmatprep.subr.mxu0 0.0
  %1806 = vmatpush1.msra.mxu0 0.0
  %1807 = vmatprep.subr.mxu0 0.0
  %1808 = vmatpush1.msra.mxu0 0.0
  %1809 = vmatprep.subr.mxu0 0.0
  %1810 = vmatpush1.msra.mxu0 0.0
  %1811 = vmatprep.subr.mxu0 0.0
  %1812 = vmatpush1.msra.mxu0 0.0
  %1813 = vmatprep.subr.mxu0 0.0
  %1814 = vmatpush1.msra.mxu0 0.0
  %1815 = vmatprep.subr.mxu0 0.0
  %1816 = vmatpush1.msra.mxu0 0.0
  %1817 = vmatprep.subr.mxu0 0.0
  %1818 = vmatpush1.msra.mxu0 0.0
  %1819 = vmatprep.subr.mxu0 0.0
  %1820 = vmatpush1.msra.mxu0 0.0
  %1821 = vmatprep.subr.mxu0 0.0
  %1822 = vmatpush1.msra.mxu0 0.0
  %1823 = vmatprep.subr.mxu0 0.0
  %1824 = vmatpush1.msra.mxu0 0.0
  %1825 = vmatprep.subr.mxu0 0.0
  %1826 = vmatpush1.msra.mxu0 0.0
  %1827 = vmatprep.subr.mxu0 0.0
  %1828 = vmatpush1.msra.mxu0 0.0
  %1829 = vmatprep.subr.mxu0 0.0
  %1830 = vmatpush1.msra.mxu0 0.0
  %1831 = vmatprep.subr.mxu0 0.0
  %1832 = vmatpush1.msra.mxu0 0.0
  %1833 = vmatprep.subr.mxu0 0.0
  %1834 = vmatpush1.msra.mxu0 0.0
  %1835 = vmatprep.subr.mxu0 0.0
  %1836 = vmatpush1.msra.mxu0 0.0
  %1837 = vmatprep.subr.mxu0 0.0
  %1838 = vmatpush1.msra.mxu0 0.0
  %1839 = vmatprep.subr.mxu0 0.0
  %1840 = vmatpush1.msra.mxu0 0.0
  %1841 = vmatprep.subr.mxu0 0.0
  %1842 = vmatpush1.msra.mxu0 0.0
  %1843 = vmatprep.subr.mxu0 0.0
  %1844 = vmatpush1.msra.mxu0 0.0
  %1845 = vmatprep.subr.mxu0 0.0
  %1846 = vmatpush1.msra.mxu0 0.0
  %1847 = vmatprep.subr.mxu0 0.0
  %1848 = vmatpush1.msra.mxu0 0.0
  %1849 = vmatprep.subr.mxu0 0.0
  %1850 = vmatpush1.msra.mxu0 0.0
  %1851 = vmatprep.subr.mxu0 0.0
  %1852 = vmatpush1.msra.mxu0 0.0
  %1853 = vmatprep.subr.mxu0 0.0
  %1854 = vmatpush1.msra.mxu0 0.0
  %1855 = vmatprep.subr.mxu0 0.0
  %1856 = vmatpush1.msra.mxu0 0.0
  %1857 = vmatprep.subr.mxu0 0.0
  %1858 = vmatpush1.msra.mxu0 0.0
  %1859 = vmatprep.mubr.f32.mxu0 0.0
  %1860 = vmatmul.mubr.f32.gmra.mrb[0].mxu0 %v1790
  %v1861 = vpop.f32.mrb[0].mxu0
  %v1862 = vadd.f32 %v1788, %v1861
  %v1863 = vpop.f32.mrb[0].mxu0
  %1864 = vmatprep.mubr.f32.mxu0 0.0
  %1865 = vmatmul.mubr.f32.gmra.mrb[0].mxu0 %v1793
  %v1866 = vpop.f32.mrb[0].mxu0
  %v1867 = vadd.f32 %v1788, %v1866
  %v1868 = vpop.f32.mrb[0].mxu0
  %1869 = vdwg.mxu0
  %v1870 = vmax.f32 %v1862, 0.0
  %v1871 = vmax.f32 %v1867, 0.0
  %v1872 = vld [vmem:[%s6] sm:$0xff]
  %v1873 = vld [vmem:[%s6 + $0x8] sm:$0xff]
  %v1874 = vld [vmem:[%s6 + $0x10] sm:$0xff]
  %v1875 = vld [vmem:[%s6 + $0x18] sm:$0xff]
  %v1876 = vld [vmem:[%s6 + $0x20] sm:$0xff]
  %v1877 = vld [vmem:[%s6 + $0x28] sm:$0xff]
  %v1878 = vld [vmem:[%s6 + $0x30] sm:$0xff]
  %v1879 = vld [vmem:[%s6 + $0x38] sm:$0xff]
  %v1880 = vld [vmem:[%s1 + $0x7] sm:$0x1]
  %v1881 = vlaneseq
  %v1882 = vshrl.u32 %v1881, 7
  %v1883 = vsub.s32 0, %v1882
  %v1884 = vrot.slane %v1880, %v1883
  %vm1885 = vcmask 523264
  %v1887 = vsel %vm1885, %v1870, 0
  %v1890 = vsel %vm1885, %v1871, 0
  %1892 = vmatprep.subr.mxu0 0.0
  %1893 = vmatpush1.msra.mxu0 %v1872
  %1894 = vmatprep.subr.mxu0 0.0
  %1895 = vmatpush1.msra.mxu0 %v1873
  %1896 = vmatprep.subr.mxu0 0.0
  %1897 = vmatpush1.msra.mxu0 %v1874
  %1898 = vmatprep.subr.mxu0 0.0
  %1899 = vmatpush1.msra.mxu0 %v1875
  %1900 = vmatprep.subr.mxu0 0.0
  %1901 = vmatpush1.msra.mxu0 %v1876
  %1902 = vmatprep.subr.mxu0 0.0
  %1903 = vmatpush1.msra.mxu0 %v1877
  %1904 = vmatprep.subr.mxu0 0.0
  %1905 = vmatpush1.msra.mxu0 %v1878
  %1906 = vmatprep.subr.mxu0 0.0
  %1907 = vmatpush1.msra.mxu0 %v1879
  %1908 = vmatprep.subr.mxu0 0.0
  %1909 = vmatpush1.msra.mxu0 0.0
  %1910 = vmatprep.subr.mxu0 0.0
  %1911 = vmatpush1.msra.mxu0 0.0
  %1912 = vmatprep.subr.mxu0 0.0
  %1913 = vmatpush1.msra.mxu0 0.0
  %1914 = vmatprep.subr.mxu0 0.0
  %1915 = vmatpush1.msra.mxu0 0.0
  %1916 = vmatprep.subr.mxu0 0.0
  %1917 = vmatpush1.msra.mxu0 0.0
  %1918 = vmatprep.subr.mxu0 0.0
  %1919 = vmatpush1.msra.mxu0 0.0
  %1920 = vmatprep.subr.mxu0 0.0
  %1921 = vmatpush1.msra.mxu0 0.0
  %1922 = vmatprep.subr.mxu0 0.0
  %1923 = vmatpush1.msra.mxu0 0.0
  %1924 = vmatprep.subr.mxu0 0.0
  %1925 = vmatpush1.msra.mxu0 0.0
  %1926 = vmatprep.subr.mxu0 0.0
  %1927 = vmatpush1.msra.mxu0 0.0
  %1928 = vmatprep.subr.mxu0 0.0
  %1929 = vmatpush1.msra.mxu0 0.0
  %1930 = vmatprep.subr.mxu0 0.0
  %1931 = vmatpush1.msra.mxu0 0.0
  %1932 = vmatprep.subr.mxu0 0.0
  %1933 = vmatpush1.msra.mxu0 0.0
  %1934 = vmatprep.subr.mxu0 0.0
  %1935 = vmatpush1.msra.mxu0 0.0
  %1936 = vmatprep.subr.mxu0 0.0
  %1937 = vmatpush1.msra.mxu0 0.0
  %1938 = vmatprep.subr.mxu0 0.0
  %1939 = vmatpush1.msra.mxu0 0.0
  %1940 = vmatprep.subr.mxu0 0.0
  %1941 = vmatpush1.msra.mxu0 0.0
  %1942 = vmatprep.subr.mxu0 0.0
  %1943 = vmatpush1.msra.mxu0 0.0
  %1944 = vmatprep.subr.mxu0 0.0
  %1945 = vmatpush1.msra.mxu0 0.0
  %1946 = vmatprep.subr.mxu0 0.0
  %1947 = vmatpush1.msra.mxu0 0.0
  %1948 = vmatprep.subr.mxu0 0.0
  %1949 = vmatpush1.msra.mxu0 0.0
  %1950 = vmatprep.subr.mxu0 0.0
  %1951 = vmatpush1.msra.mxu0 0.0
  %1952 = vmatprep.subr.mxu0 0.0
  %1953 = vmatpush1.msra.mxu0 0.0
  %1954 = vmatprep.subr.mxu0 0.0
  %1955 = vmatpush1.msra.mxu0 0.0
  %1956 = vmatprep.mubr.f32.mxu0 0.0
  %1957 = vmatmul.mubr.f32.gmra.mrb[0].mxu0 %v1887
  %v1958 = vpop.f32.mrb[0].mxu0
  %v1959 = vadd.f32 %v1884, %v1958
  %v1960 = vpop.f32.mrb[0].mxu0
  %1961 = vmatprep.mubr.f32.mxu0 0.0
  %1962 = vmatmul.mubr.f32.gmra.mrb[0].mxu0 %v1890
  %v1963 = vpop.f32.mrb[0].mxu0
  %v1964 = vadd.f32 %v1884, %v1963
  %v1965 = vpop.f32.mrb[0].mxu0
  %1966 = vdwg.mxu0
  %v1967 = vadd.f32 %v1778, %v1959
  %v1968 = vadd.f32 %v1779, %v1964
  %v1969 = vld [vmem:[%s1 + $0xa] sm:$0x1]
  %v1970 = vld [vmem:[%s1 + $0xb] sm:$0x1]
  %v1971 = vsel %vm207, %v1967, 0.0
  %1972 = vadd.xlane.f32.xlu0 %v1971
  %v1973 = vpop.xlane.xlu0 %1972
  %v1974 = vsel %vm207, %v1968, 0.0
  %1975 = vadd.xlane.f32.xlu0 %v1974
  %v1976 = vpop.xlane.xlu0 %1975
  %v1977 = vmul.f32 %v1973, %v1747
  %v1978 = vmul.f32 %v1976, %v1747
  %v1979 = vsub.f32 %v1967, %v1977
  %v1980 = vsub.f32 %v1968, %v1978
  %v1981 = vmul.f32 %v1979, %v1979
  %v1982 = vmul.f32 %v1980, %v1980
  %v1983 = vsel %vm207, %v1981, 0.0
  %1984 = vadd.xlane.f32.xlu0 %v1983
  %v1985 = vpop.xlane.xlu0 %1984
  %v1986 = vsel %vm207, %v1982, 0.0
  %1987 = vadd.xlane.f32.xlu0 %v1986
  %v1988 = vpop.xlane.xlu0 %1987
  %v1989 = vmul.f32 %v1985, %v1747
  %v1990 = vmul.f32 %v1988, %v1747
  %v1991 = vadd.f32 %v1989, 1e-05
  %v1992 = vadd.f32 %v1990, 1e-05
  %v1993 = vrsqrt.pop %v1991
  %v1994 = vrsqrt.pop %v1992
  %v1995 = vmul.f32 %v1979, %v1993
  %v1996 = vmul.f32 %v1980, %v1994
  %v1997 = vlaneseq
  %v1998 = vshrl.u32 %v1997, 7
  %v1999 = vsub.s32 0, %v1998
  %v2000 = vrot.slane %v1969, %v1999
  %v2001 = vmul.f32 %v1995, %v2000
  %v2002 = vmul.f32 %v1996, %v2000
  %v2003 = vlaneseq
  %v2004 = vshrl.u32 %v2003, 7
  %v2005 = vsub.s32 0, %v2004
  %v2006 = vrot.slane %v1970, %v2005
  %v2007 = vadd.f32 %v2001, %v2006
  %v2008 = vadd.f32 %v2002, %v2006
  %s2009 = scalar_lea.vmem %s3, 32
  %v2010 = vld [vmem:[%s2009] sm:$0xff]
  %v2011 = vld [vmem:[%s2009 + $0x8] sm:$0xff]
  %v2012 = vld [vmem:[%s2009 + $0x10] sm:$0xff]
  %v2013 = vld [vmem:[%s2009 + $0x18] sm:$0xff]
  %v2014 = vld [vmem:[%s1 + $0xc] sm:$0x1]
  %v2015 = vlaneseq
  %v2016 = vshrl.u32 %v2015, 7
  %v2017 = vsub.s32 0, %v2016
  %v2018 = vrot.slane %v2014, %v2017
  %v2020 = vsel %vm207, %v2007, 0
  %v2023 = vsel %vm207, %v2008, 0
  %2025 = vmatprep.subr.mxu0 0.0
  %2026 = vmatpush1.msra.mxu0 %v2010
  %2027 = vmatprep.subr.mxu0 0.0
  %2028 = vmatpush1.msra.mxu0 %v2011
  %2029 = vmatprep.subr.mxu0 0.0
  %2030 = vmatpush1.msra.mxu0 %v2012
  %2031 = vmatprep.subr.mxu0 0.0
  %2032 = vmatpush1.msra.mxu0 %v2013
  %2033 = vmatprep.subr.mxu0 0.0
  %2034 = vmatpush1.msra.mxu0 0.0
  %2035 = vmatprep.subr.mxu0 0.0
  %2036 = vmatpush1.msra.mxu0 0.0
  %2037 = vmatprep.subr.mxu0 0.0
  %2038 = vmatpush1.msra.mxu0 0.0
  %2039 = vmatprep.subr.mxu0 0.0
  %2040 = vmatpush1.msra.mxu0 0.0
  %2041 = vmatprep.subr.mxu0 0.0
  %2042 = vmatpush1.msra.mxu0 0.0
  %2043 = vmatprep.subr.mxu0 0.0
  %2044 = vmatpush1.msra.mxu0 0.0
  %2045 = vmatprep.subr.mxu0 0.0
  %2046 = vmatpush1.msra.mxu0 0.0
  %2047 = vmatprep.subr.mxu0 0.0
  %2048 = vmatpush1.msra.mxu0 0.0
  %2049 = vmatprep.subr.mxu0 0.0
  %2050 = vmatpush1.msra.mxu0 0.0
  %2051 = vmatprep.subr.mxu0 0.0
  %2052 = vmatpush1.msra.mxu0 0.0
  %2053 = vmatprep.subr.mxu0 0.0
  %2054 = vmatpush1.msra.mxu0 0.0
  %2055 = vmatprep.subr.mxu0 0.0
  %2056 = vmatpush1.msra.mxu0 0.0
  %2057 = vmatprep.subr.mxu0 0.0
  %2058 = vmatpush1.msra.mxu0 0.0
  %2059 = vmatprep.subr.mxu0 0.0
  %2060 = vmatpush1.msra.mxu0 0.0
  %2061 = vmatprep.subr.mxu0 0.0
  %2062 = vmatpush1.msra.mxu0 0.0
  %2063 = vmatprep.subr.mxu0 0.0
  %2064 = vmatpush1.msra.mxu0 0.0
  %2065 = vmatprep.subr.mxu0 0.0
  %2066 = vmatpush1.msra.mxu0 0.0
  %2067 = vmatprep.subr.mxu0 0.0
  %2068 = vmatpush1.msra.mxu0 0.0
  %2069 = vmatprep.subr.mxu0 0.0
  %2070 = vmatpush1.msra.mxu0 0.0
  %2071 = vmatprep.subr.mxu0 0.0
  %2072 = vmatpush1.msra.mxu0 0.0
  %2073 = vmatprep.subr.mxu0 0.0
  %2074 = vmatpush1.msra.mxu0 0.0
  %2075 = vmatprep.subr.mxu0 0.0
  %2076 = vmatpush1.msra.mxu0 0.0
  %2077 = vmatprep.subr.mxu0 0.0
  %2078 = vmatpush1.msra.mxu0 0.0
  %2079 = vmatprep.subr.mxu0 0.0
  %2080 = vmatpush1.msra.mxu0 0.0
  %2081 = vmatprep.subr.mxu0 0.0
  %2082 = vmatpush1.msra.mxu0 0.0
  %2083 = vmatprep.subr.mxu0 0.0
  %2084 = vmatpush1.msra.mxu0 0.0
  %2085 = vmatprep.subr.mxu0 0.0
  %2086 = vmatpush1.msra.mxu0 0.0
  %2087 = vmatprep.subr.mxu0 0.0
  %2088 = vmatpush1.msra.mxu0 0.0
  %2089 = vmatprep.mubr.f32.mxu0 0.0
  %2090 = vmatmul.mubr.f32.gmra.mrb[0].mxu0 %v2020
  %v2091 = vpop.f32.mrb[0].mxu0
  %v2092 = vadd.f32 %v2018, %v2091
  %v2093 = vpop.f32.mrb[0].mxu0
  %2094 = vmatprep.mubr.f32.mxu0 0.0
  %2095 = vmatmul.mubr.f32.gmra.mrb[0].mxu0 %v2023
  %v2096 = vpop.f32.mrb[0].mxu0
  %v2097 = vadd.f32 %v2018, %v2096
  %v2098 = vpop.f32.mrb[0].mxu0
  %2099 = vdwg.mxu0
  %2102 = vrot.lane.b32.xlu0 %v2092, 120
  %v2103 = vpop.permute.xlu0 %2102
  %2104 = vrot.lane.b32.xlu0 %v2097, 120
  %v2105 = vpop.permute.xlu0 %2104
  %2106 = vrot.lane.b32.xlu0 %v2092, 112
  %v2107 = vpop.permute.xlu0 %2106
  %2108 = vrot.lane.b32.xlu0 %v2097, 112
  %v2109 = vpop.permute.xlu0 %2108
  %2110 = vrot.lane.b32.xlu0 %v2092, 104
  %v2111 = vpop.permute.xlu0 %2110
  %2112 = vrot.lane.b32.xlu0 %v2097, 104
  %v2113 = vpop.permute.xlu0 %2112
  %2114 = vrot.lane.b32.xlu0 %v2092, 96
  %v2115 = vpop.permute.xlu0 %2114
  %v2116 = vsel %vm305, %v2092, 0
  %v2118 = vsel %vm305, %v2115, 0
  %2120 = vmatprep.subr.mxu0 0.0
  %2121 = vmatpush1.xpose.msra.mxu0 %v2118
  %2122 = vmatprep.subr.mxu0 0.0
  %2123 = vmatpush1.xpose.msra.mxu0 0.0
  %2124 = vmatprep.subr.mxu0 0.0
  %2125 = vmatpush1.xpose.msra.mxu0 0.0
  %2126 = vmatprep.subr.mxu0 0.0
  %2127 = vmatpush1.xpose.msra.mxu0 0.0
  %2128 = vmatprep.subr.mxu0 0.0
  %2129 = vmatpush1.xpose.msra.mxu0 0.0
  %2130 = vmatprep.subr.mxu0 0.0
  %2131 = vmatpush1.xpose.msra.mxu0 0.0
  %2132 = vmatprep.subr.mxu0 0.0
  %2133 = vmatpush1.xpose.msra.mxu0 0.0
  %2134 = vmatprep.subr.mxu0 0.0
  %2135 = vmatpush1.xpose.msra.mxu0 0.0
  %2136 = vmatprep.subr.mxu0 0.0
  %2137 = vmatpush1.xpose.msra.mxu0 0.0
  %2138 = vmatprep.subr.mxu0 0.0
  %2139 = vmatpush1.xpose.msra.mxu0 0.0
  %2140 = vmatprep.subr.mxu0 0.0
  %2141 = vmatpush1.xpose.msra.mxu0 0.0
  %2142 = vmatprep.subr.mxu0 0.0
  %2143 = vmatpush1.xpose.msra.mxu0 0.0
  %2144 = vmatprep.subr.mxu0 0.0
  %2145 = vmatpush1.xpose.msra.mxu0 0.0
  %2146 = vmatprep.subr.mxu0 0.0
  %2147 = vmatpush1.xpose.msra.mxu0 0.0
  %2148 = vmatprep.subr.mxu0 0.0
  %2149 = vmatpush1.xpose.msra.mxu0 0.0
  %2150 = vmatprep.subr.mxu0 0.0
  %2151 = vmatpush1.xpose.msra.mxu0 0.0
  %2152 = vmatprep.subr.mxu0 0.0
  %2153 = vmatpush1.xpose.msra.mxu0 0.0
  %2154 = vmatprep.subr.mxu0 0.0
  %2155 = vmatpush1.xpose.msra.mxu0 0.0
  %2156 = vmatprep.subr.mxu0 0.0
  %2157 = vmatpush1.xpose.msra.mxu0 0.0
  %2158 = vmatprep.subr.mxu0 0.0
  %2159 = vmatpush1.xpose.msra.mxu0 0.0
  %2160 = vmatprep.subr.mxu0 0.0
  %2161 = vmatpush1.xpose.msra.mxu0 0.0
  %2162 = vmatprep.subr.mxu0 0.0
  %2163 = vmatpush1.xpose.msra.mxu0 0.0
  %2164 = vmatprep.subr.mxu0 0.0
  %2165 = vmatpush1.xpose.msra.mxu0 0.0
  %2166 = vmatprep.subr.mxu0 0.0
  %2167 = vmatpush1.xpose.msra.mxu0 0.0
  %2168 = vmatprep.subr.mxu0 0.0
  %2169 = vmatpush1.xpose.msra.mxu0 0.0
  %2170 = vmatprep.subr.mxu0 0.0
  %2171 = vmatpush1.xpose.msra.mxu0 0.0
  %2172 = vmatprep.subr.mxu0 0.0
  %2173 = vmatpush1.xpose.msra.mxu0 0.0
  %2174 = vmatprep.subr.mxu0 0.0
  %2175 = vmatpush1.xpose.msra.mxu0 0.0
  %2176 = vmatprep.subr.mxu0 0.0
  %2177 = vmatpush1.xpose.msra.mxu0 0.0
  %2178 = vmatprep.subr.mxu0 0.0
  %2179 = vmatpush1.xpose.msra.mxu0 0.0
  %2180 = vmatprep.subr.mxu0 0.0
  %2181 = vmatpush1.xpose.msra.mxu0 0.0
  %2182 = vmatprep.subr.mxu0 0.0
  %2183 = vmatpush1.xpose.msra.mxu0 0.0
  %2184 = vmatprep.mubr.f32.mxu0 0.0
  %2185 = vmatmul.mubr.f32.gmra.mrb[0].mxu0 %v2116
  %v2186 = vpop.f32.mrb[0].mxu0
  %v2187 = vadd.f32 0.0, %v2186
  %v2188 = vpop.f32.mrb[0].mxu0
  %2189 = vdwg.mxu0
  %2190 = vrot.lane.b32.xlu0 %v2097, 96
  %v2191 = vpop.permute.xlu0 %2190
  %v2192 = vsel %vm305, %v2097, 0
  %v2194 = vsel %vm305, %v2191, 0
  %2196 = vmatprep.subr.mxu0 0.0
  %2197 = vmatpush1.xpose.msra.mxu0 %v2194
  %2198 = vmatprep.subr.mxu0 0.0
  %2199 = vmatpush1.xpose.msra.mxu0 0.0
  %2200 = vmatprep.subr.mxu0 0.0
  %2201 = vmatpush1.xpose.msra.mxu0 0.0
  %2202 = vmatprep.subr.mxu0 0.0
  %2203 = vmatpush1.xpose.msra.mxu0 0.0
  %2204 = vmatprep.subr.mxu0 0.0
  %2205 = vmatpush1.xpose.msra.mxu0 0.0
  %2206 = vmatprep.subr.mxu0 0.0
  %2207 = vmatpush1.xpose.msra.mxu0 0.0
  %2208 = vmatprep.subr.mxu0 0.0
  %2209 = vmatpush1.xpose.msra.mxu0 0.0
  %2210 = vmatprep.subr.mxu0 0.0
  %2211 = vmatpush1.xpose.msra.mxu0 0.0
  %2212 = vmatprep.subr.mxu0 0.0
  %2213 = vmatpush1.xpose.msra.mxu0 0.0
  %2214 = vmatprep.subr.mxu0 0.0
  %2215 = vmatpush1.xpose.msra.mxu0 0.0
  %2216 = vmatprep.subr.mxu0 0.0
  %2217 = vmatpush1.xpose.msra.mxu0 0.0
  %2218 = vmatprep.subr.mxu0 0.0
  %2219 = vmatpush1.xpose.msra.mxu0 0.0
  %2220 = vmatprep.subr.mxu0 0.0
  %2221 = vmatpush1.xpose.msra.mxu0 0.0
  %2222 = vmatprep.subr.mxu0 0.0
  %2223 = vmatpush1.xpose.msra.mxu0 0.0
  %2224 = vmatprep.subr.mxu0 0.0
  %2225 = vmatpush1.xpose.msra.mxu0 0.0
  %2226 = vmatprep.subr.mxu0 0.0
  %2227 = vmatpush1.xpose.msra.mxu0 0.0
  %2228 = vmatprep.subr.mxu0 0.0
  %2229 = vmatpush1.xpose.msra.mxu0 0.0
  %2230 = vmatprep.subr.mxu0 0.0
  %2231 = vmatpush1.xpose.msra.mxu0 0.0
  %2232 = vmatprep.subr.mxu0 0.0
  %2233 = vmatpush1.xpose.msra.mxu0 0.0
  %2234 = vmatprep.subr.mxu0 0.0
  %2235 = vmatpush1.xpose.msra.mxu0 0.0
  %2236 = vmatprep.subr.mxu0 0.0
  %2237 = vmatpush1.xpose.msra.mxu0 0.0
  %2238 = vmatprep.subr.mxu0 0.0
  %2239 = vmatpush1.xpose.msra.mxu0 0.0
  %2240 = vmatprep.subr.mxu0 0.0
  %2241 = vmatpush1.xpose.msra.mxu0 0.0
  %2242 = vmatprep.subr.mxu0 0.0
  %2243 = vmatpush1.xpose.msra.mxu0 0.0
  %2244 = vmatprep.subr.mxu0 0.0
  %2245 = vmatpush1.xpose.msra.mxu0 0.0
  %2246 = vmatprep.subr.mxu0 0.0
  %2247 = vmatpush1.xpose.msra.mxu0 0.0
  %2248 = vmatprep.subr.mxu0 0.0
  %2249 = vmatpush1.xpose.msra.mxu0 0.0
  %2250 = vmatprep.subr.mxu0 0.0
  %2251 = vmatpush1.xpose.msra.mxu0 0.0
  %2252 = vmatprep.subr.mxu0 0.0
  %2253 = vmatpush1.xpose.msra.mxu0 0.0
  %2254 = vmatprep.subr.mxu0 0.0
  %2255 = vmatpush1.xpose.msra.mxu0 0.0
  %2256 = vmatprep.subr.mxu0 0.0
  %2257 = vmatpush1.xpose.msra.mxu0 0.0
  %2258 = vmatprep.subr.mxu0 0.0
  %2259 = vmatpush1.xpose.msra.mxu0 0.0
  %2260 = vmatprep.mubr.f32.mxu0 0.0
  %2261 = vmatmul.mubr.f32.gmra.mrb[0].mxu0 %v2192
  %v2262 = vpop.f32.mrb[0].mxu0
  %v2263 = vadd.f32 0.0, %v2262
  %v2264 = vpop.f32.mrb[0].mxu0
  %2265 = vdwg.mxu0
  %2266 = vrot.lane.b32.xlu0 %v2103, 96
  %v2267 = vpop.permute.xlu0 %2266
  %v2268 = vsel %vm305, %v2103, 0
  %v2270 = vsel %vm305, %v2267, 0
  %2272 = vmatprep.subr.mxu0 0.0
  %2273 = vmatpush1.xpose.msra.mxu0 %v2270
  %2274 = vmatprep.subr.mxu0 0.0
  %2275 = vmatpush1.xpose.msra.mxu0 0.0
  %2276 = vmatprep.subr.mxu0 0.0
  %2277 = vmatpush1.xpose.msra.mxu0 0.0
  %2278 = vmatprep.subr.mxu0 0.0
  %2279 = vmatpush1.xpose.msra.mxu0 0.0
  %2280 = vmatprep.subr.mxu0 0.0
  %2281 = vmatpush1.xpose.msra.mxu0 0.0
  %2282 = vmatprep.subr.mxu0 0.0
  %2283 = vmatpush1.xpose.msra.mxu0 0.0
  %2284 = vmatprep.subr.mxu0 0.0
  %2285 = vmatpush1.xpose.msra.mxu0 0.0
  %2286 = vmatprep.subr.mxu0 0.0
  %2287 = vmatpush1.xpose.msra.mxu0 0.0
  %2288 = vmatprep.subr.mxu0 0.0
  %2289 = vmatpush1.xpose.msra.mxu0 0.0
  %2290 = vmatprep.subr.mxu0 0.0
  %2291 = vmatpush1.xpose.msra.mxu0 0.0
  %2292 = vmatprep.subr.mxu0 0.0
  %2293 = vmatpush1.xpose.msra.mxu0 0.0
  %2294 = vmatprep.subr.mxu0 0.0
  %2295 = vmatpush1.xpose.msra.mxu0 0.0
  %2296 = vmatprep.subr.mxu0 0.0
  %2297 = vmatpush1.xpose.msra.mxu0 0.0
  %2298 = vmatprep.subr.mxu0 0.0
  %2299 = vmatpush1.xpose.msra.mxu0 0.0
  %2300 = vmatprep.subr.mxu0 0.0
  %2301 = vmatpush1.xpose.msra.mxu0 0.0
  %2302 = vmatprep.subr.mxu0 0.0
  %2303 = vmatpush1.xpose.msra.mxu0 0.0
  %2304 = vmatprep.subr.mxu0 0.0
  %2305 = vmatpush1.xpose.msra.mxu0 0.0
  %2306 = vmatprep.subr.mxu0 0.0
  %2307 = vmatpush1.xpose.msra.mxu0 0.0
  %2308 = vmatprep.subr.mxu0 0.0
  %2309 = vmatpush1.xpose.msra.mxu0 0.0
  %2310 = vmatprep.subr.mxu0 0.0
  %2311 = vmatpush1.xpose.msra.mxu0 0.0
  %2312 = vmatprep.subr.mxu0 0.0
  %2313 = vmatpush1.xpose.msra.mxu0 0.0
  %2314 = vmatprep.subr.mxu0 0.0
  %2315 = vmatpush1.xpose.msra.mxu0 0.0
  %2316 = vmatprep.subr.mxu0 0.0
  %2317 = vmatpush1.xpose.msra.mxu0 0.0
  %2318 = vmatprep.subr.mxu0 0.0
  %2319 = vmatpush1.xpose.msra.mxu0 0.0
  %2320 = vmatprep.subr.mxu0 0.0
  %2321 = vmatpush1.xpose.msra.mxu0 0.0
  %2322 = vmatprep.subr.mxu0 0.0
  %2323 = vmatpush1.xpose.msra.mxu0 0.0
  %2324 = vmatprep.subr.mxu0 0.0
  %2325 = vmatpush1.xpose.msra.mxu0 0.0
  %2326 = vmatprep.subr.mxu0 0.0
  %2327 = vmatpush1.xpose.msra.mxu0 0.0
  %2328 = vmatprep.subr.mxu0 0.0
  %2329 = vmatpush1.xpose.msra.mxu0 0.0
  %2330 = vmatprep.subr.mxu0 0.0
  %2331 = vmatpush1.xpose.msra.mxu0 0.0
  %2332 = vmatprep.subr.mxu0 0.0
  %2333 = vmatpush1.xpose.msra.mxu0 0.0
  %2334 = vmatprep.subr.mxu0 0.0
  %2335 = vmatpush1.xpose.msra.mxu0 0.0
  %2336 = vmatprep.mubr.f32.mxu0 0.0
  %2337 = vmatmul.mubr.f32.gmra.mrb[0].mxu0 %v2268
  %v2338 = vpop.f32.mrb[0].mxu0
  %v2339 = vadd.f32 0.0, %v2338
  %v2340 = vpop.f32.mrb[0].mxu0
  %2341 = vdwg.mxu0
  %2342 = vrot.lane.b32.xlu0 %v2105, 96
  %v2343 = vpop.permute.xlu0 %2342
  %v2344 = vsel %vm305, %v2105, 0
  %v2346 = vsel %vm305, %v2343, 0
  %2348 = vmatprep.subr.mxu0 0.0
  %2349 = vmatpush1.xpose.msra.mxu0 %v2346
  %2350 = vmatprep.subr.mxu0 0.0
  %2351 = vmatpush1.xpose.msra.mxu0 0.0
  %2352 = vmatprep.subr.mxu0 0.0
  %2353 = vmatpush1.xpose.msra.mxu0 0.0
  %2354 = vmatprep.subr.mxu0 0.0
  %2355 = vmatpush1.xpose.msra.mxu0 0.0
  %2356 = vmatprep.subr.mxu0 0.0
  %2357 = vmatpush1.xpose.msra.mxu0 0.0
  %2358 = vmatprep.subr.mxu0 0.0
  %2359 = vmatpush1.xpose.msra.mxu0 0.0
  %2360 = vmatprep.subr.mxu0 0.0
  %2361 = vmatpush1.xpose.msra.mxu0 0.0
  %2362 = vmatprep.subr.mxu0 0.0
  %2363 = vmatpush1.xpose.msra.mxu0 0.0
  %2364 = vmatprep.subr.mxu0 0.0
  %2365 = vmatpush1.xpose.msra.mxu0 0.0
  %2366 = vmatprep.subr.mxu0 0.0
  %2367 = vmatpush1.xpose.msra.mxu0 0.0
  %2368 = vmatprep.subr.mxu0 0.0
  %2369 = vmatpush1.xpose.msra.mxu0 0.0
  %2370 = vmatprep.subr.mxu0 0.0
  %2371 = vmatpush1.xpose.msra.mxu0 0.0
  %2372 = vmatprep.subr.mxu0 0.0
  %2373 = vmatpush1.xpose.msra.mxu0 0.0
  %2374 = vmatprep.subr.mxu0 0.0
  %2375 = vmatpush1.xpose.msra.mxu0 0.0
  %2376 = vmatprep.subr.mxu0 0.0
  %2377 = vmatpush1.xpose.msra.mxu0 0.0
  %2378 = vmatprep.subr.mxu0 0.0
  %2379 = vmatpush1.xpose.msra.mxu0 0.0
  %2380 = vmatprep.subr.mxu0 0.0
  %2381 = vmatpush1.xpose.msra.mxu0 0.0
  %2382 = vmatprep.subr.mxu0 0.0
  %2383 = vmatpush1.xpose.msra.mxu0 0.0
  %2384 = vmatprep.subr.mxu0 0.0
  %2385 = vmatpush1.xpose.msra.mxu0 0.0
  %2386 = vmatprep.subr.mxu0 0.0
  %2387 = vmatpush1.xpose.msra.mxu0 0.0
  %2388 = vmatprep.subr.mxu0 0.0
  %2389 = vmatpush1.xpose.msra.mxu0 0.0
  %2390 = vmatprep.subr.mxu0 0.0
  %2391 = vmatpush1.xpose.msra.mxu0 0.0
  %2392 = vmatprep.subr.mxu0 0.0
  %2393 = vmatpush1.xpose.msra.mxu0 0.0
  %2394 = vmatprep.subr.mxu0 0.0
  %2395 = vmatpush1.xpose.msra.mxu0 0.0
  %2396 = vmatprep.subr.mxu0 0.0
  %2397 = vmatpush1.xpose.msra.mxu0 0.0
  %2398 = vmatprep.subr.mxu0 0.0
  %2399 = vmatpush1.xpose.msra.mxu0 0.0
  %2400 = vmatprep.subr.mxu0 0.0
  %2401 = vmatpush1.xpose.msra.mxu0 0.0
  %2402 = vmatprep.subr.mxu0 0.0
  %2403 = vmatpush1.xpose.msra.mxu0 0.0
  %2404 = vmatprep.subr.mxu0 0.0
  %2405 = vmatpush1.xpose.msra.mxu0 0.0
  %2406 = vmatprep.subr.mxu0 0.0
  %2407 = vmatpush1.xpose.msra.mxu0 0.0
  %2408 = vmatprep.subr.mxu0 0.0
  %2409 = vmatpush1.xpose.msra.mxu0 0.0
  %2410 = vmatprep.subr.mxu0 0.0
  %2411 = vmatpush1.xpose.msra.mxu0 0.0
  %2412 = vmatprep.mubr.f32.mxu0 0.0
  %2413 = vmatmul.mubr.f32.gmra.mrb[0].mxu0 %v2344
  %v2414 = vpop.f32.mrb[0].mxu0
  %v2415 = vadd.f32 0.0, %v2414
  %v2416 = vpop.f32.mrb[0].mxu0
  %2417 = vdwg.mxu0
  %2418 = vrot.lane.b32.xlu0 %v2107, 96
  %v2419 = vpop.permute.xlu0 %2418
  %v2420 = vsel %vm305, %v2107, 0
  %v2422 = vsel %vm305, %v2419, 0
  %2424 = vmatprep.subr.mxu0 0.0
  %2425 = vmatpush1.xpose.msra.mxu0 %v2422
  %2426 = vmatprep.subr.mxu0 0.0
  %2427 = vmatpush1.xpose.msra.mxu0 0.0
  %2428 = vmatprep.subr.mxu0 0.0
  %2429 = vmatpush1.xpose.msra.mxu0 0.0
  %2430 = vmatprep.subr.mxu0 0.0
  %2431 = vmatpush1.xpose.msra.mxu0 0.0
  %2432 = vmatprep.subr.mxu0 0.0
  %2433 = vmatpush1.xpose.msra.mxu0 0.0
  %2434 = vmatprep.subr.mxu0 0.0
  %2435 = vmatpush1.xpose.msra.mxu0 0.0
  %2436 = vmatprep.subr.mxu0 0.0
  %2437 = vmatpush1.xpose.msra.mxu0 0.0
  %2438 = vmatprep.subr.mxu0 0.0
  %2439 = vmatpush1.xpose.msra.mxu0 0.0
  %2440 = vmatprep.subr.mxu0 0.0
  %2441 = vmatpush1.xpose.msra.mxu0 0.0
  %2442 = vmatprep.subr.mxu0 0.0
  %2443 = vmatpush1.xpose.msra.mxu0 0.0
  %2444 = vmatprep.subr.mxu0 0.0
  %2445 = vmatpush1.xpose.msra.mxu0 0.0
  %2446 = vmatprep.subr.mxu0 0.0
  %2447 = vmatpush1.xpose.msra.mxu0 0.0
  %2448 = vmatprep.subr.mxu0 0.0
  %2449 = vmatpush1.xpose.msra.mxu0 0.0
  %2450 = vmatprep.subr.mxu0 0.0
  %2451 = vmatpush1.xpose.msra.mxu0 0.0
  %2452 = vmatprep.subr.mxu0 0.0
  %2453 = vmatpush1.xpose.msra.mxu0 0.0
  %2454 = vmatprep.subr.mxu0 0.0
  %2455 = vmatpush1.xpose.msra.mxu0 0.0
  %2456 = vmatprep.subr.mxu0 0.0
  %2457 = vmatpush1.xpose.msra.mxu0 0.0
  %2458 = vmatprep.subr.mxu0 0.0
  %2459 = vmatpush1.xpose.msra.mxu0 0.0
  %2460 = vmatprep.subr.mxu0 0.0
  %2461 = vmatpush1.xpose.msra.mxu0 0.0
  %2462 = vmatprep.subr.mxu0 0.0
  %2463 = vmatpush1.xpose.msra.mxu0 0.0
  %2464 = vmatprep.subr.mxu0 0.0
  %2465 = vmatpush1.xpose.msra.mxu0 0.0
  %2466 = vmatprep.subr.mxu0 0.0
  %2467 = vmatpush1.xpose.msra.mxu0 0.0
  %2468 = vmatprep.subr.mxu0 0.0
  %2469 = vmatpush1.xpose.msra.mxu0 0.0
  %2470 = vmatprep.subr.mxu0 0.0
  %2471 = vmatpush1.xpose.msra.mxu0 0.0
  %2472 = vmatprep.subr.mxu0 0.0
  %2473 = vmatpush1.xpose.msra.mxu0 0.0
  %2474 = vmatprep.subr.mxu0 0.0
  %2475 = vmatpush1.xpose.msra.mxu0 0.0
  %2476 = vmatprep.subr.mxu0 0.0
  %2477 = vmatpush1.xpose.msra.mxu0 0.0
  %2478 = vmatprep.subr.mxu0 0.0
  %2479 = vmatpush1.xpose.msra.mxu0 0.0
  %2480 = vmatprep.subr.mxu0 0.0
  %2481 = vmatpush1.xpose.msra.mxu0 0.0
  %2482 = vmatprep.subr.mxu0 0.0
  %2483 = vmatpush1.xpose.msra.mxu0 0.0
  %2484 = vmatprep.subr.mxu0 0.0
  %2485 = vmatpush1.xpose.msra.mxu0 0.0
  %2486 = vmatprep.subr.mxu0 0.0
  %2487 = vmatpush1.xpose.msra.mxu0 0.0
  %2488 = vmatprep.mubr.f32.mxu0 0.0
  %2489 = vmatmul.mubr.f32.gmra.mrb[0].mxu0 %v2420
  %v2490 = vpop.f32.mrb[0].mxu0
  %v2491 = vadd.f32 0.0, %v2490
  %v2492 = vpop.f32.mrb[0].mxu0
  %2493 = vdwg.mxu0
  %2494 = vrot.lane.b32.xlu0 %v2109, 96
  %v2495 = vpop.permute.xlu0 %2494
  %v2496 = vsel %vm305, %v2109, 0
  %v2498 = vsel %vm305, %v2495, 0
  %2500 = vmatprep.subr.mxu0 0.0
  %2501 = vmatpush1.xpose.msra.mxu0 %v2498
  %2502 = vmatprep.subr.mxu0 0.0
  %2503 = vmatpush1.xpose.msra.mxu0 0.0
  %2504 = vmatprep.subr.mxu0 0.0
  %2505 = vmatpush1.xpose.msra.mxu0 0.0
  %2506 = vmatprep.subr.mxu0 0.0
  %2507 = vmatpush1.xpose.msra.mxu0 0.0
  %2508 = vmatprep.subr.mxu0 0.0
  %2509 = vmatpush1.xpose.msra.mxu0 0.0
  %2510 = vmatprep.subr.mxu0 0.0
  %2511 = vmatpush1.xpose.msra.mxu0 0.0
  %2512 = vmatprep.subr.mxu0 0.0
  %2513 = vmatpush1.xpose.msra.mxu0 0.0
  %2514 = vmatprep.subr.mxu0 0.0
  %2515 = vmatpush1.xpose.msra.mxu0 0.0
  %2516 = vmatprep.subr.mxu0 0.0
  %2517 = vmatpush1.xpose.msra.mxu0 0.0
  %2518 = vmatprep.subr.mxu0 0.0
  %2519 = vmatpush1.xpose.msra.mxu0 0.0
  %2520 = vmatprep.subr.mxu0 0.0
  %2521 = vmatpush1.xpose.msra.mxu0 0.0
  %2522 = vmatprep.subr.mxu0 0.0
  %2523 = vmatpush1.xpose.msra.mxu0 0.0
  %2524 = vmatprep.subr.mxu0 0.0
  %2525 = vmatpush1.xpose.msra.mxu0 0.0
  %2526 = vmatprep.subr.mxu0 0.0
  %2527 = vmatpush1.xpose.msra.mxu0 0.0
  %2528 = vmatprep.subr.mxu0 0.0
  %2529 = vmatpush1.xpose.msra.mxu0 0.0
  %2530 = vmatprep.subr.mxu0 0.0
  %2531 = vmatpush1.xpose.msra.mxu0 0.0
  %2532 = vmatprep.subr.mxu0 0.0
  %2533 = vmatpush1.xpose.msra.mxu0 0.0
  %2534 = vmatprep.subr.mxu0 0.0
  %2535 = vmatpush1.xpose.msra.mxu0 0.0
  %2536 = vmatprep.subr.mxu0 0.0
  %2537 = vmatpush1.xpose.msra.mxu0 0.0
  %2538 = vmatprep.subr.mxu0 0.0
  %2539 = vmatpush1.xpose.msra.mxu0 0.0
  %2540 = vmatprep.subr.mxu0 0.0
  %2541 = vmatpush1.xpose.msra.mxu0 0.0
  %2542 = vmatprep.subr.mxu0 0.0
  %2543 = vmatpush1.xpose.msra.mxu0 0.0
  %2544 = vmatprep.subr.mxu0 0.0
  %2545 = vmatpush1.xpose.msra.mxu0 0.0
  %2546 = vmatprep.subr.mxu0 0.0
  %2547 = vmatpush1.xpose.msra.mxu0 0.0
  %2548 = vmatprep.subr.mxu0 0.0
  %2549 = vmatpush1.xpose.msra.mxu0 0.0
  %2550 = vmatprep.subr.mxu0 0.0
  %2551 = vmatpush1.xpose.msra.mxu0 0.0
  %2552 = vmatprep.subr.mxu0 0.0
  %2553 = vmatpush1.xpose.msra.mxu0 0.0
  %2554 = vmatprep.subr.mxu0 0.0
  %2555 = vmatpush1.xpose.msra.mxu0 0.0
  %2556 = vmatprep.subr.mxu0 0.0
  %2557 = vmatpush1.xpose.msra.mxu0 0.0
  %2558 = vmatprep.subr.mxu0 0.0
  %2559 = vmatpush1.xpose.msra.mxu0 0.0
  %2560 = vmatprep.subr.mxu0 0.0
  %2561 = vmatpush1.xpose.msra.mxu0 0.0
  %2562 = vmatprep.subr.mxu0 0.0
  %2563 = vmatpush1.xpose.msra.mxu0 0.0
  %2564 = vmatprep.mubr.f32.mxu0 0.0
  %2565 = vmatmul.mubr.f32.gmra.mrb[0].mxu0 %v2496
  %v2566 = vpop.f32.mrb[0].mxu0
  %v2567 = vadd.f32 0.0, %v2566
  %v2568 = vpop.f32.mrb[0].mxu0
  %2569 = vdwg.mxu0
  %2570 = vrot.lane.b32.xlu0 %v2111, 96
  %v2571 = vpop.permute.xlu0 %2570
  %v2572 = vsel %vm305, %v2111, 0
  %v2574 = vsel %vm305, %v2571, 0
  %2576 = vmatprep.subr.mxu0 0.0
  %2577 = vmatpush1.xpose.msra.mxu0 %v2574
  %2578 = vmatprep.subr.mxu0 0.0
  %2579 = vmatpush1.xpose.msra.mxu0 0.0
  %2580 = vmatprep.subr.mxu0 0.0
  %2581 = vmatpush1.xpose.msra.mxu0 0.0
  %2582 = vmatprep.subr.mxu0 0.0
  %2583 = vmatpush1.xpose.msra.mxu0 0.0
  %2584 = vmatprep.subr.mxu0 0.0
  %2585 = vmatpush1.xpose.msra.mxu0 0.0
  %2586 = vmatprep.subr.mxu0 0.0
  %2587 = vmatpush1.xpose.msra.mxu0 0.0
  %2588 = vmatprep.subr.mxu0 0.0
  %2589 = vmatpush1.xpose.msra.mxu0 0.0
  %2590 = vmatprep.subr.mxu0 0.0
  %2591 = vmatpush1.xpose.msra.mxu0 0.0
  %2592 = vmatprep.subr.mxu0 0.0
  %2593 = vmatpush1.xpose.msra.mxu0 0.0
  %2594 = vmatprep.subr.mxu0 0.0
  %2595 = vmatpush1.xpose.msra.mxu0 0.0
  %2596 = vmatprep.subr.mxu0 0.0
  %2597 = vmatpush1.xpose.msra.mxu0 0.0
  %2598 = vmatprep.subr.mxu0 0.0
  %2599 = vmatpush1.xpose.msra.mxu0 0.0
  %2600 = vmatprep.subr.mxu0 0.0
  %2601 = vmatpush1.xpose.msra.mxu0 0.0
  %2602 = vmatprep.subr.mxu0 0.0
  %2603 = vmatpush1.xpose.msra.mxu0 0.0
  %2604 = vmatprep.subr.mxu0 0.0
  %2605 = vmatpush1.xpose.msra.mxu0 0.0
  %2606 = vmatprep.subr.mxu0 0.0
  %2607 = vmatpush1.xpose.msra.mxu0 0.0
  %2608 = vmatprep.subr.mxu0 0.0
  %2609 = vmatpush1.xpose.msra.mxu0 0.0
  %2610 = vmatprep.subr.mxu0 0.0
  %2611 = vmatpush1.xpose.msra.mxu0 0.0
  %2612 = vmatprep.subr.mxu0 0.0
  %2613 = vmatpush1.xpose.msra.mxu0 0.0
  %2614 = vmatprep.subr.mxu0 0.0
  %2615 = vmatpush1.xpose.msra.mxu0 0.0
  %2616 = vmatprep.subr.mxu0 0.0
  %2617 = vmatpush1.xpose.msra.mxu0 0.0
  %2618 = vmatprep.subr.mxu0 0.0
  %2619 = vmatpush1.xpose.msra.mxu0 0.0
  %2620 = vmatprep.subr.mxu0 0.0
  %2621 = vmatpush1.xpose.msra.mxu0 0.0
  %2622 = vmatprep.subr.mxu0 0.0
  %2623 = vmatpush1.xpose.msra.mxu0 0.0
  %2624 = vmatprep.subr.mxu0 0.0
  %2625 = vmatpush1.xpose.msra.mxu0 0.0
  %2626 = vmatprep.subr.mxu0 0.0
  %2627 = vmatpush1.xpose.msra.mxu0 0.0
  %2628 = vmatprep.subr.mxu0 0.0
  %2629 = vmatpush1.xpose.msra.mxu0 0.0
  %2630 = vmatprep.subr.mxu0 0.0
  %2631 = vmatpush1.xpose.msra.mxu0 0.0
  %2632 = vmatprep.subr.mxu0 0.0
  %2633 = vmatpush1.xpose.msra.mxu0 0.0
  %2634 = vmatprep.subr.mxu0 0.0
  %2635 = vmatpush1.xpose.msra.mxu0 0.0
  %2636 = vmatprep.subr.mxu0 0.0
  %2637 = vmatpush1.xpose.msra.mxu0 0.0
  %2638 = vmatprep.subr.mxu0 0.0
  %2639 = vmatpush1.xpose.msra.mxu0 0.0
  %2640 = vmatprep.mubr.f32.mxu0 0.0
  %2641 = vmatmul.mubr.f32.gmra.mrb[0].mxu0 %v2572
  %v2642 = vpop.f32.mrb[0].mxu0
  %v2643 = vadd.f32 0.0, %v2642
  %v2644 = vpop.f32.mrb[0].mxu0
  %2645 = vdwg.mxu0
  %2646 = vrot.lane.b32.xlu0 %v2113, 96
  %v2647 = vpop.permute.xlu0 %2646
  %v2648 = vsel %vm305, %v2113, 0
  %v2650 = vsel %vm305, %v2647, 0
  %2652 = vmatprep.subr.mxu0 0.0
  %2653 = vmatpush1.xpose.msra.mxu0 %v2650
  %2654 = vmatprep.subr.mxu0 0.0
  %2655 = vmatpush1.xpose.msra.mxu0 0.0
  %2656 = vmatprep.subr.mxu0 0.0
  %2657 = vmatpush1.xpose.msra.mxu0 0.0
  %2658 = vmatprep.subr.mxu0 0.0
  %2659 = vmatpush1.xpose.msra.mxu0 0.0
  %2660 = vmatprep.subr.mxu0 0.0
  %2661 = vmatpush1.xpose.msra.mxu0 0.0
  %2662 = vmatprep.subr.mxu0 0.0
  %2663 = vmatpush1.xpose.msra.mxu0 0.0
  %2664 = vmatprep.subr.mxu0 0.0
  %2665 = vmatpush1.xpose.msra.mxu0 0.0
  %2666 = vmatprep.subr.mxu0 0.0
  %2667 = vmatpush1.xpose.msra.mxu0 0.0
  %2668 = vmatprep.subr.mxu0 0.0
  %2669 = vmatpush1.xpose.msra.mxu0 0.0
  %2670 = vmatprep.subr.mxu0 0.0
  %2671 = vmatpush1.xpose.msra.mxu0 0.0
  %2672 = vmatprep.subr.mxu0 0.0
  %2673 = vmatpush1.xpose.msra.mxu0 0.0
  %2674 = vmatprep.subr.mxu0 0.0
  %2675 = vmatpush1.xpose.msra.mxu0 0.0
  %2676 = vmatprep.subr.mxu0 0.0
  %2677 = vmatpush1.xpose.msra.mxu0 0.0
  %2678 = vmatprep.subr.mxu0 0.0
  %2679 = vmatpush1.xpose.msra.mxu0 0.0
  %2680 = vmatprep.subr.mxu0 0.0
  %2681 = vmatpush1.xpose.msra.mxu0 0.0
  %2682 = vmatprep.subr.mxu0 0.0
  %2683 = vmatpush1.xpose.msra.mxu0 0.0
  %2684 = vmatprep.subr.mxu0 0.0
  %2685 = vmatpush1.xpose.msra.mxu0 0.0
  %2686 = vmatprep.subr.mxu0 0.0
  %2687 = vmatpush1.xpose.msra.mxu0 0.0
  %2688 = vmatprep.subr.mxu0 0.0
  %2689 = vmatpush1.xpose.msra.mxu0 0.0
  %2690 = vmatprep.subr.mxu0 0.0
  %2691 = vmatpush1.xpose.msra.mxu0 0.0
  %2692 = vmatprep.subr.mxu0 0.0
  %2693 = vmatpush1.xpose.msra.mxu0 0.0
  %2694 = vmatprep.subr.mxu0 0.0
  %2695 = vmatpush1.xpose.msra.mxu0 0.0
  %2696 = vmatprep.subr.mxu0 0.0
  %2697 = vmatpush1.xpose.msra.mxu0 0.0
  %2698 = vmatprep.subr.mxu0 0.0
  %2699 = vmatpush1.xpose.msra.mxu0 0.0
  %2700 = vmatprep.subr.mxu0 0.0
  %2701 = vmatpush1.xpose.msra.mxu0 0.0
  %2702 = vmatprep.subr.mxu0 0.0
  %2703 = vmatpush1.xpose.msra.mxu0 0.0
  %2704 = vmatprep.subr.mxu0 0.0
  %2705 = vmatpush1.xpose.msra.mxu0 0.0
  %2706 = vmatprep.subr.mxu0 0.0
  %2707 = vmatpush1.xpose.msra.mxu0 0.0
  %2708 = vmatprep.subr.mxu0 0.0
  %2709 = vmatpush1.xpose.msra.mxu0 0.0
  %2710 = vmatprep.subr.mxu0 0.0
  %2711 = vmatpush1.xpose.msra.mxu0 0.0
  %2712 = vmatprep.subr.mxu0 0.0
  %2713 = vmatpush1.xpose.msra.mxu0 0.0
  %2714 = vmatprep.subr.mxu0 0.0
  %2715 = vmatpush1.xpose.msra.mxu0 0.0
  %2716 = vmatprep.mubr.f32.mxu0 0.0
  %2717 = vmatmul.mubr.f32.gmra.mrb[0].mxu0 %v2648
  %v2718 = vpop.f32.mrb[0].mxu0
  %v2719 = vadd.f32 0.0, %v2718
  %v2720 = vpop.f32.mrb[0].mxu0
  %2721 = vdwg.mxu0
  %v2722 = vmul.f32 %v2187, 0.35355338
  %v2723 = vmul.f32 %v2263, 0.35355338
  %v2724 = vmul.f32 %v2339, 0.35355338
  %v2725 = vmul.f32 %v2415, 0.35355338
  %v2726 = vmul.f32 %v2491, 0.35355338
  %v2727 = vmul.f32 %v2567, 0.35355338
  %v2728 = vmul.f32 %v2643, 0.35355338
  %v2729 = vmul.f32 %v2719, 0.35355338
  %v2730 = vsel %vm305, %v2722, -inf
  %2731 = vmax.xlane.f32.xlu0 %v2730
  %v2732 = vpop.xlane.xlu0 %2731
  %v2733 = vsel %vm305, %v2723, -inf
  %2734 = vmax.xlane.f32.xlu0 %v2733
  %v2735 = vpop.xlane.xlu0 %2734
  %v2736 = vsel %vm305, %v2724, -inf
  %2737 = vmax.xlane.f32.xlu0 %v2736
  %v2738 = vpop.xlane.xlu0 %2737
  %v2739 = vsel %vm305, %v2725, -inf
  %2740 = vmax.xlane.f32.xlu0 %v2739
  %v2741 = vpop.xlane.xlu0 %2740
  %v2742 = vsel %vm305, %v2726, -inf
  %2743 = vmax.xlane.f32.xlu0 %v2742
  %v2744 = vpop.xlane.xlu0 %2743
  %v2745 = vsel %vm305, %v2727, -inf
  %2746 = vmax.xlane.f32.xlu0 %v2745
  %v2747 = vpop.xlane.xlu0 %2746
  %v2748 = vsel %vm305, %v2728, -inf
  %2749 = vmax.xlane.f32.xlu0 %v2748
  %v2750 = vpop.xlane.xlu0 %2749
  %v2751 = vsel %vm305, %v2729, -inf
  %2752 = vmax.xlane.f32.xlu0 %v2751
  %v2753 = vpop.xlane.xlu0 %2752
  %v2754 = vsub.f32 %v2722, %v2732
  %v2755 = vsub.f32 %v2723, %v2735
  %v2756 = vsub.f32 %v2724, %v2738
  %v2757 = vsub.f32 %v2725, %v2741
  %v2758 = vsub.f32 %v2726, %v2744
  %v2759 = vsub.f32 %v2727, %v2747
  %v2760 = vsub.f32 %v2728, %v2750
  %v2761 = vsub.f32 %v2729, %v2753
  %v2762 = vmul.f32 %v2754, 1.442695
  %v2763 = vpow.pop %v2762
  %v2764 = vmul.f32 %v2755, 1.442695
  %v2765 = vpow.pop %v2764
  %v2766 = vmul.f32 %v2756, 1.442695
  %v2767 = vpow.pop %v2766
  %v2768 = vmul.f32 %v2757, 1.442695
  %v2769 = vpow.pop %v2768
  %v2770 = vmul.f32 %v2758, 1.442695
  %v2771 = vpow.pop %v2770
  %v2772 = vmul.f32 %v2759, 1.442695
  %v2773 = vpow.pop %v2772
  %v2774 = vmul.f32 %v2760, 1.442695
  %v2775 = vpow.pop %v2774
  %v2776 = vmul.f32 %v2761, 1.442695
  %v2777 = vpow.pop %v2776
  %v2778 = vsel %vm305, %v2763, 0.0
  %2779 = vadd.xlane.f32.xlu0 %v2778
  %v2780 = vpop.xlane.xlu0 %2779
  %v2781 = vsel %vm305, %v2765, 0.0
  %2782 = vadd.xlane.f32.xlu0 %v2781
  %v2783 = vpop.xlane.xlu0 %2782
  %v2784 = vsel %vm305, %v2767, 0.0
  %2785 = vadd.xlane.f32.xlu0 %v2784
  %v2786 = vpop.xlane.xlu0 %2785
  %v2787 = vsel %vm305, %v2769, 0.0
  %2788 = vadd.xlane.f32.xlu0 %v2787
  %v2789 = vpop.xlane.xlu0 %2788
  %v2790 = vsel %vm305, %v2771, 0.0
  %2791 = vadd.xlane.f32.xlu0 %v2790
  %v2792 = vpop.xlane.xlu0 %2791
  %v2793 = vsel %vm305, %v2773, 0.0
  %2794 = vadd.xlane.f32.xlu0 %v2793
  %v2795 = vpop.xlane.xlu0 %2794
  %v2796 = vsel %vm305, %v2775, 0.0
  %2797 = vadd.xlane.f32.xlu0 %v2796
  %v2798 = vpop.xlane.xlu0 %2797
  %v2799 = vsel %vm305, %v2777, 0.0
  %2800 = vadd.xlane.f32.xlu0 %v2799
  %v2801 = vpop.xlane.xlu0 %2800
  %v2802 = vrcp.pop %v2780
  %v2803 = vrcp.pop %v2783
  %v2804 = vrcp.pop %v2786
  %v2805 = vrcp.pop %v2789
  %v2806 = vrcp.pop %v2792
  %v2807 = vrcp.pop %v2795
  %v2808 = vrcp.pop %v2798
  %v2809 = vrcp.pop %v2801
  %v2810 = vmul.f32 %v2763, %v2802
  %v2811 = vmul.f32 %v2765, %v2803
  %v2812 = vmul.f32 %v2767, %v2804
  %v2813 = vmul.f32 %v2769, %v2805
  %v2814 = vmul.f32 %v2771, %v2806
  %v2815 = vmul.f32 %v2773, %v2807
  %v2816 = vmul.f32 %v2775, %v2808
  %v2817 = vmul.f32 %v2777, %v2809
  %2818 = vrot.lane.b32.xlu0 %v2092, 64
  %v2819 = vpop.permute.xlu0 %2818
  %v2822 = vsel %vm305, %v2810, 0
  %2824 = vmatprep.subr.mxu0 0.0
  %2825 = vmatpush1.msra.mxu0 %v2819
  %2826 = vmatprep.subr.mxu0 0.0
  %2827 = vmatpush1.msra.mxu0 0.0
  %2828 = vmatprep.subr.mxu0 0.0
  %2829 = vmatpush1.msra.mxu0 0.0
  %2830 = vmatprep.subr.mxu0 0.0
  %2831 = vmatpush1.msra.mxu0 0.0
  %2832 = vmatprep.subr.mxu0 0.0
  %2833 = vmatpush1.msra.mxu0 0.0
  %2834 = vmatprep.subr.mxu0 0.0
  %2835 = vmatpush1.msra.mxu0 0.0
  %2836 = vmatprep.subr.mxu0 0.0
  %2837 = vmatpush1.msra.mxu0 0.0
  %2838 = vmatprep.subr.mxu0 0.0
  %2839 = vmatpush1.msra.mxu0 0.0
  %2840 = vmatprep.subr.mxu0 0.0
  %2841 = vmatpush1.msra.mxu0 0.0
  %2842 = vmatprep.subr.mxu0 0.0
  %2843 = vmatpush1.msra.mxu0 0.0
  %2844 = vmatprep.subr.mxu0 0.0
  %2845 = vmatpush1.msra.mxu0 0.0
  %2846 = vmatprep.subr.mxu0 0.0
  %2847 = vmatpush1.msra.mxu0 0.0
  %2848 = vmatprep.subr.mxu0 0.0
  %2849 = vmatpush1.msra.mxu0 0.0
  %2850 = vmatprep.subr.mxu0 0.0
  %2851 = vmatpush1.msra.mxu0 0.0
  %2852 = vmatprep.subr.mxu0 0.0
  %2853 = vmatpush1.msra.mxu0 0.0
  %2854 = vmatprep.subr.mxu0 0.0
  %2855 = vmatpush1.msra.mxu0 0.0
  %2856 = vmatprep.subr.mxu0 0.0
  %2857 = vmatpush1.msra.mxu0 0.0
  %2858 = vmatprep.subr.mxu0 0.0
  %2859 = vmatpush1.msra.mxu0 0.0
  %2860 = vmatprep.subr.mxu0 0.0
  %2861 = vmatpush1.msra.mxu0 0.0
  %2862 = vmatprep.subr.mxu0 0.0
  %2863 = vmatpush1.msra.mxu0 0.0
  %2864 = vmatprep.subr.mxu0 0.0
  %2865 = vmatpush1.msra.mxu0 0.0
  %2866 = vmatprep.subr.mxu0 0.0
  %2867 = vmatpush1.msra.mxu0 0.0
  %2868 = vmatprep.subr.mxu0 0.0
  %2869 = vmatpush1.msra.mxu0 0.0
  %2870 = vmatprep.subr.mxu0 0.0
  %2871 = vmatpush1.msra.mxu0 0.0
  %2872 = vmatprep.subr.mxu0 0.0
  %2873 = vmatpush1.msra.mxu0 0.0
  %2874 = vmatprep.subr.mxu0 0.0
  %2875 = vmatpush1.msra.mxu0 0.0
  %2876 = vmatprep.subr.mxu0 0.0
  %2877 = vmatpush1.msra.mxu0 0.0
  %2878 = vmatprep.subr.mxu0 0.0
  %2879 = vmatpush1.msra.mxu0 0.0
  %2880 = vmatprep.subr.mxu0 0.0
  %2881 = vmatpush1.msra.mxu0 0.0
  %2882 = vmatprep.subr.mxu0 0.0
  %2883 = vmatpush1.msra.mxu0 0.0
  %2884 = vmatprep.subr.mxu0 0.0
  %2885 = vmatpush1.msra.mxu0 0.0
  %2886 = vmatprep.subr.mxu0 0.0
  %2887 = vmatpush1.msra.mxu0 0.0
  %2888 = vmatprep.mubr.f32.mxu0 0.0
  %2889 = vmatmul.mubr.f32.gmra.mrb[0].mxu0 %v2822
  %v2890 = vpop.f32.mrb[0].mxu0
  %v2891 = vadd.f32 0.0, %v2890
  %v2892 = vpop.f32.mrb[0].mxu0
  %2893 = vdwg.mxu0
  %2894 = vrot.lane.b32.xlu0 %v2097, 64
  %v2895 = vpop.permute.xlu0 %2894
  %v2898 = vsel %vm305, %v2811, 0
  %2900 = vmatprep.subr.mxu0 0.0
  %2901 = vmatpush1.msra.mxu0 %v2895
  %2902 = vmatprep.subr.mxu0 0.0
  %2903 = vmatpush1.msra.mxu0 0.0
  %2904 = vmatprep.subr.mxu0 0.0
  %2905 = vmatpush1.msra.mxu0 0.0
  %2906 = vmatprep.subr.mxu0 0.0
  %2907 = vmatpush1.msra.mxu0 0.0
  %2908 = vmatprep.subr.mxu0 0.0
  %2909 = vmatpush1.msra.mxu0 0.0
  %2910 = vmatprep.subr.mxu0 0.0
  %2911 = vmatpush1.msra.mxu0 0.0
  %2912 = vmatprep.subr.mxu0 0.0
  %2913 = vmatpush1.msra.mxu0 0.0
  %2914 = vmatprep.subr.mxu0 0.0
  %2915 = vmatpush1.msra.mxu0 0.0
  %2916 = vmatprep.subr.mxu0 0.0
  %2917 = vmatpush1.msra.mxu0 0.0
  %2918 = vmatprep.subr.mxu0 0.0
  %2919 = vmatpush1.msra.mxu0 0.0
  %2920 = vmatprep.subr.mxu0 0.0
  %2921 = vmatpush1.msra.mxu0 0.0
  %2922 = vmatprep.subr.mxu0 0.0
  %2923 = vmatpush1.msra.mxu0 0.0
  %2924 = vmatprep.subr.mxu0 0.0
  %2925 = vmatpush1.msra.mxu0 0.0
  %2926 = vmatprep.subr.mxu0 0.0
  %2927 = vmatpush1.msra.mxu0 0.0
  %2928 = vmatprep.subr.mxu0 0.0
  %2929 = vmatpush1.msra.mxu0 0.0
  %2930 = vmatprep.subr.mxu0 0.0
  %2931 = vmatpush1.msra.mxu0 0.0
  %2932 = vmatprep.subr.mxu0 0.0
  %2933 = vmatpush1.msra.mxu0 0.0
  %2934 = vmatprep.subr.mxu0 0.0
  %2935 = vmatpush1.msra.mxu0 0.0
  %2936 = vmatprep.subr.mxu0 0.0
  %2937 = vmatpush1.msra.mxu0 0.0
  %2938 = vmatprep.subr.mxu0 0.0
  %2939 = vmatpush1.msra.mxu0 0.0
  %2940 = vmatprep.subr.mxu0 0.0
  %2941 = vmatpush1.msra.mxu0 0.0
  %2942 = vmatprep.subr.mxu0 0.0
  %2943 = vmatpush1.msra.mxu0 0.0
  %2944 = vmatprep.subr.mxu0 0.0
  %2945 = vmatpush1.msra.mxu0 0.0
  %2946 = vmatprep.subr.mxu0 0.0
  %2947 = vmatpush1.msra.mxu0 0.0
  %2948 = vmatprep.subr.mxu0 0.0
  %2949 = vmatpush1.msra.mxu0 0.0
  %2950 = vmatprep.subr.mxu0 0.0
  %2951 = vmatpush1.msra.mxu0 0.0
  %2952 = vmatprep.subr.mxu0 0.0
  %2953 = vmatpush1.msra.mxu0 0.0
  %2954 = vmatprep.subr.mxu0 0.0
  %2955 = vmatpush1.msra.mxu0 0.0
  %2956 = vmatprep.subr.mxu0 0.0
  %2957 = vmatpush1.msra.mxu0 0.0
  %2958 = vmatprep.subr.mxu0 0.0
  %2959 = vmatpush1.msra.mxu0 0.0
  %2960 = vmatprep.subr.mxu0 0.0
  %2961 = vmatpush1.msra.mxu0 0.0
  %2962 = vmatprep.subr.mxu0 0.0
  %2963 = vmatpush1.msra.mxu0 0.0
  %2964 = vmatprep.mubr.f32.mxu0 0.0
  %2965 = vmatmul.mubr.f32.gmra.mrb[0].mxu0 %v2898
  %v2966 = vpop.f32.mrb[0].mxu0
  %v2967 = vadd.f32 0.0, %v2966
  %v2968 = vpop.f32.mrb[0].mxu0
  %2969 = vdwg.mxu0
  %2970 = vrot.lane.b32.xlu0 %v2103, 64
  %v2971 = vpop.permute.xlu0 %2970
  %v2974 = vsel %vm305, %v2812, 0
  %2976 = vmatprep.subr.mxu0 0.0
  %2977 = vmatpush1.msra.mxu0 %v2971
  %2978 = vmatprep.subr.mxu0 0.0
  %2979 = vmatpush1.msra.mxu0 0.0
  %2980 = vmatprep.subr.mxu0 0.0
  %2981 = vmatpush1.msra.mxu0 0.0
  %2982 = vmatprep.subr.mxu0 0.0
  %2983 = vmatpush1.msra.mxu0 0.0
  %2984 = vmatprep.subr.mxu0 0.0
  %2985 = vmatpush1.msra.mxu0 0.0
  %2986 = vmatprep.subr.mxu0 0.0
  %2987 = vmatpush1.msra.mxu0 0.0
  %2988 = vmatprep.subr.mxu0 0.0
  %2989 = vmatpush1.msra.mxu0 0.0
  %2990 = vmatprep.subr.mxu0 0.0
  %2991 = vmatpush1.msra.mxu0 0.0
  %2992 = vmatprep.subr.mxu0 0.0
  %2993 = vmatpush1.msra.mxu0 0.0
  %2994 = vmatprep.subr.mxu0 0.0
  %2995 = vmatpush1.msra.mxu0 0.0
  %2996 = vmatprep.subr.mxu0 0.0
  %2997 = vmatpush1.msra.mxu0 0.0
  %2998 = vmatprep.subr.mxu0 0.0
  %2999 = vmatpush1.msra.mxu0 0.0
  %3000 = vmatprep.subr.mxu0 0.0
  %3001 = vmatpush1.msra.mxu0 0.0
  %3002 = vmatprep.subr.mxu0 0.0
  %3003 = vmatpush1.msra.mxu0 0.0
  %3004 = vmatprep.subr.mxu0 0.0
  %3005 = vmatpush1.msra.mxu0 0.0
  %3006 = vmatprep.subr.mxu0 0.0
  %3007 = vmatpush1.msra.mxu0 0.0
  %3008 = vmatprep.subr.mxu0 0.0
  %3009 = vmatpush1.msra.mxu0 0.0
  %3010 = vmatprep.subr.mxu0 0.0
  %3011 = vmatpush1.msra.mxu0 0.0
  %3012 = vmatprep.subr.mxu0 0.0
  %3013 = vmatpush1.msra.mxu0 0.0
  %3014 = vmatprep.subr.mxu0 0.0
  %3015 = vmatpush1.msra.mxu0 0.0
  %3016 = vmatprep.subr.mxu0 0.0
  %3017 = vmatpush1.msra.mxu0 0.0
  %3018 = vmatprep.subr.mxu0 0.0
  %3019 = vmatpush1.msra.mxu0 0.0
  %3020 = vmatprep.subr.mxu0 0.0
  %3021 = vmatpush1.msra.mxu0 0.0
  %3022 = vmatprep.subr.mxu0 0.0
  %3023 = vmatpush1.msra.mxu0 0.0
  %3024 = vmatprep.subr.mxu0 0.0
  %3025 = vmatpush1.msra.mxu0 0.0
  %3026 = vmatprep.subr.mxu0 0.0
  %3027 = vmatpush1.msra.mxu0 0.0
  %3028 = vmatprep.subr.mxu0 0.0
  %3029 = vmatpush1.msra.mxu0 0.0
  %3030 = vmatprep.subr.mxu0 0.0
  %3031 = vmatpush1.msra.mxu0 0.0
  %3032 = vmatprep.subr.mxu0 0.0
  %3033 = vmatpush1.msra.mxu0 0.0
  %3034 = vmatprep.subr.mxu0 0.0
  %3035 = vmatpush1.msra.mxu0 0.0
  %3036 = vmatprep.subr.mxu0 0.0
  %3037 = vmatpush1.msra.mxu0 0.0
  %3038 = vmatprep.subr.mxu0 0.0
  %3039 = vmatpush1.msra.mxu0 0.0
  %3040 = vmatprep.mubr.f32.mxu0 0.0
  %3041 = vmatmul.mubr.f32.gmra.mrb[0].mxu0 %v2974
  %v3042 = vpop.f32.mrb[0].mxu0
  %v3043 = vadd.f32 0.0, %v3042
  %v3044 = vpop.f32.mrb[0].mxu0
  %3045 = vdwg.mxu0
  %3046 = vrot.lane.b32.xlu0 %v2105, 64
  %v3047 = vpop.permute.xlu0 %3046
  %v3050 = vsel %vm305, %v2813, 0
  %3052 = vmatprep.subr.mxu0 0.0
  %3053 = vmatpush1.msra.mxu0 %v3047
  %3054 = vmatprep.subr.mxu0 0.0
  %3055 = vmatpush1.msra.mxu0 0.0
  %3056 = vmatprep.subr.mxu0 0.0
  %3057 = vmatpush1.msra.mxu0 0.0
  %3058 = vmatprep.subr.mxu0 0.0
  %3059 = vmatpush1.msra.mxu0 0.0
  %3060 = vmatprep.subr.mxu0 0.0
  %3061 = vmatpush1.msra.mxu0 0.0
  %3062 = vmatprep.subr.mxu0 0.0
  %3063 = vmatpush1.msra.mxu0 0.0
  %3064 = vmatprep.subr.mxu0 0.0
  %3065 = vmatpush1.msra.mxu0 0.0
  %3066 = vmatprep.subr.mxu0 0.0
  %3067 = vmatpush1.msra.mxu0 0.0
  %3068 = vmatprep.subr.mxu0 0.0
  %3069 = vmatpush1.msra.mxu0 0.0
  %3070 = vmatprep.subr.mxu0 0.0
  %3071 = vmatpush1.msra.mxu0 0.0
  %3072 = vmatprep.subr.mxu0 0.0
  %3073 = vmatpush1.msra.mxu0 0.0
  %3074 = vmatprep.subr.mxu0 0.0
  %3075 = vmatpush1.msra.mxu0 0.0
  %3076 = vmatprep.subr.mxu0 0.0
  %3077 = vmatpush1.msra.mxu0 0.0
  %3078 = vmatprep.subr.mxu0 0.0
  %3079 = vmatpush1.msra.mxu0 0.0
  %3080 = vmatprep.subr.mxu0 0.0
  %3081 = vmatpush1.msra.mxu0 0.0
  %3082 = vmatprep.subr.mxu0 0.0
  %3083 = vmatpush1.msra.mxu0 0.0
  %3084 = vmatprep.subr.mxu0 0.0
  %3085 = vmatpush1.msra.mxu0 0.0
  %3086 = vmatprep.subr.mxu0 0.0
  %3087 = vmatpush1.msra.mxu0 0.0
  %3088 = vmatprep.subr.mxu0 0.0
  %3089 = vmatpush1.msra.mxu0 0.0
  %3090 = vmatprep.subr.mxu0 0.0
  %3091 = vmatpush1.msra.mxu0 0.0
  %3092 = vmatprep.subr.mxu0 0.0
  %3093 = vmatpush1.msra.mxu0 0.0
  %3094 = vmatprep.subr.mxu0 0.0
  %3095 = vmatpush1.msra.mxu0 0.0
  %3096 = vmatprep.subr.mxu0 0.0
  %3097 = vmatpush1.msra.mxu0 0.0
  %3098 = vmatprep.subr.mxu0 0.0
  %3099 = vmatpush1.msra.mxu0 0.0
  %3100 = vmatprep.subr.mxu0 0.0
  %3101 = vmatpush1.msra.mxu0 0.0
  %3102 = vmatprep.subr.mxu0 0.0
  %3103 = vmatpush1.msra.mxu0 0.0
  %3104 = vmatprep.subr.mxu0 0.0
  %3105 = vmatpush1.msra.mxu0 0.0
  %3106 = vmatprep.subr.mxu0 0.0
  %3107 = vmatpush1.msra.mxu0 0.0
  %3108 = vmatprep.subr.mxu0 0.0
  %3109 = vmatpush1.msra.mxu0 0.0
  %3110 = vmatprep.subr.mxu0 0.0
  %3111 = vmatpush1.msra.mxu0 0.0
  %3112 = vmatprep.subr.mxu0 0.0
  %3113 = vmatpush1.msra.mxu0 0.0
  %3114 = vmatprep.subr.mxu0 0.0
  %3115 = vmatpush1.msra.mxu0 0.0
  %3116 = vmatprep.mubr.f32.mxu0 0.0
  %3117 = vmatmul.mubr.f32.gmra.mrb[0].mxu0 %v3050
  %v3118 = vpop.f32.mrb[0].mxu0
  %v3119 = vadd.f32 0.0, %v3118
  %v3120 = vpop.f32.mrb[0].mxu0
  %3121 = vdwg.mxu0
  %3122 = vrot.lane.b32.xlu0 %v2107, 64
  %v3123 = vpop.permute.xlu0 %3122
  %v3126 = vsel %vm305, %v2814, 0
  %3128 = vmatprep.subr.mxu0 0.0
  %3129 = vmatpush1.msra.mxu0 %v3123
  %3130 = vmatprep.subr.mxu0 0.0
  %3131 = vmatpush1.msra.mxu0 0.0
  %3132 = vmatprep.subr.mxu0 0.0
  %3133 = vmatpush1.msra.mxu0 0.0
  %3134 = vmatprep.subr.mxu0 0.0
  %3135 = vmatpush1.msra.mxu0 0.0
  %3136 = vmatprep.subr.mxu0 0.0
  %3137 = vmatpush1.msra.mxu0 0.0
  %3138 = vmatprep.subr.mxu0 0.0
  %3139 = vmatpush1.msra.mxu0 0.0
  %3140 = vmatprep.subr.mxu0 0.0
  %3141 = vmatpush1.msra.mxu0 0.0
  %3142 = vmatprep.subr.mxu0 0.0
  %3143 = vmatpush1.msra.mxu0 0.0
  %3144 = vmatprep.subr.mxu0 0.0
  %3145 = vmatpush1.msra.mxu0 0.0
  %3146 = vmatprep.subr.mxu0 0.0
  %3147 = vmatpush1.msra.mxu0 0.0
  %3148 = vmatprep.subr.mxu0 0.0
  %3149 = vmatpush1.msra.mxu0 0.0
  %3150 = vmatprep.subr.mxu0 0.0
  %3151 = vmatpush1.msra.mxu0 0.0
  %3152 = vmatprep.subr.mxu0 0.0
  %3153 = vmatpush1.msra.mxu0 0.0
  %3154 = vmatprep.subr.mxu0 0.0
  %3155 = vmatpush1.msra.mxu0 0.0
  %3156 = vmatprep.subr.mxu0 0.0
  %3157 = vmatpush1.msra.mxu0 0.0
  %3158 = vmatprep.subr.mxu0 0.0
  %3159 = vmatpush1.msra.mxu0 0.0
  %3160 = vmatprep.subr.mxu0 0.0
  %3161 = vmatpush1.msra.mxu0 0.0
  %3162 = vmatprep.subr.mxu0 0.0
  %3163 = vmatpush1.msra.mxu0 0.0
  %3164 = vmatprep.subr.mxu0 0.0
  %3165 = vmatpush1.msra.mxu0 0.0
  %3166 = vmatprep.subr.mxu0 0.0
  %3167 = vmatpush1.msra.mxu0 0.0
  %3168 = vmatprep.subr.mxu0 0.0
  %3169 = vmatpush1.msra.mxu0 0.0
  %3170 = vmatprep.subr.mxu0 0.0
  %3171 = vmatpush1.msra.mxu0 0.0
  %3172 = vmatprep.subr.mxu0 0.0
  %3173 = vmatpush1.msra.mxu0 0.0
  %3174 = vmatprep.subr.mxu0 0.0
  %3175 = vmatpush1.msra.mxu0 0.0
  %3176 = vmatprep.subr.mxu0 0.0
  %3177 = vmatpush1.msra.mxu0 0.0
  %3178 = vmatprep.subr.mxu0 0.0
  %3179 = vmatpush1.msra.mxu0 0.0
  %3180 = vmatprep.subr.mxu0 0.0
  %3181 = vmatpush1.msra.mxu0 0.0
  %3182 = vmatprep.subr.mxu0 0.0
  %3183 = vmatpush1.msra.mxu0 0.0
  %3184 = vmatprep.subr.mxu0 0.0
  %3185 = vmatpush1.msra.mxu0 0.0
  %3186 = vmatprep.subr.mxu0 0.0
  %3187 = vmatpush1.msra.mxu0 0.0
  %3188 = vmatprep.subr.mxu0 0.0
  %3189 = vmatpush1.msra.mxu0 0.0
  %3190 = vmatprep.subr.mxu0 0.0
  %3191 = vmatpush1.msra.mxu0 0.0
  %3192 = vmatprep.mubr.f32.mxu0 0.0
  %3193 = vmatmul.mubr.f32.gmra.mrb[0].mxu0 %v3126
  %v3194 = vpop.f32.mrb[0].mxu0
  %v3195 = vadd.f32 0.0, %v3194
  %v3196 = vpop.f32.mrb[0].mxu0
  %3197 = vdwg.mxu0
  %3198 = vrot.lane.b32.xlu0 %v2109, 64
  %v3199 = vpop.permute.xlu0 %3198
  %v3202 = vsel %vm305, %v2815, 0
  %3204 = vmatprep.subr.mxu0 0.0
  %3205 = vmatpush1.msra.mxu0 %v3199
  %3206 = vmatprep.subr.mxu0 0.0
  %3207 = vmatpush1.msra.mxu0 0.0
  %3208 = vmatprep.subr.mxu0 0.0
  %3209 = vmatpush1.msra.mxu0 0.0
  %3210 = vmatprep.subr.mxu0 0.0
  %3211 = vmatpush1.msra.mxu0 0.0
  %3212 = vmatprep.subr.mxu0 0.0
  %3213 = vmatpush1.msra.mxu0 0.0
  %3214 = vmatprep.subr.mxu0 0.0
  %3215 = vmatpush1.msra.mxu0 0.0
  %3216 = vmatprep.subr.mxu0 0.0
  %3217 = vmatpush1.msra.mxu0 0.0
  %3218 = vmatprep.subr.mxu0 0.0
  %3219 = vmatpush1.msra.mxu0 0.0
  %3220 = vmatprep.subr.mxu0 0.0
  %3221 = vmatpush1.msra.mxu0 0.0
  %3222 = vmatprep.subr.mxu0 0.0
  %3223 = vmatpush1.msra.mxu0 0.0
  %3224 = vmatprep.subr.mxu0 0.0
  %3225 = vmatpush1.msra.mxu0 0.0
  %3226 = vmatprep.subr.mxu0 0.0
  %3227 = vmatpush1.msra.mxu0 0.0
  %3228 = vmatprep.subr.mxu0 0.0
  %3229 = vmatpush1.msra.mxu0 0.0
  %3230 = vmatprep.subr.mxu0 0.0
  %3231 = vmatpush1.msra.mxu0 0.0
  %3232 = vmatprep.subr.mxu0 0.0
  %3233 = vmatpush1.msra.mxu0 0.0
  %3234 = vmatprep.subr.mxu0 0.0
  %3235 = vmatpush1.msra.mxu0 0.0
  %3236 = vmatprep.subr.mxu0 0.0
  %3237 = vmatpush1.msra.mxu0 0.0
  %3238 = vmatprep.subr.mxu0 0.0
  %3239 = vmatpush1.msra.mxu0 0.0
  %3240 = vmatprep.subr.mxu0 0.0
  %3241 = vmatpush1.msra.mxu0 0.0
  %3242 = vmatprep.subr.mxu0 0.0
  %3243 = vmatpush1.msra.mxu0 0.0
  %3244 = vmatprep.subr.mxu0 0.0
  %3245 = vmatpush1.msra.mxu0 0.0
  %3246 = vmatprep.subr.mxu0 0.0
  %3247 = vmatpush1.msra.mxu0 0.0
  %3248 = vmatprep.subr.mxu0 0.0
  %3249 = vmatpush1.msra.mxu0 0.0
  %3250 = vmatprep.subr.mxu0 0.0
  %3251 = vmatpush1.msra.mxu0 0.0
  %3252 = vmatprep.subr.mxu0 0.0
  %3253 = vmatpush1.msra.mxu0 0.0
  %3254 = vmatprep.subr.mxu0 0.0
  %3255 = vmatpush1.msra.mxu0 0.0
  %3256 = vmatprep.subr.mxu0 0.0
  %3257 = vmatpush1.msra.mxu0 0.0
  %3258 = vmatprep.subr.mxu0 0.0
  %3259 = vmatpush1.msra.mxu0 0.0
  %3260 = vmatprep.subr.mxu0 0.0
  %3261 = vmatpush1.msra.mxu0 0.0
  %3262 = vmatprep.subr.mxu0 0.0
  %3263 = vmatpush1.msra.mxu0 0.0
  %3264 = vmatprep.subr.mxu0 0.0
  %3265 = vmatpush1.msra.mxu0 0.0
  %3266 = vmatprep.subr.mxu0 0.0
  %3267 = vmatpush1.msra.mxu0 0.0
  %3268 = vmatprep.mubr.f32.mxu0 0.0
  %3269 = vmatmul.mubr.f32.gmra.mrb[0].mxu0 %v3202
  %v3270 = vpop.f32.mrb[0].mxu0
  %v3271 = vadd.f32 0.0, %v3270
  %v3272 = vpop.f32.mrb[0].mxu0
  %3273 = vdwg.mxu0
  %3274 = vrot.lane.b32.xlu0 %v2111, 64
  %v3275 = vpop.permute.xlu0 %3274
  %v3278 = vsel %vm305, %v2816, 0
  %3280 = vmatprep.subr.mxu0 0.0
  %3281 = vmatpush1.msra.mxu0 %v3275
  %3282 = vmatprep.subr.mxu0 0.0
  %3283 = vmatpush1.msra.mxu0 0.0
  %3284 = vmatprep.subr.mxu0 0.0
  %3285 = vmatpush1.msra.mxu0 0.0
  %3286 = vmatprep.subr.mxu0 0.0
  %3287 = vmatpush1.msra.mxu0 0.0
  %3288 = vmatprep.subr.mxu0 0.0
  %3289 = vmatpush1.msra.mxu0 0.0
  %3290 = vmatprep.subr.mxu0 0.0
  %3291 = vmatpush1.msra.mxu0 0.0
  %3292 = vmatprep.subr.mxu0 0.0
  %3293 = vmatpush1.msra.mxu0 0.0
  %3294 = vmatprep.subr.mxu0 0.0
  %3295 = vmatpush1.msra.mxu0 0.0
  %3296 = vmatprep.subr.mxu0 0.0
  %3297 = vmatpush1.msra.mxu0 0.0
  %3298 = vmatprep.subr.mxu0 0.0
  %3299 = vmatpush1.msra.mxu0 0.0
  %3300 = vmatprep.subr.mxu0 0.0
  %3301 = vmatpush1.msra.mxu0 0.0
  %3302 = vmatprep.subr.mxu0 0.0
  %3303 = vmatpush1.msra.mxu0 0.0
  %3304 = vmatprep.subr.mxu0 0.0
  %3305 = vmatpush1.msra.mxu0 0.0
  %3306 = vmatprep.subr.mxu0 0.0
  %3307 = vmatpush1.msra.mxu0 0.0
  %3308 = vmatprep.subr.mxu0 0.0
  %3309 = vmatpush1.msra.mxu0 0.0
  %3310 = vmatprep.subr.mxu0 0.0
  %3311 = vmatpush1.msra.mxu0 0.0
  %3312 = vmatprep.subr.mxu0 0.0
  %3313 = vmatpush1.msra.mxu0 0.0
  %3314 = vmatprep.subr.mxu0 0.0
  %3315 = vmatpush1.msra.mxu0 0.0
  %3316 = vmatprep.subr.mxu0 0.0
  %3317 = vmatpush1.msra.mxu0 0.0
  %3318 = vmatprep.subr.mxu0 0.0
  %3319 = vmatpush1.msra.mxu0 0.0
  %3320 = vmatprep.subr.mxu0 0.0
  %3321 = vmatpush1.msra.mxu0 0.0
  %3322 = vmatprep.subr.mxu0 0.0
  %3323 = vmatpush1.msra.mxu0 0.0
  %3324 = vmatprep.subr.mxu0 0.0
  %3325 = vmatpush1.msra.mxu0 0.0
  %3326 = vmatprep.subr.mxu0 0.0
  %3327 = vmatpush1.msra.mxu0 0.0
  %3328 = vmatprep.subr.mxu0 0.0
  %3329 = vmatpush1.msra.mxu0 0.0
  %3330 = vmatprep.subr.mxu0 0.0
  %3331 = vmatpush1.msra.mxu0 0.0
  %3332 = vmatprep.subr.mxu0 0.0
  %3333 = vmatpush1.msra.mxu0 0.0
  %3334 = vmatprep.subr.mxu0 0.0
  %3335 = vmatpush1.msra.mxu0 0.0
  %3336 = vmatprep.subr.mxu0 0.0
  %3337 = vmatpush1.msra.mxu0 0.0
  %3338 = vmatprep.subr.mxu0 0.0
  %3339 = vmatpush1.msra.mxu0 0.0
  %3340 = vmatprep.subr.mxu0 0.0
  %3341 = vmatpush1.msra.mxu0 0.0
  %3342 = vmatprep.subr.mxu0 0.0
  %3343 = vmatpush1.msra.mxu0 0.0
  %3344 = vmatprep.mubr.f32.mxu0 0.0
  %3345 = vmatmul.mubr.f32.gmra.mrb[0].mxu0 %v3278
  %v3346 = vpop.f32.mrb[0].mxu0
  %v3347 = vadd.f32 0.0, %v3346
  %v3348 = vpop.f32.mrb[0].mxu0
  %3349 = vdwg.mxu0
  %3350 = vrot.lane.b32.xlu0 %v2113, 64
  %v3351 = vpop.permute.xlu0 %3350
  %v3354 = vsel %vm305, %v2817, 0
  %3356 = vmatprep.subr.mxu0 0.0
  %3357 = vmatpush1.msra.mxu0 %v3351
  %3358 = vmatprep.subr.mxu0 0.0
  %3359 = vmatpush1.msra.mxu0 0.0
  %3360 = vmatprep.subr.mxu0 0.0
  %3361 = vmatpush1.msra.mxu0 0.0
  %3362 = vmatprep.subr.mxu0 0.0
  %3363 = vmatpush1.msra.mxu0 0.0
  %3364 = vmatprep.subr.mxu0 0.0
  %3365 = vmatpush1.msra.mxu0 0.0
  %3366 = vmatprep.subr.mxu0 0.0
  %3367 = vmatpush1.msra.mxu0 0.0
  %3368 = vmatprep.subr.mxu0 0.0
  %3369 = vmatpush1.msra.mxu0 0.0
  %3370 = vmatprep.subr.mxu0 0.0
  %3371 = vmatpush1.msra.mxu0 0.0
  %3372 = vmatprep.subr.mxu0 0.0
  %3373 = vmatpush1.msra.mxu0 0.0
  %3374 = vmatprep.subr.mxu0 0.0
  %3375 = vmatpush1.msra.mxu0 0.0
  %3376 = vmatprep.subr.mxu0 0.0
  %3377 = vmatpush1.msra.mxu0 0.0
  %3378 = vmatprep.subr.mxu0 0.0
  %3379 = vmatpush1.msra.mxu0 0.0
  %3380 = vmatprep.subr.mxu0 0.0
  %3381 = vmatpush1.msra.mxu0 0.0
  %3382 = vmatprep.subr.mxu0 0.0
  %3383 = vmatpush1.msra.mxu0 0.0
  %3384 = vmatprep.subr.mxu0 0.0
  %3385 = vmatpush1.msra.mxu0 0.0
  %3386 = vmatprep.subr.mxu0 0.0
  %3387 = vmatpush1.msra.mxu0 0.0
  %3388 = vmatprep.subr.mxu0 0.0
  %3389 = vmatpush1.msra.mxu0 0.0
  %3390 = vmatprep.subr.mxu0 0.0
  %3391 = vmatpush1.msra.mxu0 0.0
  %3392 = vmatprep.subr.mxu0 0.0
  %3393 = vmatpush1.msra.mxu0 0.0
  %3394 = vmatprep.subr.mxu0 0.0
  %3395 = vmatpush1.msra.mxu0 0.0
  %3396 = vmatprep.subr.mxu0 0.0
  %3397 = vmatpush1.msra.mxu0 0.0
  %3398 = vmatprep.subr.mxu0 0.0
  %3399 = vmatpush1.msra.mxu0 0.0
  %3400 = vmatprep.subr.mxu0 0.0
  %3401 = vmatpush1.msra.mxu0 0.0
  %3402 = vmatprep.subr.mxu0 0.0
  %3403 = vmatpush1.msra.mxu0 0.0
  %3404 = vmatprep.subr.mxu0 0.0
  %3405 = vmatpush1.msra.mxu0 0.0
  %3406 = vmatprep.subr.mxu0 0.0
  %3407 = vmatpush1.msra.mxu0 0.0
  %3408 = vmatprep.subr.mxu0 0.0
  %3409 = vmatpush1.msra.mxu0 0.0
  %3410 = vmatprep.subr.mxu0 0.0
  %3411 = vmatpush1.msra.mxu0 0.0
  %3412 = vmatprep.subr.mxu0 0.0
  %3413 = vmatpush1.msra.mxu0 0.0
  %3414 = vmatprep.subr.mxu0 0.0
  %3415 = vmatpush1.msra.mxu0 0.0
  %3416 = vmatprep.subr.mxu0 0.0
  %3417 = vmatpush1.msra.mxu0 0.0
  %3418 = vmatprep.subr.mxu0 0.0
  %3419 = vmatpush1.msra.mxu0 0.0
  %3420 = vmatprep.mubr.f32.mxu0 0.0
  %3421 = vmatmul.mubr.f32.gmra.mrb[0].mxu0 %v3354
  %v3422 = vpop.f32.mrb[0].mxu0
  %v3423 = vadd.f32 0.0, %v3422
  %v3424 = vpop.f32.mrb[0].mxu0
  %3425 = vdwg.mxu0
  %3428 = vrot.lane.b32.xlu0 %v3043, 8
  %v3429 = vpop.permute.xlu0 %3428
  %3430 = vrot.lane.b32.xlu0 %v3119, 8
  %v3431 = vpop.permute.xlu0 %3430
  %3436 = vrot.lane.b32.xlu0 %v3195, 16
  %v3437 = vpop.permute.xlu0 %3436
  %3438 = vrot.lane.b32.xlu0 %v3271, 16
  %v3439 = vpop.permute.xlu0 %3438
  %3444 = vrot.lane.b32.xlu0 %v3347, 24
  %v3445 = vpop.permute.xlu0 %3444
  %3446 = vrot.lane.b32.xlu0 %v3423, 24
  %v3447 = vpop.permute.xlu0 %3446
  %v3450 = vsel %vm305, %v2891, %v3429
  %v3451 = vsel %vm305, %v2967, %v3431
  %v3452 = vsel %vm31, %v3450, %v3437
  %v3453 = vsel %vm31, %v3451, %v3439
  %v3454 = vsel %vm1644, %v3452, %v3445
  %v3455 = vsel %vm1644, %v3453, %v3447
  %s3456 = scalar_lea.vmem %s4, 32
  %v3457 = vld [vmem:[%s3456] sm:$0xff]
  %v3458 = vld [vmem:[%s3456 + $0x8] sm:$0xff]
  %v3459 = vld [vmem:[%s3456 + $0x10] sm:$0xff]
  %v3460 = vld [vmem:[%s3456 + $0x18] sm:$0xff]
  %v3461 = vld [vmem:[%s1 + $0xd] sm:$0x1]
  %v3462 = vlaneseq
  %v3463 = vshrl.u32 %v3462, 7
  %v3464 = vsub.s32 0, %v3463
  %v3465 = vrot.slane %v3461, %v3464
  %v3467 = vsel %vm207, %v3454, 0
  %v3470 = vsel %vm207, %v3455, 0
  %3472 = vmatprep.subr.mxu0 0.0
  %3473 = vmatpush1.msra.mxu0 %v3457
  %3474 = vmatprep.subr.mxu0 0.0
  %3475 = vmatpush1.msra.mxu0 %v3458
  %3476 = vmatprep.subr.mxu0 0.0
  %3477 = vmatpush1.msra.mxu0 %v3459
  %3478 = vmatprep.subr.mxu0 0.0
  %3479 = vmatpush1.msra.mxu0 %v3460
  %3480 = vmatprep.subr.mxu0 0.0
  %3481 = vmatpush1.msra.mxu0 0.0
  %3482 = vmatprep.subr.mxu0 0.0
  %3483 = vmatpush1.msra.mxu0 0.0
  %3484 = vmatprep.subr.mxu0 0.0
  %3485 = vmatpush1.msra.mxu0 0.0
  %3486 = vmatprep.subr.mxu0 0.0
  %3487 = vmatpush1.msra.mxu0 0.0
  %3488 = vmatprep.subr.mxu0 0.0
  %3489 = vmatpush1.msra.mxu0 0.0
  %3490 = vmatprep.subr.mxu0 0.0
  %3491 = vmatpush1.msra.mxu0 0.0
  %3492 = vmatprep.subr.mxu0 0.0
  %3493 = vmatpush1.msra.mxu0 0.0
  %3494 = vmatprep.subr.mxu0 0.0
  %3495 = vmatpush1.msra.mxu0 0.0
  %3496 = vmatprep.subr.mxu0 0.0
  %3497 = vmatpush1.msra.mxu0 0.0
  %3498 = vmatprep.subr.mxu0 0.0
  %3499 = vmatpush1.msra.mxu0 0.0
  %3500 = vmatprep.subr.mxu0 0.0
  %3501 = vmatpush1.msra.mxu0 0.0
  %3502 = vmatprep.subr.mxu0 0.0
  %3503 = vmatpush1.msra.mxu0 0.0
  %3504 = vmatprep.subr.mxu0 0.0
  %3505 = vmatpush1.msra.mxu0 0.0
  %3506 = vmatprep.subr.mxu0 0.0
  %3507 = vmatpush1.msra.mxu0 0.0
  %3508 = vmatprep.subr.mxu0 0.0
  %3509 = vmatpush1.msra.mxu0 0.0
  %3510 = vmatprep.subr.mxu0 0.0
  %3511 = vmatpush1.msra.mxu0 0.0
  %3512 = vmatprep.subr.mxu0 0.0
  %3513 = vmatpush1.msra.mxu0 0.0
  %3514 = vmatprep.subr.mxu0 0.0
  %3515 = vmatpush1.msra.mxu0 0.0
  %3516 = vmatprep.subr.mxu0 0.0
  %3517 = vmatpush1.msra.mxu0 0.0
  %3518 = vmatprep.subr.mxu0 0.0
  %3519 = vmatpush1.msra.mxu0 0.0
  %3520 = vmatprep.subr.mxu0 0.0
  %3521 = vmatpush1.msra.mxu0 0.0
  %3522 = vmatprep.subr.mxu0 0.0
  %3523 = vmatpush1.msra.mxu0 0.0
  %3524 = vmatprep.subr.mxu0 0.0
  %3525 = vmatpush1.msra.mxu0 0.0
  %3526 = vmatprep.subr.mxu0 0.0
  %3527 = vmatpush1.msra.mxu0 0.0
  %3528 = vmatprep.subr.mxu0 0.0
  %3529 = vmatpush1.msra.mxu0 0.0
  %3530 = vmatprep.subr.mxu0 0.0
  %3531 = vmatpush1.msra.mxu0 0.0
  %3532 = vmatprep.subr.mxu0 0.0
  %3533 = vmatpush1.msra.mxu0 0.0
  %3534 = vmatprep.subr.mxu0 0.0
  %3535 = vmatpush1.msra.mxu0 0.0
  %3536 = vmatprep.mubr.f32.mxu0 0.0
  %3537 = vmatmul.mubr.f32.gmra.mrb[0].mxu0 %v3467
  %v3538 = vpop.f32.mrb[0].mxu0
  %v3539 = vadd.f32 %v3465, %v3538
  %v3540 = vpop.f32.mrb[0].mxu0
  %3541 = vmatprep.mubr.f32.mxu0 0.0
  %3542 = vmatmul.mubr.f32.gmra.mrb[0].mxu0 %v3470
  %v3543 = vpop.f32.mrb[0].mxu0
  %v3544 = vadd.f32 %v3465, %v3543
  %v3545 = vpop.f32.mrb[0].mxu0
  %3546 = vdwg.mxu0
  %v3547 = vadd.f32 %v2007, %v3539
  %v3548 = vadd.f32 %v2008, %v3544
  %v3549 = vld [vmem:[%s1 + $0x10] sm:$0x1]
  %v3550 = vld [vmem:[%s1 + $0x11] sm:$0x1]
  %v3551 = vsel %vm207, %v3547, 0.0
  %3552 = vadd.xlane.f32.xlu0 %v3551
  %v3553 = vpop.xlane.xlu0 %3552
  %v3554 = vsel %vm207, %v3548, 0.0
  %3555 = vadd.xlane.f32.xlu0 %v3554
  %v3556 = vpop.xlane.xlu0 %3555
  %v3557 = vmul.f32 %v3553, %v1747
  %v3558 = vmul.f32 %v3556, %v1747
  %v3559 = vsub.f32 %v3547, %v3557
  %v3560 = vsub.f32 %v3548, %v3558
  %v3561 = vmul.f32 %v3559, %v3559
  %v3562 = vmul.f32 %v3560, %v3560
  %v3563 = vsel %vm207, %v3561, 0.0
  %3564 = vadd.xlane.f32.xlu0 %v3563
  %v3565 = vpop.xlane.xlu0 %3564
  %v3566 = vsel %vm207, %v3562, 0.0
  %3567 = vadd.xlane.f32.xlu0 %v3566
  %v3568 = vpop.xlane.xlu0 %3567
  %v3569 = vmul.f32 %v3565, %v1747
  %v3570 = vmul.f32 %v3568, %v1747
  %v3571 = vadd.f32 %v3569, 1e-05
  %v3572 = vadd.f32 %v3570, 1e-05
  %v3573 = vrsqrt.pop %v3571
  %v3574 = vrsqrt.pop %v3572
  %v3575 = vmul.f32 %v3559, %v3573
  %v3576 = vmul.f32 %v3560, %v3574
  %v3577 = vlaneseq
  %v3578 = vshrl.u32 %v3577, 7
  %v3579 = vsub.s32 0, %v3578
  %v3580 = vrot.slane %v3549, %v3579
  %v3581 = vmul.f32 %v3575, %v3580
  %v3582 = vmul.f32 %v3576, %v3580
  %v3583 = vlaneseq
  %v3584 = vshrl.u32 %v3583, 7
  %v3585 = vsub.s32 0, %v3584
  %v3586 = vrot.slane %v3550, %v3585
  %v3587 = vadd.f32 %v3581, %v3586
  %v3588 = vadd.f32 %v3582, %v3586
  %s3589 = scalar_lea.vmem %s5, 32
  %v3590 = vld [vmem:[%s3589] sm:$0xff]
  %v3591 = vld [vmem:[%s3589 + $0x8] sm:$0xff]
  %v3592 = vld [vmem:[%s3589 + $0x10] sm:$0xff]
  %v3593 = vld [vmem:[%s3589 + $0x18] sm:$0xff]
  %v3594 = vld [vmem:[%s1 + $0xe] sm:$0x1]
  %v3595 = vlaneseq
  %v3596 = vshrl.u32 %v3595, 7
  %v3597 = vsub.s32 0, %v3596
  %v3598 = vrot.slane %v3594, %v3597
  %v3600 = vsel %vm207, %v3587, 0
  %v3603 = vsel %vm207, %v3588, 0
  %3605 = vmatprep.subr.mxu0 0.0
  %3606 = vmatpush1.msra.mxu0 %v3590
  %3607 = vmatprep.subr.mxu0 0.0
  %3608 = vmatpush1.msra.mxu0 %v3591
  %3609 = vmatprep.subr.mxu0 0.0
  %3610 = vmatpush1.msra.mxu0 %v3592
  %3611 = vmatprep.subr.mxu0 0.0
  %3612 = vmatpush1.msra.mxu0 %v3593
  %3613 = vmatprep.subr.mxu0 0.0
  %3614 = vmatpush1.msra.mxu0 0.0
  %3615 = vmatprep.subr.mxu0 0.0
  %3616 = vmatpush1.msra.mxu0 0.0
  %3617 = vmatprep.subr.mxu0 0.0
  %3618 = vmatpush1.msra.mxu0 0.0
  %3619 = vmatprep.subr.mxu0 0.0
  %3620 = vmatpush1.msra.mxu0 0.0
  %3621 = vmatprep.subr.mxu0 0.0
  %3622 = vmatpush1.msra.mxu0 0.0
  %3623 = vmatprep.subr.mxu0 0.0
  %3624 = vmatpush1.msra.mxu0 0.0
  %3625 = vmatprep.subr.mxu0 0.0
  %3626 = vmatpush1.msra.mxu0 0.0
  %3627 = vmatprep.subr.mxu0 0.0
  %3628 = vmatpush1.msra.mxu0 0.0
  %3629 = vmatprep.subr.mxu0 0.0
  %3630 = vmatpush1.msra.mxu0 0.0
  %3631 = vmatprep.subr.mxu0 0.0
  %3632 = vmatpush1.msra.mxu0 0.0
  %3633 = vmatprep.subr.mxu0 0.0
  %3634 = vmatpush1.msra.mxu0 0.0
  %3635 = vmatprep.subr.mxu0 0.0
  %3636 = vmatpush1.msra.mxu0 0.0
  %3637 = vmatprep.subr.mxu0 0.0
  %3638 = vmatpush1.msra.mxu0 0.0
  %3639 = vmatprep.subr.mxu0 0.0
  %3640 = vmatpush1.msra.mxu0 0.0
  %3641 = vmatprep.subr.mxu0 0.0
  %3642 = vmatpush1.msra.mxu0 0.0
  %3643 = vmatprep.subr.mxu0 0.0
  %3644 = vmatpush1.msra.mxu0 0.0
  %3645 = vmatprep.subr.mxu0 0.0
  %3646 = vmatpush1.msra.mxu0 0.0
  %3647 = vmatprep.subr.mxu0 0.0
  %3648 = vmatpush1.msra.mxu0 0.0
  %3649 = vmatprep.subr.mxu0 0.0
  %3650 = vmatpush1.msra.mxu0 0.0
  %3651 = vmatprep.subr.mxu0 0.0
  %3652 = vmatpush1.msra.mxu0 0.0
  %3653 = vmatprep.subr.mxu0 0.0
  %3654 = vmatpush1.msra.mxu0 0.0
  %3655 = vmatprep.subr.mxu0 0.0
  %3656 = vmatpush1.msra.mxu0 0.0
  %3657 = vmatprep.subr.mxu0 0.0
  %3658 = vmatpush1.msra.mxu0 0.0
  %3659 = vmatprep.subr.mxu0 0.0
  %3660 = vmatpush1.msra.mxu0 0.0
  %3661 = vmatprep.subr.mxu0 0.0
  %3662 = vmatpush1.msra.mxu0 0.0
  %3663 = vmatprep.subr.mxu0 0.0
  %3664 = vmatpush1.msra.mxu0 0.0
  %3665 = vmatprep.subr.mxu0 0.0
  %3666 = vmatpush1.msra.mxu0 0.0
  %3667 = vmatprep.subr.mxu0 0.0
  %3668 = vmatpush1.msra.mxu0 0.0
  %3669 = vmatprep.mubr.f32.mxu0 0.0
  %3670 = vmatmul.mubr.f32.gmra.mrb[0].mxu0 %v3600
  %v3671 = vpop.f32.mrb[0].mxu0
  %v3672 = vadd.f32 %v3598, %v3671
  %v3673 = vpop.f32.mrb[0].mxu0
  %3674 = vmatprep.mubr.f32.mxu0 0.0
  %3675 = vmatmul.mubr.f32.gmra.mrb[0].mxu0 %v3603
  %v3676 = vpop.f32.mrb[0].mxu0
  %v3677 = vadd.f32 %v3598, %v3676
  %v3678 = vpop.f32.mrb[0].mxu0
  %3679 = vdwg.mxu0
  %v3680 = vmax.f32 %v3672, 0.0
  %v3681 = vmax.f32 %v3677, 0.0
  %s3682 = scalar_lea.vmem %s6, 64
  %v3683 = vld [vmem:[%s3682] sm:$0xff]
  %v3684 = vld [vmem:[%s3682 + $0x8] sm:$0xff]
  %v3685 = vld [vmem:[%s3682 + $0x10] sm:$0xff]
  %v3686 = vld [vmem:[%s3682 + $0x18] sm:$0xff]
  %v3687 = vld [vmem:[%s3682 + $0x20] sm:$0xff]
  %v3688 = vld [vmem:[%s3682 + $0x28] sm:$0xff]
  %v3689 = vld [vmem:[%s3682 + $0x30] sm:$0xff]
  %v3690 = vld [vmem:[%s3682 + $0x38] sm:$0xff]
  %v3691 = vld [vmem:[%s1 + $0xf] sm:$0x1]
  %v3692 = vlaneseq
  %v3693 = vshrl.u32 %v3692, 7
  %v3694 = vsub.s32 0, %v3693
  %v3695 = vrot.slane %v3691, %v3694
  %v3697 = vsel %vm1885, %v3680, 0
  %v3700 = vsel %vm1885, %v3681, 0
  %3702 = vmatprep.subr.mxu0 0.0
  %3703 = vmatpush1.msra.mxu0 %v3683
  %3704 = vmatprep.subr.mxu0 0.0
  %3705 = vmatpush1.msra.mxu0 %v3684
  %3706 = vmatprep.subr.mxu0 0.0
  %3707 = vmatpush1.msra.mxu0 %v3685
  %3708 = vmatprep.subr.mxu0 0.0
  %3709 = vmatpush1.msra.mxu0 %v3686
  %3710 = vmatprep.subr.mxu0 0.0
  %3711 = vmatpush1.msra.mxu0 %v3687
  %3712 = vmatprep.subr.mxu0 0.0
  %3713 = vmatpush1.msra.mxu0 %v3688
  %3714 = vmatprep.subr.mxu0 0.0
  %3715 = vmatpush1.msra.mxu0 %v3689
  %3716 = vmatprep.subr.mxu0 0.0
  %3717 = vmatpush1.msra.mxu0 %v3690
  %3718 = vmatprep.subr.mxu0 0.0
  %3719 = vmatpush1.msra.mxu0 0.0
  %3720 = vmatprep.subr.mxu0 0.0
  %3721 = vmatpush1.msra.mxu0 0.0
  %3722 = vmatprep.subr.mxu0 0.0
  %3723 = vmatpush1.msra.mxu0 0.0
  %3724 = vmatprep.subr.mxu0 0.0
  %3725 = vmatpush1.msra.mxu0 0.0
  %3726 = vmatprep.subr.mxu0 0.0
  %3727 = vmatpush1.msra.mxu0 0.0
  %3728 = vmatprep.subr.mxu0 0.0
  %3729 = vmatpush1.msra.mxu0 0.0
  %3730 = vmatprep.subr.mxu0 0.0
  %3731 = vmatpush1.msra.mxu0 0.0
  %3732 = vmatprep.subr.mxu0 0.0
  %3733 = vmatpush1.msra.mxu0 0.0
  %3734 = vmatprep.subr.mxu0 0.0
  %3735 = vmatpush1.msra.mxu0 0.0
  %3736 = vmatprep.subr.mxu0 0.0
  %3737 = vmatpush1.msra.mxu0 0.0
  %3738 = vmatprep.subr.mxu0 0.0
  %3739 = vmatpush1.msra.mxu0 0.0
  %3740 = vmatprep.subr.mxu0 0.0
  %3741 = vmatpush1.msra.mxu0 0.0
  %3742 = vmatprep.subr.mxu0 0.0
  %3743 = vmatpush1.msra.mxu0 0.0
  %3744 = vmatprep.subr.mxu0 0.0
  %3745 = vmatpush1.msra.mxu0 0.0
  %3746 = vmatprep.subr.mxu0 0.0
  %3747 = vmatpush1.msra.mxu0 0.0
  %3748 = vmatprep.subr.mxu0 0.0
  %3749 = vmatpush1.msra.mxu0 0.0
  %3750 = vmatprep.subr.mxu0 0.0
  %3751 = vmatpush1.msra.mxu0 0.0
  %3752 = vmatprep.subr.mxu0 0.0
  %3753 = vmatpush1.msra.mxu0 0.0
  %3754 = vmatprep.subr.mxu0 0.0
  %3755 = vmatpush1.msra.mxu0 0.0
  %3756 = vmatprep.subr.mxu0 0.0
  %3757 = vmatpush1.msra.mxu0 0.0
  %3758 = vmatprep.subr.mxu0 0.0
  %3759 = vmatpush1.msra.mxu0 0.0
  %3760 = vmatprep.subr.mxu0 0.0
  %3761 = vmatpush1.msra.mxu0 0.0
  %3762 = vmatprep.subr.mxu0 0.0
  %3763 = vmatpush1.msra.mxu0 0.0
  %3764 = vmatprep.subr.mxu0 0.0
  %3765 = vmatpush1.msra.mxu0 0.0
  %3766 = vmatprep.mubr.f32.mxu0 0.0
  %3767 = vmatmul.mubr.f32.gmra.mrb[0].mxu0 %v3697
  %v3768 = vpop.f32.mrb[0].mxu0
  %v3769 = vadd.f32 %v3695, %v3768
  %v3770 = vpop.f32.mrb[0].mxu0
  %3771 = vmatprep.mubr.f32.mxu0 0.0
  %3772 = vmatmul.mubr.f32.gmra.mrb[0].mxu0 %v3700
  %v3773 = vpop.f32.mrb[0].mxu0
  %v3774 = vadd.f32 %v3695, %v3773
  %v3775 = vpop.f32.mrb[0].mxu0
  %3776 = vdwg.mxu0
  %v3777 = vadd.f32 %v3587, %v3769
  %v3778 = vadd.f32 %v3588, %v3774
  %v3779 = vld [vmem:[%s1 + $0x12] sm:$0x1]
  %v3780 = vld [vmem:[%s1 + $0x13] sm:$0x1]
  %v3781 = vsel %vm207, %v3777, 0.0
  %3782 = vadd.xlane.f32.xlu0 %v3781
  %v3783 = vpop.xlane.xlu0 %3782
  %v3784 = vsel %vm207, %v3778, 0.0
  %3785 = vadd.xlane.f32.xlu0 %v3784
  %v3786 = vpop.xlane.xlu0 %3785
  %v3787 = vmul.f32 %v3783, %v1747
  %v3788 = vmul.f32 %v3786, %v1747
  %v3789 = vsub.f32 %v3777, %v3787
  %v3790 = vsub.f32 %v3778, %v3788
  %v3791 = vmul.f32 %v3789, %v3789
  %v3792 = vmul.f32 %v3790, %v3790
  %v3793 = vsel %vm207, %v3791, 0.0
  %3794 = vadd.xlane.f32.xlu0 %v3793
  %v3795 = vpop.xlane.xlu0 %3794
  %v3796 = vsel %vm207, %v3792, 0.0
  %3797 = vadd.xlane.f32.xlu0 %v3796
  %v3798 = vpop.xlane.xlu0 %3797
  %v3799 = vmul.f32 %v3795, %v1747
  %v3800 = vmul.f32 %v3798, %v1747
  %v3801 = vadd.f32 %v3799, 1e-05
  %v3802 = vadd.f32 %v3800, 1e-05
  %v3803 = vrsqrt.pop %v3801
  %v3804 = vrsqrt.pop %v3802
  %v3805 = vmul.f32 %v3789, %v3803
  %v3806 = vmul.f32 %v3790, %v3804
  %v3807 = vlaneseq
  %v3808 = vshrl.u32 %v3807, 7
  %v3809 = vsub.s32 0, %v3808
  %v3810 = vrot.slane %v3779, %v3809
  %v3811 = vmul.f32 %v3805, %v3810
  %v3812 = vmul.f32 %v3806, %v3810
  %v3813 = vlaneseq
  %v3814 = vshrl.u32 %v3813, 7
  %v3815 = vsub.s32 0, %v3814
  %v3816 = vrot.slane %v3780, %v3815
  %v3817 = vadd.f32 %v3811, %v3816
  %v3818 = vadd.f32 %v3812, %v3816
  %v3819 = vld [vmem:[%s1 + $0x1] sm:$0x1]
  %v3820 = vld [vmem:[%s1 + $0x2] sm:$0x1]
  %v3821 = vsel %vm207, %v3817, 0.0
  %3822 = vadd.xlane.f32.xlu0 %v3821
  %v3823 = vpop.xlane.xlu0 %3822
  %v3824 = vsel %vm207, %v3818, 0.0
  %3825 = vadd.xlane.f32.xlu0 %v3824
  %v3826 = vpop.xlane.xlu0 %3825
  %v3827 = vmul.f32 %v3823, %v1747
  %v3828 = vmul.f32 %v3826, %v1747
  %v3829 = vsub.f32 %v3817, %v3827
  %v3830 = vsub.f32 %v3818, %v3828
  %v3831 = vmul.f32 %v3829, %v3829
  %v3832 = vmul.f32 %v3830, %v3830
  %v3833 = vsel %vm207, %v3831, 0.0
  %3834 = vadd.xlane.f32.xlu0 %v3833
  %v3835 = vpop.xlane.xlu0 %3834
  %v3836 = vsel %vm207, %v3832, 0.0
  %3837 = vadd.xlane.f32.xlu0 %v3836
  %v3838 = vpop.xlane.xlu0 %3837
  %v3839 = vmul.f32 %v3835, %v1747
  %v3840 = vmul.f32 %v3838, %v1747
  %v3841 = vadd.f32 %v3839, 1e-05
  %v3842 = vadd.f32 %v3840, 1e-05
  %v3843 = vrsqrt.pop %v3841
  %v3844 = vrsqrt.pop %v3842
  %v3845 = vmul.f32 %v3829, %v3843
  %v3846 = vmul.f32 %v3830, %v3844
  %v3847 = vlaneseq
  %v3848 = vshrl.u32 %v3847, 7
  %v3849 = vsub.s32 0, %v3848
  %v3850 = vrot.slane %v3819, %v3849
  %v3851 = vmul.f32 %v3845, %v3850
  %v3852 = vmul.f32 %v3846, %v3850
  %v3853 = vlaneseq
  %v3854 = vshrl.u32 %v3853, 7
  %v3855 = vsub.s32 0, %v3854
  %v3856 = vrot.slane %v3820, %v3855
  %v3857 = vadd.f32 %v3851, %v3856
  %v3858 = vadd.f32 %v3852, %v3856
  %v3859 = vld [vmem:[%s7] sm:$0xff]
  %v3860 = vld [vmem:[%s7 + $0x8] sm:$0xff]
  %v3861 = vld [vmem:[%s7 + $0x10] sm:$0xff]
  %v3862 = vld [vmem:[%s7 + $0x18] sm:$0xff]
  %v3863 = vld [vmem:[%s1 + $0x3] sm:$0x1]
  %v3864 = vlaneseq
  %v3865 = vshrl.u32 %v3864, 7
  %v3866 = vsub.s32 0, %v3865
  %v3867 = vrot.slane %v3863, %v3866
  %v3869 = vsel %vm207, %v3857, 0
  %v3872 = vsel %vm207, %v3858, 0
  %3874 = vmatprep.subr.mxu0 0.0
  %3875 = vmatpush1.msra.mxu0 %v3859
  %3876 = vmatprep.subr.mxu0 0.0
  %3877 = vmatpush1.msra.mxu0 %v3860
  %3878 = vmatprep.subr.mxu0 0.0
  %3879 = vmatpush1.msra.mxu0 %v3861
  %3880 = vmatprep.subr.mxu0 0.0
  %3881 = vmatpush1.msra.mxu0 %v3862
  %3882 = vmatprep.subr.mxu0 0.0
  %3883 = vmatpush1.msra.mxu0 0.0
  %3884 = vmatprep.subr.mxu0 0.0
  %3885 = vmatpush1.msra.mxu0 0.0
  %3886 = vmatprep.subr.mxu0 0.0
  %3887 = vmatpush1.msra.mxu0 0.0
  %3888 = vmatprep.subr.mxu0 0.0
  %3889 = vmatpush1.msra.mxu0 0.0
  %3890 = vmatprep.subr.mxu0 0.0
  %3891 = vmatpush1.msra.mxu0 0.0
  %3892 = vmatprep.subr.mxu0 0.0
  %3893 = vmatpush1.msra.mxu0 0.0
  %3894 = vmatprep.subr.mxu0 0.0
  %3895 = vmatpush1.msra.mxu0 0.0
  %3896 = vmatprep.subr.mxu0 0.0
  %3897 = vmatpush1.msra.mxu0 0.0
  %3898 = vmatprep.subr.mxu0 0.0
  %3899 = vmatpush1.msra.mxu0 0.0
  %3900 = vmatprep.subr.mxu0 0.0
  %3901 = vmatpush1.msra.mxu0 0.0
  %3902 = vmatprep.subr.mxu0 0.0
  %3903 = vmatpush1.msra.mxu0 0.0
  %3904 = vmatprep.subr.mxu0 0.0
  %3905 = vmatpush1.msra.mxu0 0.0
  %3906 = vmatprep.subr.mxu0 0.0
  %3907 = vmatpush1.msra.mxu0 0.0
  %3908 = vmatprep.subr.mxu0 0.0
  %3909 = vmatpush1.msra.mxu0 0.0
  %3910 = vmatprep.subr.mxu0 0.0
  %3911 = vmatpush1.msra.mxu0 0.0
  %3912 = vmatprep.subr.mxu0 0.0
  %3913 = vmatpush1.msra.mxu0 0.0
  %3914 = vmatprep.subr.mxu0 0.0
  %3915 = vmatpush1.msra.mxu0 0.0
  %3916 = vmatprep.subr.mxu0 0.0
  %3917 = vmatpush1.msra.mxu0 0.0
  %3918 = vmatprep.subr.mxu0 0.0
  %3919 = vmatpush1.msra.mxu0 0.0
  %3920 = vmatprep.subr.mxu0 0.0
  %3921 = vmatpush1.msra.mxu0 0.0
  %3922 = vmatprep.subr.mxu0 0.0
  %3923 = vmatpush1.msra.mxu0 0.0
  %3924 = vmatprep.subr.mxu0 0.0
  %3925 = vmatpush1.msra.mxu0 0.0
  %3926 = vmatprep.subr.mxu0 0.0
  %3927 = vmatpush1.msra.mxu0 0.0
  %3928 = vmatprep.subr.mxu0 0.0
  %3929 = vmatpush1.msra.mxu0 0.0
  %3930 = vmatprep.subr.mxu0 0.0
  %3931 = vmatpush1.msra.mxu0 0.0
  %3932 = vmatprep.subr.mxu0 0.0
  %3933 = vmatpush1.msra.mxu0 0.0
  %3934 = vmatprep.subr.mxu0 0.0
  %3935 = vmatpush1.msra.mxu0 0.0
  %3936 = vmatprep.subr.mxu0 0.0
  %3937 = vmatpush1.msra.mxu0 0.0
  %3938 = vmatprep.mubr.f32.mxu0 0.0
  %3939 = vmatmul.mubr.f32.gmra.mrb[0].mxu0 %v3869
  %v3940 = vpop.f32.mrb[0].mxu0
  %v3941 = vadd.f32 %v3867, %v3940
  %v3942 = vpop.f32.mrb[0].mxu0
  %3943 = vmatprep.mubr.f32.mxu0 0.0
  %3944 = vmatmul.mubr.f32.gmra.mrb[0].mxu0 %v3872
  %v3945 = vpop.f32.mrb[0].mxu0
  %v3946 = vadd.f32 %v3867, %v3945
  %v3947 = vpop.f32.mrb[0].mxu0
  %3948 = vdwg.mxu0
  %v3949 = vmul.f32 %v3941, %v104
  %v3950 = vmul.f32 %v3946, %v105
  %v3951 = vadd.f32 %v3949, %v82
  %v3952 = vadd.f32 %v3950, %v83
  %3953 = vst.msk [vmem:[%s8] sm:$0xff] %vm305, %v3951
  %3954 = vst.msk [vmem:[%s8 + $0x8] sm:$0xff] %vm305, %v3952
  // Predicated region
  $region34: #{itransformer_forward.1} parent=0 // pred_check
    _
  $region35: #{itransformer_forward.1} parent=0 // pred_check_branch
    %3956 = sbr.rel (0) target = $region37
  $region36: #{itransformer_forward.1} parent=0 // pred_region
    _
  $region37: #{itransformer_forward.1} parent=0 // pred_fallthru
    _
  // Predicated region
  $region38: #{itransformer_forward.1} parent=0 // pred_check
    _
  $region39: #{itransformer_forward.1} parent=0 // pred_check_branch
    %3958 = sbr.rel (0) target = $region41
  $region40: #{itransformer_forward.1} parent=0 // pred_region
    _
  $region41: #{itransformer_forward.1} parent=0 // pred_fallthru
    _

</llo_original>
